<compile_context>
chip_gen: v7x
topology: tpu7x:2x2x1
jax: 0.10.0
libtpu: 0.0.40
codegen_flags: <defaults>
</compile_context>

<pallas_src>
import functools

import jax
import jax.numpy as jnp
from jax.experimental import pallas as pl
from jax.experimental.pallas import tpu as pltpu


# ---------------------------------------------------------------------------
# In-kernel helpers
# ---------------------------------------------------------------------------
def _conv_layer(act, w_ref, b_ref, mask_ref, *, K, W, HW, ips, relu):
    """'same' conv + bias (+ReLU) on a flat (Cin, ips*HW) activation.

    act      : (Cin, ips*HW) f32, images concatenated along the lane axis
    w_ref    : (Cout, K*K*Cin_pad) bf16, columns ordered (kh, kw, cin)
    b_ref    : (Cout, 1) f32
    mask_ref : (K, HW + 2*OFF) f32 extended column-boundary masks (one per dx)
    """
    P = K // 2
    OFF = P * W + P                       # max |flat shift| of a tap
    cin_pad = w_ref.shape[1] // (K * K)

    # Zero-pad channel rows up to the sublane tile expected by w_mat.
    if act.shape[0] < cin_pad:
        act = jnp.concatenate(
            [act, jnp.zeros((cin_pad - act.shape[0], act.shape[1]), jnp.float32)],
            axis=0)

    # Hoisted, kh-invariant column masks: one (1, L) row per horizontal offset.
    mrows = [mask_ref[kw:kw + 1, :] for kw in range(K)]
    zpad = jnp.zeros((cin_pad, OFF), jnp.float32)

    patches = []
    for n in range(ips):                                       # static, ips in {1,2}
        act_n = act[:, n * HW:(n + 1) * HW]                    # (Cin, HW) lane-aligned
        actp = jnp.concatenate([zpad, act_n, zpad], axis=1)    # (Cin, HW+2*OFF) f32
        # K masked copies: mask multiply in f32, single bf16 cast per dx.
        masked = [(actp * mrows[kw]).astype(jnp.bfloat16) for kw in range(K)]
        taps = []
        for kh in range(K):                                    # static unroll, K in {3,5}
            for kw in range(K):
                s = (kh - P) * W + (kw - P)                    # flat shift of this tap
                taps.append(masked[kw][:, OFF + s: OFF + s + HW])  # pure bf16 slice
        patches.append(jnp.concatenate(taps, axis=0))          # (K*K*Cin, HW) bf16
    patch = patches[0] if ips == 1 else jnp.concatenate(patches, axis=1)

    acc = jnp.dot(w_ref[...], patch,
                  preferred_element_type=jnp.float32)          # (Cout, ips*HW) f32
    acc = acc + b_ref[...]                                     # f32 bias (kept exact)
    if relu:
        acc = jnp.maximum(acc, 0.0)
    return acc


def _raki_kernel(x_ref, *refs, W, HW, ips, n_masks, layer_cfg):
    # x_ref     : (ips, C, HW) f32
    # refs      : (mask_0 .. mask_{n_masks-1}, w1, b1, ..., w4, b4, o_ref)
    # layer_cfg : ((K, relu, mask_idx), ...) static
    o_ref = refs[-1]
    mask_refs = refs[:n_masks]
    wb = refs[n_masks:-1]

    if ips == 1:
        act = x_ref[0]                                         # (C, HW) f32
    else:
        act = jnp.concatenate([x_ref[n] for n in range(ips)], axis=1)  # (C, ips*HW)

    for i, (K, relu, mi) in enumerate(layer_cfg):
        act = _conv_layer(act, wb[2 * i], wb[2 * i + 1], mask_refs[mi],
                          K=K, W=W, HW=HW, ips=ips, relu=relu)

    for n in range(ips):
        o_ref[n] = act[:, n * HW:(n + 1) * HW].astype(o_ref.dtype)


# ---------------------------------------------------------------------------
# Parameters (synthetic, PyTorch-style init) and forward wrapper
# ---------------------------------------------------------------------------
def init_raki_spirit_params(key, in_chans):
    """Per-layer params: torch-layout weight (f32) + MXU-ready im2col matrix (bf16)."""
    cfg = [
        (in_chans * 2, 5, True),
        (in_chans * 4, 3, True),
        (in_chans * 2, 3, True),
        (in_chans, 5, False),
    ]
    params = []
    cin = in_chans
    for i, (cout, k, relu) in enumerate(cfg):
        assert k % 2 == 1, "only odd kernel sizes ('same' conv) supported"
        wk, bk = jax.random.split(jax.random.fold_in(key, i))
        bound = 1.0 / float((cin * k * k) ** 0.5)
        w_torch = jax.random.uniform(wk, (cout, cin, k, k),
                                     jnp.float32, -bound, bound)
        b = jax.random.uniform(bk, (cout,), jnp.float32, -bound, bound)
        # Pad Cin to the f32 sublane tile so every tap chunk is 8-row aligned;
        # the padded weight columns are zero so results are unchanged.
        cin_pad = -(-cin // 8) * 8
        w_pad = jnp.pad(w_torch, ((0, 0), (0, cin_pad - cin), (0, 0), (0, 0)))
        # im2col weight matrix, columns ordered (kh, kw, cin); bf16 for the MXU.
        w_mat = jnp.transpose(w_pad, (0, 2, 3, 1)).reshape(
            cout, k * k * cin_pad).astype(jnp.bfloat16)
        params.append({
            "w_torch": w_torch, "b": b, "k": k, "relu": relu,
            "cin": cin, "cin_pad": cin_pad, "cout": cout,
            "w_mat": w_mat, "b2": b.reshape(cout, 1),
        })
        cin = cout
    return params


def _colmask_ext(K, W, HW):
    """(K, HW + 2*OFF) f32 extended column-boundary masks, one row per dx.

    Row kw (dx = kw - K//2) evaluated at padded index j equals
    [0 <= col(i) + dx < W] for the output position i that any tap with that dx
    reads at j — kh-invariant, so one masked copy per dx serves all K rows.
    """
    P = K // 2
    OFF = P * W + P
    L = HW + 2 * OFF
    j = jnp.arange(L, dtype=jnp.int32)
    rows = []
    for kw in range(K):
        dx = kw - P
        col = (j - OFF - dx) % W
        rows.append(((col + dx >= 0) & (col + dx < W)).astype(jnp.float32))
    return jnp.stack(rows, axis=0)


def _default_images_per_step(n):
    """Whole batch per grid step on 1-TC chips; keep 2 parallel steps on v7x."""
    try:
        kind = jax.devices()[0].device_kind.lower()
    except Exception:
        kind = ""
    multi_tc = ("v7" in kind) or ("7x" in kind)
    if multi_tc and n >= 2 and n % 2 == 0:
        return n // 2
    return n


def raki_spirit_forward(x_nchw, params, images_per_step=None):
    """Forward pass; input/output are NCHW, matching the PyTorch module."""
    N, C, H, W = x_nchw.shape
    HW = H * W
    ips = images_per_step if images_per_step is not None \
        else _default_images_per_step(N)
    assert N % ips == 0, "batch must be divisible by images_per_step"
    G = N // ips

    xf = x_nchw.reshape(N, C, HW).astype(jnp.float32)

    # One extended column-mask table per distinct kernel size.
    ks = sorted({p["k"] for p in params})
    mask_tables = [_colmask_ext(k, W, HW) for k in ks]
    k_to_idx = {k: i for i, k in enumerate(ks)}
    layer_cfg = tuple((p["k"], p["relu"], k_to_idx[p["k"]]) for p in params)

    kernel = functools.partial(_raki_kernel, W=W, HW=HW, ips=ips,
                               n_masks=len(mask_tables), layer_cfg=layer_cfg)

    flat_inputs = [xf] + list(mask_tables)
    in_specs = [pl.BlockSpec((ips, C, HW), lambda g: (g, 0, 0))]
    in_specs += [pl.BlockSpec(m.shape, lambda g: (0, 0)) for m in mask_tables]
    for p in params:
        flat_inputs += [p["w_mat"], p["b2"]]
        in_specs += [pl.BlockSpec(p["w_mat"].shape, lambda g: (0, 0)),
                     pl.BlockSpec(p["b2"].shape, lambda g: (0, 0))]

    cout_last = params[-1]["cout"]
    out = pl.pallas_call(
        kernel,
        out_shape=jax.ShapeDtypeStruct((N, cout_last, HW), jnp.float32),
        grid=(G,),
        in_specs=in_specs,
        out_specs=pl.BlockSpec((ips, cout_last, HW), lambda g: (g, 0, 0)),
        compiler_params=pltpu.CompilerParams(
            dimension_semantics=("parallel",)),
    )(*flat_inputs)
    return out.reshape(N, cout_last, H, W)


# ---------------------------------------------------------------------------
# Pure-JAX references (lax conv) for sanity checks.
# ---------------------------------------------------------------------------
def _reference_forward(x_nchw, params, *, mxu_bf16):
    x = x_nchw.astype(jnp.float32)
    for p in params:
        w = p["w_torch"]
        pad = p["k"] // 2
        lhs = x.astype(jnp.bfloat16) if mxu_bf16 else x
        rhs = w.astype(jnp.bfloat16) if mxu_bf16 else w
        y = jax.lax.conv_general_dilated(
            lhs, rhs, window_strides=(1, 1),
            padding=[(pad, pad), (pad, pad)],
            dimension_numbers=("NCHW", "OIHW", "NCHW"),
            preferred_element_type=jnp.float32)
        y = y + p["b"][None, :, None, None]
        if p["relu"]:
            y = jnp.maximum(y, 0.0)
        x = y
    return x


if __name__ == "__main__":
    key = jax.random.PRNGKey(0)
    xkey, pkey = jax.random.split(key)

    N, C, H, W = 2, 4, 16, 16
    x = jax.random.normal(xkey, (N, C, H, W), jnp.float32)
    params = init_raki_spirit_params(pkey, in_chans=C)

    # Apples-to-apples reference (bf16 MXU inputs / f32 acc) + full-f32 bound.
    ref_bf16 = jax.block_until_ready(
        _reference_forward(x, params, mxu_bf16=True))
    ref_f32 = jax.block_until_ready(
        _reference_forward(x, params, mxu_bf16=False))

    # Exercise the device default plus both batching code paths
    # (ips=2: whole batch per grid step; ips=1: one image per "parallel" step).
    for ips in (None, 1, 2):
        out = jax.block_until_ready(
            raki_spirit_forward(x, params, images_per_step=ips))
        assert out.shape == (N, C, H, W)
        err = float(jnp.max(jnp.abs(out - ref_bf16)))
        assert jnp.allclose(out, ref_bf16, rtol=5e-3, atol=5e-3), \
            f"images_per_step={ips}: max abs err vs bf16 reference: {err}"
        assert float(jnp.max(jnp.abs(out - ref_f32))) < 0.1

    print("KERNEL_OK")
</pallas_src>

<mosaic_0001>
module attributes {stable_mosaic.version = 11 : i64} {
  func.func @_raki_kernel(%arg0: i32, %arg1: memref<2x4x256xf32, #tpu.memory_space<vmem>>, %arg2: memref<3x290xf32, #tpu.memory_space<vmem>>, %arg3: memref<5x324xf32, #tpu.memory_space<vmem>>, %arg4: memref<8x200xbf16, #tpu.memory_space<vmem>>, %arg5: memref<8x1xf32, #tpu.memory_space<vmem>>, %arg6: memref<16x72xbf16, #tpu.memory_space<vmem>>, %arg7: memref<16x1xf32, #tpu.memory_space<vmem>>, %arg8: memref<8x144xbf16, #tpu.memory_space<vmem>>, %arg9: memref<8x1xf32, #tpu.memory_space<vmem>>, %arg10: memref<4x200xbf16, #tpu.memory_space<vmem>>, %arg11: memref<4x1xf32, #tpu.memory_space<vmem>>, %arg12: memref<2x4x256xf32, #tpu.memory_space<vmem>>) attributes {dimension_semantics = [#tpu.dimension_semantics<parallel>], iteration_bounds = array<i64: 1>, scalar_prefetch = 0 : i64, scratch_operands = 0 : i64, tpu.core_type = #tpu.core_type<tc>, window_params = [{transform_indices = @transform_0, window_bounds = array<i64: 2, 4, 256>}, {pipeline_mode = #tpu.pipeline_mode<synchronous>, transform_indices = @transform_1, window_bounds = array<i64: 3, 290>}, {pipeline_mode = #tpu.pipeline_mode<synchronous>, transform_indices = @transform_2, window_bounds = array<i64: 5, 324>}, {pipeline_mode = #tpu.pipeline_mode<synchronous>, transform_indices = @transform_3, window_bounds = array<i64: 8, 200>}, {pipeline_mode = #tpu.pipeline_mode<synchronous>, transform_indices = @transform_4, window_bounds = array<i64: 8, 1>}, {pipeline_mode = #tpu.pipeline_mode<synchronous>, transform_indices = @transform_5, window_bounds = array<i64: 16, 72>}, {pipeline_mode = #tpu.pipeline_mode<synchronous>, transform_indices = @transform_6, window_bounds = array<i64: 16, 1>}, {pipeline_mode = #tpu.pipeline_mode<synchronous>, transform_indices = @transform_7, window_bounds = array<i64: 8, 144>}, {pipeline_mode = #tpu.pipeline_mode<synchronous>, transform_indices = @transform_8, window_bounds = array<i64: 8, 1>}, {pipeline_mode = #tpu.pipeline_mode<synchronous>, transform_indices = @transform_9, window_bounds = array<i64: 4, 200>}, {pipeline_mode = #tpu.pipeline_mode<synchronous>, transform_indices = @transform_10, window_bounds = array<i64: 4, 1>}, {transform_indices = @transform_11, window_bounds = array<i64: 2, 4, 256>}]} {
    %c0 = arith.constant 0 : index
    %c0_0 = arith.constant 0 : index
    %c0_1 = arith.constant 0 : index
    %0 = vector.load %arg1[%c0, %c0_0, %c0_1] : memref<2x4x256xf32, #tpu.memory_space<vmem>>, vector<1x4x256xf32>
    %1 = vector.shape_cast %0 : vector<1x4x256xf32> to vector<4x256xf32>
    %c1 = arith.constant 1 : index
    %c0_2 = arith.constant 0 : index
    %c0_3 = arith.constant 0 : index
    %2 = vector.load %arg1[%c1, %c0_2, %c0_3] : memref<2x4x256xf32, #tpu.memory_space<vmem>>, vector<1x4x256xf32>
    %3 = vector.shape_cast %2 : vector<1x4x256xf32> to vector<4x256xf32>
    %4 = tpu.concatenate %1, %3 in 1 : vector<4x256xf32>, vector<4x256xf32> -> vector<4x512xf32>
    %cst = arith.constant 0.000000e+00 : f32
    %5 = vector.broadcast %cst : f32 to vector<4x512xf32>
    %6 = tpu.concatenate %4, %5 in 0 : vector<4x512xf32>, vector<4x512xf32> -> vector<8x512xf32>
    %c0_4 = arith.constant 0 : index
    %c0_5 = arith.constant 0 : index
    %7 = vector.load %arg3[%c0_4, %c0_5] : memref<5x324xf32, #tpu.memory_space<vmem>>, vector<1x324xf32>
    %c1_6 = arith.constant 1 : index
    %c0_7 = arith.constant 0 : index
    %8 = vector.load %arg3[%c1_6, %c0_7] : memref<5x324xf32, #tpu.memory_space<vmem>>, vector<1x324xf32>
    %c2 = arith.constant 2 : index
    %c0_8 = arith.constant 0 : index
    %9 = vector.load %arg3[%c2, %c0_8] : memref<5x324xf32, #tpu.memory_space<vmem>>, vector<1x324xf32>
    %c3 = arith.constant 3 : index
    %c0_9 = arith.constant 0 : index
    %10 = vector.load %arg3[%c3, %c0_9] : memref<5x324xf32, #tpu.memory_space<vmem>>, vector<1x324xf32>
    %c4 = arith.constant 4 : index
    %c0_10 = arith.constant 0 : index
    %11 = vector.load %arg3[%c4, %c0_10] : memref<5x324xf32, #tpu.memory_space<vmem>>, vector<1x324xf32>
    %cst_11 = arith.constant 0.000000e+00 : f32
    %12 = vector.broadcast %cst_11 : f32 to vector<8x34xf32>
    %13 = vector.extract_strided_slice %6 {offsets = [0, 0], sizes = [8, 256], strides = [1, 1]} : vector<8x512xf32> to vector<8x256xf32>
    %14 = tpu.concatenate %12, %13, %12 in 1 : vector<8x34xf32>, vector<8x256xf32>, vector<8x34xf32> -> vector<8x324xf32>
    %15 = vector.broadcast %7 : vector<1x324xf32> to vector<8x324xf32>
    %16 = arith.mulf %14, %15 : vector<8x324xf32>
    %17 = arith.truncf %16 : vector<8x324xf32> to vector<8x324xbf16>
    %18 = vector.broadcast %8 : vector<1x324xf32> to vector<8x324xf32>
    %19 = arith.mulf %14, %18 : vector<8x324xf32>
    %20 = arith.truncf %19 : vector<8x324xf32> to vector<8x324xbf16>
    %21 = vector.broadcast %9 : vector<1x324xf32> to vector<8x324xf32>
    %22 = arith.mulf %14, %21 : vector<8x324xf32>
    %23 = arith.truncf %22 : vector<8x324xf32> to vector<8x324xbf16>
    %24 = vector.broadcast %10 : vector<1x324xf32> to vector<8x324xf32>
    %25 = arith.mulf %14, %24 : vector<8x324xf32>
    %26 = arith.truncf %25 : vector<8x324xf32> to vector<8x324xbf16>
    %27 = vector.broadcast %11 : vector<1x324xf32> to vector<8x324xf32>
    %28 = arith.mulf %14, %27 : vector<8x324xf32>
    %29 = arith.truncf %28 : vector<8x324xf32> to vector<8x324xbf16>
    %30 = vector.extract_strided_slice %17 {offsets = [0, 0], sizes = [8, 256], strides = [1, 1]} : vector<8x324xbf16> to vector<8x256xbf16>
    %31 = vector.extract_strided_slice %20 {offsets = [0, 1], sizes = [8, 256], strides = [1, 1]} : vector<8x324xbf16> to vector<8x256xbf16>
    %32 = vector.extract_strided_slice %23 {offsets = [0, 2], sizes = [8, 256], strides = [1, 1]} : vector<8x324xbf16> to vector<8x256xbf16>
    %33 = vector.extract_strided_slice %26 {offsets = [0, 3], sizes = [8, 256], strides = [1, 1]} : vector<8x324xbf16> to vector<8x256xbf16>
    %34 = vector.extract_strided_slice %29 {offsets = [0, 4], sizes = [8, 256], strides = [1, 1]} : vector<8x324xbf16> to vector<8x256xbf16>
    %35 = vector.extract_strided_slice %17 {offsets = [0, 16], sizes = [8, 256], strides = [1, 1]} : vector<8x324xbf16> to vector<8x256xbf16>
    %36 = vector.extract_strided_slice %20 {offsets = [0, 17], sizes = [8, 256], strides = [1, 1]} : vector<8x324xbf16> to vector<8x256xbf16>
    %37 = vector.extract_strided_slice %23 {offsets = [0, 18], sizes = [8, 256], strides = [1, 1]} : vector<8x324xbf16> to vector<8x256xbf16>
    %38 = vector.extract_strided_slice %26 {offsets = [0, 19], sizes = [8, 256], strides = [1, 1]} : vector<8x324xbf16> to vector<8x256xbf16>
    %39 = vector.extract_strided_slice %29 {offsets = [0, 20], sizes = [8, 256], strides = [1, 1]} : vector<8x324xbf16> to vector<8x256xbf16>
    %40 = vector.extract_strided_slice %17 {offsets = [0, 32], sizes = [8, 256], strides = [1, 1]} : vector<8x324xbf16> to vector<8x256xbf16>
    %41 = vector.extract_strided_slice %20 {offsets = [0, 33], sizes = [8, 256], strides = [1, 1]} : vector<8x324xbf16> to vector<8x256xbf16>
    %42 = vector.extract_strided_slice %23 {offsets = [0, 34], sizes = [8, 256], strides = [1, 1]} : vector<8x324xbf16> to vector<8x256xbf16>
    %43 = vector.extract_strided_slice %26 {offsets = [0, 35], sizes = [8, 256], strides = [1, 1]} : vector<8x324xbf16> to vector<8x256xbf16>
    %44 = vector.extract_strided_slice %29 {offsets = [0, 36], sizes = [8, 256], strides = [1, 1]} : vector<8x324xbf16> to vector<8x256xbf16>
    %45 = vector.extract_strided_slice %17 {offsets = [0, 48], sizes = [8, 256], strides = [1, 1]} : vector<8x324xbf16> to vector<8x256xbf16>
    %46 = vector.extract_strided_slice %20 {offsets = [0, 49], sizes = [8, 256], strides = [1, 1]} : vector<8x324xbf16> to vector<8x256xbf16>
    %47 = vector.extract_strided_slice %23 {offsets = [0, 50], sizes = [8, 256], strides = [1, 1]} : vector<8x324xbf16> to vector<8x256xbf16>
    %48 = vector.extract_strided_slice %26 {offsets = [0, 51], sizes = [8, 256], strides = [1, 1]} : vector<8x324xbf16> to vector<8x256xbf16>
    %49 = vector.extract_strided_slice %29 {offsets = [0, 52], sizes = [8, 256], strides = [1, 1]} : vector<8x324xbf16> to vector<8x256xbf16>
    %50 = vector.extract_strided_slice %17 {offsets = [0, 64], sizes = [8, 256], strides = [1, 1]} : vector<8x324xbf16> to vector<8x256xbf16>
    %51 = vector.extract_strided_slice %20 {offsets = [0, 65], sizes = [8, 256], strides = [1, 1]} : vector<8x324xbf16> to vector<8x256xbf16>
    %52 = vector.extract_strided_slice %23 {offsets = [0, 66], sizes = [8, 256], strides = [1, 1]} : vector<8x324xbf16> to vector<8x256xbf16>
    %53 = vector.extract_strided_slice %26 {offsets = [0, 67], sizes = [8, 256], strides = [1, 1]} : vector<8x324xbf16> to vector<8x256xbf16>
    %54 = vector.extract_strided_slice %29 {offsets = [0, 68], sizes = [8, 256], strides = [1, 1]} : vector<8x324xbf16> to vector<8x256xbf16>
    %55 = tpu.concatenate %30, %31, %32, %33, %34, %35, %36, %37, %38, %39, %40, %41, %42, %43, %44, %45 in 0 : vector<8x256xbf16>, vector<8x256xbf16>, vector<8x256xbf16>, vector<8x256xbf16>, vector<8x256xbf16>, vector<8x256xbf16>, vector<8x256xbf16>, vector<8x256xbf16>, vector<8x256xbf16>, vector<8x256xbf16>, vector<8x256xbf16>, vector<8x256xbf16>, vector<8x256xbf16>, vector<8x256xbf16>, vector<8x256xbf16>, vector<8x256xbf16> -> vector<128x256xbf16>
    %56 = tpu.concatenate %46, %47, %48, %49, %50, %51, %52, %53, %54 in 0 : vector<8x256xbf16>, vector<8x256xbf16>, vector<8x256xbf16>, vector<8x256xbf16>, vector<8x256xbf16>, vector<8x256xbf16>, vector<8x256xbf16>, vector<8x256xbf16>, vector<8x256xbf16> -> vector<72x256xbf16>
    %57 = tpu.concatenate %55, %56 in 0 : vector<128x256xbf16>, vector<72x256xbf16> -> vector<200x256xbf16>
    %58 = vector.extract_strided_slice %6 {offsets = [0, 256], sizes = [8, 256], strides = [1, 1]} : vector<8x512xf32> to vector<8x256xf32>
    %59 = tpu.concatenate %12, %58, %12 in 1 : vector<8x34xf32>, vector<8x256xf32>, vector<8x34xf32> -> vector<8x324xf32>
    %60 = vector.broadcast %7 : vector<1x324xf32> to vector<8x324xf32>
    %61 = arith.mulf %59, %60 : vector<8x324xf32>
    %62 = arith.truncf %61 : vector<8x324xf32> to vector<8x324xbf16>
    %63 = vector.broadcast %8 : vector<1x324xf32> to vector<8x324xf32>
    %64 = arith.mulf %59, %63 : vector<8x324xf32>
    %65 = arith.truncf %64 : vector<8x324xf32> to vector<8x324xbf16>
    %66 = vector.broadcast %9 : vector<1x324xf32> to vector<8x324xf32>
    %67 = arith.mulf %59, %66 : vector<8x324xf32>
    %68 = arith.truncf %67 : vector<8x324xf32> to vector<8x324xbf16>
    %69 = vector.broadcast %10 : vector<1x324xf32> to vector<8x324xf32>
    %70 = arith.mulf %59, %69 : vector<8x324xf32>
    %71 = arith.truncf %70 : vector<8x324xf32> to vector<8x324xbf16>
    %72 = vector.broadcast %11 : vector<1x324xf32> to vector<8x324xf32>
    %73 = arith.mulf %59, %72 : vector<8x324xf32>
    %74 = arith.truncf %73 : vector<8x324xf32> to vector<8x324xbf16>
    %75 = vector.extract_strided_slice %62 {offsets = [0, 0], sizes = [8, 256], strides = [1, 1]} : vector<8x324xbf16> to vector<8x256xbf16>
    %76 = vector.extract_strided_slice %65 {offsets = [0, 1], sizes = [8, 256], strides = [1, 1]} : vector<8x324xbf16> to vector<8x256xbf16>
    %77 = vector.extract_strided_slice %68 {offsets = [0, 2], sizes = [8, 256], strides = [1, 1]} : vector<8x324xbf16> to vector<8x256xbf16>
    %78 = vector.extract_strided_slice %71 {offsets = [0, 3], sizes = [8, 256], strides = [1, 1]} : vector<8x324xbf16> to vector<8x256xbf16>
    %79 = vector.extract_strided_slice %74 {offsets = [0, 4], sizes = [8, 256], strides = [1, 1]} : vector<8x324xbf16> to vector<8x256xbf16>
    %80 = vector.extract_strided_slice %62 {offsets = [0, 16], sizes = [8, 256], strides = [1, 1]} : vector<8x324xbf16> to vector<8x256xbf16>
    %81 = vector.extract_strided_slice %65 {offsets = [0, 17], sizes = [8, 256], strides = [1, 1]} : vector<8x324xbf16> to vector<8x256xbf16>
    %82 = vector.extract_strided_slice %68 {offsets = [0, 18], sizes = [8, 256], strides = [1, 1]} : vector<8x324xbf16> to vector<8x256xbf16>
    %83 = vector.extract_strided_slice %71 {offsets = [0, 19], sizes = [8, 256], strides = [1, 1]} : vector<8x324xbf16> to vector<8x256xbf16>
    %84 = vector.extract_strided_slice %74 {offsets = [0, 20], sizes = [8, 256], strides = [1, 1]} : vector<8x324xbf16> to vector<8x256xbf16>
    %85 = vector.extract_strided_slice %62 {offsets = [0, 32], sizes = [8, 256], strides = [1, 1]} : vector<8x324xbf16> to vector<8x256xbf16>
    %86 = vector.extract_strided_slice %65 {offsets = [0, 33], sizes = [8, 256], strides = [1, 1]} : vector<8x324xbf16> to vector<8x256xbf16>
    %87 = vector.extract_strided_slice %68 {offsets = [0, 34], sizes = [8, 256], strides = [1, 1]} : vector<8x324xbf16> to vector<8x256xbf16>
    %88 = vector.extract_strided_slice %71 {offsets = [0, 35], sizes = [8, 256], strides = [1, 1]} : vector<8x324xbf16> to vector<8x256xbf16>
    %89 = vector.extract_strided_slice %74 {offsets = [0, 36], sizes = [8, 256], strides = [1, 1]} : vector<8x324xbf16> to vector<8x256xbf16>
    %90 = vector.extract_strided_slice %62 {offsets = [0, 48], sizes = [8, 256], strides = [1, 1]} : vector<8x324xbf16> to vector<8x256xbf16>
    %91 = vector.extract_strided_slice %65 {offsets = [0, 49], sizes = [8, 256], strides = [1, 1]} : vector<8x324xbf16> to vector<8x256xbf16>
    %92 = vector.extract_strided_slice %68 {offsets = [0, 50], sizes = [8, 256], strides = [1, 1]} : vector<8x324xbf16> to vector<8x256xbf16>
    %93 = vector.extract_strided_slice %71 {offsets = [0, 51], sizes = [8, 256], strides = [1, 1]} : vector<8x324xbf16> to vector<8x256xbf16>
    %94 = vector.extract_strided_slice %74 {offsets = [0, 52], sizes = [8, 256], strides = [1, 1]} : vector<8x324xbf16> to vector<8x256xbf16>
    %95 = vector.extract_strided_slice %62 {offsets = [0, 64], sizes = [8, 256], strides = [1, 1]} : vector<8x324xbf16> to vector<8x256xbf16>
    %96 = vector.extract_strided_slice %65 {offsets = [0, 65], sizes = [8, 256], strides = [1, 1]} : vector<8x324xbf16> to vector<8x256xbf16>
    %97 = vector.extract_strided_slice %68 {offsets = [0, 66], sizes = [8, 256], strides = [1, 1]} : vector<8x324xbf16> to vector<8x256xbf16>
    %98 = vector.extract_strided_slice %71 {offsets = [0, 67], sizes = [8, 256], strides = [1, 1]} : vector<8x324xbf16> to vector<8x256xbf16>
    %99 = vector.extract_strided_slice %74 {offsets = [0, 68], sizes = [8, 256], strides = [1, 1]} : vector<8x324xbf16> to vector<8x256xbf16>
    %100 = tpu.concatenate %75, %76, %77, %78, %79, %80, %81, %82, %83, %84, %85, %86, %87, %88, %89, %90 in 0 : vector<8x256xbf16>, vector<8x256xbf16>, vector<8x256xbf16>, vector<8x256xbf16>, vector<8x256xbf16>, vector<8x256xbf16>, vector<8x256xbf16>, vector<8x256xbf16>, vector<8x256xbf16>, vector<8x256xbf16>, vector<8x256xbf16>, vector<8x256xbf16>, vector<8x256xbf16>, vector<8x256xbf16>, vector<8x256xbf16>, vector<8x256xbf16> -> vector<128x256xbf16>
    %101 = tpu.concatenate %91, %92, %93, %94, %95, %96, %97, %98, %99 in 0 : vector<8x256xbf16>, vector<8x256xbf16>, vector<8x256xbf16>, vector<8x256xbf16>, vector<8x256xbf16>, vector<8x256xbf16>, vector<8x256xbf16>, vector<8x256xbf16>, vector<8x256xbf16> -> vector<72x256xbf16>
    %102 = tpu.concatenate %100, %101 in 0 : vector<128x256xbf16>, vector<72x256xbf16> -> vector<200x256xbf16>
    %103 = tpu.concatenate %57, %102 in 1 : vector<200x256xbf16>, vector<200x256xbf16> -> vector<200x512xbf16>
    %c0_12 = arith.constant 0 : index
    %c0_13 = arith.constant 0 : index
    %104 = vector.load %arg4[%c0_12, %c0_13] : memref<8x200xbf16, #tpu.memory_space<vmem>>, vector<8x200xbf16>
    %cst_14 = arith.constant dense<0.000000e+00> : vector<8x512xf32>
    %105 = tpu.matmul %104, %103, %cst_14 {dimension_numbers = #tpu.dot_dimension_numbers<[1], [0], [0], [1], [0, 0, 1, 1], [], []>} : vector<8x200xbf16>, vector<200x512xbf16>, vector<8x512xf32> -> vector<8x512xf32>
    %c0_15 = arith.constant 0 : index
    %c0_16 = arith.constant 0 : index
    %106 = vector.load %arg5[%c0_15, %c0_16] : memref<8x1xf32, #tpu.memory_space<vmem>>, vector<8x1xf32>
    %107 = vector.broadcast %106 : vector<8x1xf32> to vector<8x512xf32>
    %108 = arith.addf %105, %107 : vector<8x512xf32>
    %cst_17 = arith.constant 0.000000e+00 : f32
    %109 = vector.broadcast %cst_17 : f32 to vector<8x512xf32>
    %110 = arith.maximumf %108, %109 : vector<8x512xf32>
    %c0_18 = arith.constant 0 : index
    %c0_19 = arith.constant 0 : index
    %111 = vector.load %arg2[%c0_18, %c0_19] : memref<3x290xf32, #tpu.memory_space<vmem>>, vector<1x290xf32>
    %c1_20 = arith.constant 1 : index
    %c0_21 = arith.constant 0 : index
    %112 = vector.load %arg2[%c1_20, %c0_21] : memref<3x290xf32, #tpu.memory_space<vmem>>, vector<1x290xf32>
    %c2_22 = arith.constant 2 : index
    %c0_23 = arith.constant 0 : index
    %113 = vector.load %arg2[%c2_22, %c0_23] : memref<3x290xf32, #tpu.memory_space<vmem>>, vector<1x290xf32>
    %cst_24 = arith.constant 0.000000e+00 : f32
    %114 = vector.broadcast %cst_24 : f32 to vector<8x17xf32>
    %115 = vector.extract_strided_slice %110 {offsets = [0, 0], sizes = [8, 256], strides = [1, 1]} : vector<8x512xf32> to vector<8x256xf32>
    %116 = tpu.concatenate %114, %115, %114 in 1 : vector<8x17xf32>, vector<8x256xf32>, vector<8x17xf32> -> vector<8x290xf32>
    %117 = vector.broadcast %111 : vector<1x290xf32> to vector<8x290xf32>
    %118 = arith.mulf %116, %117 : vector<8x290xf32>
    %119 = arith.truncf %118 : vector<8x290xf32> to vector<8x290xbf16>
    %120 = vector.broadcast %112 : vector<1x290xf32> to vector<8x290xf32>
    %121 = arith.mulf %116, %120 : vector<8x290xf32>
    %122 = arith.truncf %121 : vector<8x290xf32> to vector<8x290xbf16>
    %123 = vector.broadcast %113 : vector<1x290xf32> to vector<8x290xf32>
    %124 = arith.mulf %116, %123 : vector<8x290xf32>
    %125 = arith.truncf %124 : vector<8x290xf32> to vector<8x290xbf16>
    %126 = vector.extract_strided_slice %119 {offsets = [0, 0], sizes = [8, 256], strides = [1, 1]} : vector<8x290xbf16> to vector<8x256xbf16>
    %127 = vector.extract_strided_slice %122 {offsets = [0, 1], sizes = [8, 256], strides = [1, 1]} : vector<8x290xbf16> to vector<8x256xbf16>
    %128 = vector.extract_strided_slice %125 {offsets = [0, 2], sizes = [8, 256], strides = [1, 1]} : vector<8x290xbf16> to vector<8x256xbf16>
    %129 = vector.extract_strided_slice %119 {offsets = [0, 16], sizes = [8, 256], strides = [1, 1]} : vector<8x290xbf16> to vector<8x256xbf16>
    %130 = vector.extract_strided_slice %122 {offsets = [0, 17], sizes = [8, 256], strides = [1, 1]} : vector<8x290xbf16> to vector<8x256xbf16>
    %131 = vector.extract_strided_slice %125 {offsets = [0, 18], sizes = [8, 256], strides = [1, 1]} : vector<8x290xbf16> to vector<8x256xbf16>
    %132 = vector.extract_strided_slice %119 {offsets = [0, 32], sizes = [8, 256], strides = [1, 1]} : vector<8x290xbf16> to vector<8x256xbf16>
    %133 = vector.extract_strided_slice %122 {offsets = [0, 33], sizes = [8, 256], strides = [1, 1]} : vector<8x290xbf16> to vector<8x256xbf16>
    %134 = vector.extract_strided_slice %125 {offsets = [0, 34], sizes = [8, 256], strides = [1, 1]} : vector<8x290xbf16> to vector<8x256xbf16>
    %135 = tpu.concatenate %126, %127, %128, %129, %130, %131, %132, %133, %134 in 0 : vector<8x256xbf16>, vector<8x256xbf16>, vector<8x256xbf16>, vector<8x256xbf16>, vector<8x256xbf16>, vector<8x256xbf16>, vector<8x256xbf16>, vector<8x256xbf16>, vector<8x256xbf16> -> vector<72x256xbf16>
    %136 = vector.extract_strided_slice %110 {offsets = [0, 256], sizes = [8, 256], strides = [1, 1]} : vector<8x512xf32> to vector<8x256xf32>
    %137 = tpu.concatenate %114, %136, %114 in 1 : vector<8x17xf32>, vector<8x256xf32>, vector<8x17xf32> -> vector<8x290xf32>
    %138 = vector.broadcast %111 : vector<1x290xf32> to vector<8x290xf32>
    %139 = arith.mulf %137, %138 : vector<8x290xf32>
    %140 = arith.truncf %139 : vector<8x290xf32> to vector<8x290xbf16>
    %141 = vector.broadcast %112 : vector<1x290xf32> to vector<8x290xf32>
    %142 = arith.mulf %137, %141 : vector<8x290xf32>
    %143 = arith.truncf %142 : vector<8x290xf32> to vector<8x290xbf16>
    %144 = vector.broadcast %113 : vector<1x290xf32> to vector<8x290xf32>
    %145 = arith.mulf %137, %144 : vector<8x290xf32>
    %146 = arith.truncf %145 : vector<8x290xf32> to vector<8x290xbf16>
    %147 = vector.extract_strided_slice %140 {offsets = [0, 0], sizes = [8, 256], strides = [1, 1]} : vector<8x290xbf16> to vector<8x256xbf16>
    %148 = vector.extract_strided_slice %143 {offsets = [0, 1], sizes = [8, 256], strides = [1, 1]} : vector<8x290xbf16> to vector<8x256xbf16>
    %149 = vector.extract_strided_slice %146 {offsets = [0, 2], sizes = [8, 256], strides = [1, 1]} : vector<8x290xbf16> to vector<8x256xbf16>
    %150 = vector.extract_strided_slice %140 {offsets = [0, 16], sizes = [8, 256], strides = [1, 1]} : vector<8x290xbf16> to vector<8x256xbf16>
    %151 = vector.extract_strided_slice %143 {offsets = [0, 17], sizes = [8, 256], strides = [1, 1]} : vector<8x290xbf16> to vector<8x256xbf16>
    %152 = vector.extract_strided_slice %146 {offsets = [0, 18], sizes = [8, 256], strides = [1, 1]} : vector<8x290xbf16> to vector<8x256xbf16>
    %153 = vector.extract_strided_slice %140 {offsets = [0, 32], sizes = [8, 256], strides = [1, 1]} : vector<8x290xbf16> to vector<8x256xbf16>
    %154 = vector.extract_strided_slice %143 {offsets = [0, 33], sizes = [8, 256], strides = [1, 1]} : vector<8x290xbf16> to vector<8x256xbf16>
    %155 = vector.extract_strided_slice %146 {offsets = [0, 34], sizes = [8, 256], strides = [1, 1]} : vector<8x290xbf16> to vector<8x256xbf16>
    %156 = tpu.concatenate %147, %148, %149, %150, %151, %152, %153, %154, %155 in 0 : vector<8x256xbf16>, vector<8x256xbf16>, vector<8x256xbf16>, vector<8x256xbf16>, vector<8x256xbf16>, vector<8x256xbf16>, vector<8x256xbf16>, vector<8x256xbf16>, vector<8x256xbf16> -> vector<72x256xbf16>
    %157 = tpu.concatenate %135, %156 in 1 : vector<72x256xbf16>, vector<72x256xbf16> -> vector<72x512xbf16>
    %c0_25 = arith.constant 0 : index
    %c0_26 = arith.constant 0 : index
    %158 = vector.load %arg6[%c0_25, %c0_26] : memref<16x72xbf16, #tpu.memory_space<vmem>>, vector<16x72xbf16>
    %cst_27 = arith.constant dense<0.000000e+00> : vector<16x512xf32>
    %159 = tpu.matmul %158, %157, %cst_27 {dimension_numbers = #tpu.dot_dimension_numbers<[1], [0], [0], [1], [0, 0, 1, 1], [], []>} : vector<16x72xbf16>, vector<72x512xbf16>, vector<16x512xf32> -> vector<16x512xf32>
    %c0_28 = arith.constant 0 : index
    %c0_29 = arith.constant 0 : index
    %160 = vector.load %arg7[%c0_28, %c0_29] : memref<16x1xf32, #tpu.memory_space<vmem>>, vector<16x1xf32>
    %161 = vector.broadcast %160 : vector<16x1xf32> to vector<16x512xf32>
    %162 = arith.addf %159, %161 : vector<16x512xf32>
    %cst_30 = arith.constant 0.000000e+00 : f32
    %163 = vector.broadcast %cst_30 : f32 to vector<16x512xf32>
    %164 = arith.maximumf %162, %163 : vector<16x512xf32>
    %c0_31 = arith.constant 0 : index
    %c0_32 = arith.constant 0 : index
    %165 = vector.load %arg2[%c0_31, %c0_32] : memref<3x290xf32, #tpu.memory_space<vmem>>, vector<1x290xf32>
    %c1_33 = arith.constant 1 : index
    %c0_34 = arith.constant 0 : index
    %166 = vector.load %arg2[%c1_33, %c0_34] : memref<3x290xf32, #tpu.memory_space<vmem>>, vector<1x290xf32>
    %c2_35 = arith.constant 2 : index
    %c0_36 = arith.constant 0 : index
    %167 = vector.load %arg2[%c2_35, %c0_36] : memref<3x290xf32, #tpu.memory_space<vmem>>, vector<1x290xf32>
    %cst_37 = arith.constant 0.000000e+00 : f32
    %168 = vector.broadcast %cst_37 : f32 to vector<16x17xf32>
    %169 = vector.extract_strided_slice %164 {offsets = [0, 0], sizes = [16, 256], strides = [1, 1]} : vector<16x512xf32> to vector<16x256xf32>
    %170 = tpu.concatenate %168, %169, %168 in 1 : vector<16x17xf32>, vector<16x256xf32>, vector<16x17xf32> -> vector<16x290xf32>
    %171 = vector.broadcast %165 : vector<1x290xf32> to vector<16x290xf32>
    %172 = arith.mulf %170, %171 : vector<16x290xf32>
    %173 = arith.truncf %172 : vector<16x290xf32> to vector<16x290xbf16>
    %174 = vector.broadcast %166 : vector<1x290xf32> to vector<16x290xf32>
    %175 = arith.mulf %170, %174 : vector<16x290xf32>
    %176 = arith.truncf %175 : vector<16x290xf32> to vector<16x290xbf16>
    %177 = vector.broadcast %167 : vector<1x290xf32> to vector<16x290xf32>
    %178 = arith.mulf %170, %177 : vector<16x290xf32>
    %179 = arith.truncf %178 : vector<16x290xf32> to vector<16x290xbf16>
    %180 = vector.extract_strided_slice %173 {offsets = [0, 0], sizes = [16, 256], strides = [1, 1]} : vector<16x290xbf16> to vector<16x256xbf16>
    %181 = vector.extract_strided_slice %176 {offsets = [0, 1], sizes = [16, 256], strides = [1, 1]} : vector<16x290xbf16> to vector<16x256xbf16>
    %182 = vector.extract_strided_slice %179 {offsets = [0, 2], sizes = [16, 256], strides = [1, 1]} : vector<16x290xbf16> to vector<16x256xbf16>
    %183 = vector.extract_strided_slice %173 {offsets = [0, 16], sizes = [16, 256], strides = [1, 1]} : vector<16x290xbf16> to vector<16x256xbf16>
    %184 = vector.extract_strided_slice %176 {offsets = [0, 17], sizes = [16, 256], strides = [1, 1]} : vector<16x290xbf16> to vector<16x256xbf16>
    %185 = vector.extract_strided_slice %179 {offsets = [0, 18], sizes = [16, 256], strides = [1, 1]} : vector<16x290xbf16> to vector<16x256xbf16>
    %186 = vector.extract_strided_slice %173 {offsets = [0, 32], sizes = [16, 256], strides = [1, 1]} : vector<16x290xbf16> to vector<16x256xbf16>
    %187 = vector.extract_strided_slice %176 {offsets = [0, 33], sizes = [16, 256], strides = [1, 1]} : vector<16x290xbf16> to vector<16x256xbf16>
    %188 = vector.extract_strided_slice %179 {offsets = [0, 34], sizes = [16, 256], strides = [1, 1]} : vector<16x290xbf16> to vector<16x256xbf16>
    %189 = tpu.concatenate %180, %181, %182, %183, %184, %185, %186, %187, %188 in 0 : vector<16x256xbf16>, vector<16x256xbf16>, vector<16x256xbf16>, vector<16x256xbf16>, vector<16x256xbf16>, vector<16x256xbf16>, vector<16x256xbf16>, vector<16x256xbf16>, vector<16x256xbf16> -> vector<144x256xbf16>
    %190 = vector.extract_strided_slice %164 {offsets = [0, 256], sizes = [16, 256], strides = [1, 1]} : vector<16x512xf32> to vector<16x256xf32>
    %191 = tpu.concatenate %168, %190, %168 in 1 : vector<16x17xf32>, vector<16x256xf32>, vector<16x17xf32> -> vector<16x290xf32>
    %192 = vector.broadcast %165 : vector<1x290xf32> to vector<16x290xf32>
    %193 = arith.mulf %191, %192 : vector<16x290xf32>
    %194 = arith.truncf %193 : vector<16x290xf32> to vector<16x290xbf16>
    %195 = vector.broadcast %166 : vector<1x290xf32> to vector<16x290xf32>
    %196 = arith.mulf %191, %195 : vector<16x290xf32>
    %197 = arith.truncf %196 : vector<16x290xf32> to vector<16x290xbf16>
    %198 = vector.broadcast %167 : vector<1x290xf32> to vector<16x290xf32>
    %199 = arith.mulf %191, %198 : vector<16x290xf32>
    %200 = arith.truncf %199 : vector<16x290xf32> to vector<16x290xbf16>
    %201 = vector.extract_strided_slice %194 {offsets = [0, 0], sizes = [16, 256], strides = [1, 1]} : vector<16x290xbf16> to vector<16x256xbf16>
    %202 = vector.extract_strided_slice %197 {offsets = [0, 1], sizes = [16, 256], strides = [1, 1]} : vector<16x290xbf16> to vector<16x256xbf16>
    %203 = vector.extract_strided_slice %200 {offsets = [0, 2], sizes = [16, 256], strides = [1, 1]} : vector<16x290xbf16> to vector<16x256xbf16>
    %204 = vector.extract_strided_slice %194 {offsets = [0, 16], sizes = [16, 256], strides = [1, 1]} : vector<16x290xbf16> to vector<16x256xbf16>
    %205 = vector.extract_strided_slice %197 {offsets = [0, 17], sizes = [16, 256], strides = [1, 1]} : vector<16x290xbf16> to vector<16x256xbf16>
    %206 = vector.extract_strided_slice %200 {offsets = [0, 18], sizes = [16, 256], strides = [1, 1]} : vector<16x290xbf16> to vector<16x256xbf16>
    %207 = vector.extract_strided_slice %194 {offsets = [0, 32], sizes = [16, 256], strides = [1, 1]} : vector<16x290xbf16> to vector<16x256xbf16>
    %208 = vector.extract_strided_slice %197 {offsets = [0, 33], sizes = [16, 256], strides = [1, 1]} : vector<16x290xbf16> to vector<16x256xbf16>
    %209 = vector.extract_strided_slice %200 {offsets = [0, 34], sizes = [16, 256], strides = [1, 1]} : vector<16x290xbf16> to vector<16x256xbf16>
    %210 = tpu.concatenate %201, %202, %203, %204, %205, %206, %207, %208, %209 in 0 : vector<16x256xbf16>, vector<16x256xbf16>, vector<16x256xbf16>, vector<16x256xbf16>, vector<16x256xbf16>, vector<16x256xbf16>, vector<16x256xbf16>, vector<16x256xbf16>, vector<16x256xbf16> -> vector<144x256xbf16>
    %211 = tpu.concatenate %189, %210 in 1 : vector<144x256xbf16>, vector<144x256xbf16> -> vector<144x512xbf16>
    %c0_38 = arith.constant 0 : index
    %c0_39 = arith.constant 0 : index
    %212 = vector.load %arg8[%c0_38, %c0_39] : memref<8x144xbf16, #tpu.memory_space<vmem>>, vector<8x144xbf16>
    %cst_40 = arith.constant dense<0.000000e+00> : vector<8x512xf32>
    %213 = tpu.matmul %212, %211, %cst_40 {dimension_numbers = #tpu.dot_dimension_numbers<[1], [0], [0], [1], [0, 0, 1, 1], [], []>} : vector<8x144xbf16>, vector<144x512xbf16>, vector<8x512xf32> -> vector<8x512xf32>
    %c0_41 = arith.constant 0 : index
    %c0_42 = arith.constant 0 : index
    %214 = vector.load %arg9[%c0_41, %c0_42] : memref<8x1xf32, #tpu.memory_space<vmem>>, vector<8x1xf32>
    %215 = vector.broadcast %214 : vector<8x1xf32> to vector<8x512xf32>
    %216 = arith.addf %213, %215 : vector<8x512xf32>
    %cst_43 = arith.constant 0.000000e+00 : f32
    %217 = vector.broadcast %cst_43 : f32 to vector<8x512xf32>
    %218 = arith.maximumf %216, %217 : vector<8x512xf32>
    %c0_44 = arith.constant 0 : index
    %c0_45 = arith.constant 0 : index
    %219 = vector.load %arg3[%c0_44, %c0_45] : memref<5x324xf32, #tpu.memory_space<vmem>>, vector<1x324xf32>
    %c1_46 = arith.constant 1 : index
    %c0_47 = arith.constant 0 : index
    %220 = vector.load %arg3[%c1_46, %c0_47] : memref<5x324xf32, #tpu.memory_space<vmem>>, vector<1x324xf32>
    %c2_48 = arith.constant 2 : index
    %c0_49 = arith.constant 0 : index
    %221 = vector.load %arg3[%c2_48, %c0_49] : memref<5x324xf32, #tpu.memory_space<vmem>>, vector<1x324xf32>
    %c3_50 = arith.constant 3 : index
    %c0_51 = arith.constant 0 : index
    %222 = vector.load %arg3[%c3_50, %c0_51] : memref<5x324xf32, #tpu.memory_space<vmem>>, vector<1x324xf32>
    %c4_52 = arith.constant 4 : index
    %c0_53 = arith.constant 0 : index
    %223 = vector.load %arg3[%c4_52, %c0_53] : memref<5x324xf32, #tpu.memory_space<vmem>>, vector<1x324xf32>
    %cst_54 = arith.constant 0.000000e+00 : f32
    %224 = vector.broadcast %cst_54 : f32 to vector<8x34xf32>
    %225 = vector.extract_strided_slice %218 {offsets = [0, 0], sizes = [8, 256], strides = [1, 1]} : vector<8x512xf32> to vector<8x256xf32>
    %226 = tpu.concatenate %224, %225, %224 in 1 : vector<8x34xf32>, vector<8x256xf32>, vector<8x34xf32> -> vector<8x324xf32>
    %227 = vector.broadcast %219 : vector<1x324xf32> to vector<8x324xf32>
    %228 = arith.mulf %226, %227 : vector<8x324xf32>
    %229 = arith.truncf %228 : vector<8x324xf32> to vector<8x324xbf16>
    %230 = vector.broadcast %220 : vector<1x324xf32> to vector<8x324xf32>
    %231 = arith.mulf %226, %230 : vector<8x324xf32>
    %232 = arith.truncf %231 : vector<8x324xf32> to vector<8x324xbf16>
    %233 = vector.broadcast %221 : vector<1x324xf32> to vector<8x324xf32>
    %234 = arith.mulf %226, %233 : vector<8x324xf32>
    %235 = arith.truncf %234 : vector<8x324xf32> to vector<8x324xbf16>
    %236 = vector.broadcast %222 : vector<1x324xf32> to vector<8x324xf32>
    %237 = arith.mulf %226, %236 : vector<8x324xf32>
    %238 = arith.truncf %237 : vector<8x324xf32> to vector<8x324xbf16>
    %239 = vector.broadcast %223 : vector<1x324xf32> to vector<8x324xf32>
    %240 = arith.mulf %226, %239 : vector<8x324xf32>
    %241 = arith.truncf %240 : vector<8x324xf32> to vector<8x324xbf16>
    %242 = vector.extract_strided_slice %229 {offsets = [0, 0], sizes = [8, 256], strides = [1, 1]} : vector<8x324xbf16> to vector<8x256xbf16>
    %243 = vector.extract_strided_slice %232 {offsets = [0, 1], sizes = [8, 256], strides = [1, 1]} : vector<8x324xbf16> to vector<8x256xbf16>
    %244 = vector.extract_strided_slice %235 {offsets = [0, 2], sizes = [8, 256], strides = [1, 1]} : vector<8x324xbf16> to vector<8x256xbf16>
    %245 = vector.extract_strided_slice %238 {offsets = [0, 3], sizes = [8, 256], strides = [1, 1]} : vector<8x324xbf16> to vector<8x256xbf16>
    %246 = vector.extract_strided_slice %241 {offsets = [0, 4], sizes = [8, 256], strides = [1, 1]} : vector<8x324xbf16> to vector<8x256xbf16>
    %247 = vector.extract_strided_slice %229 {offsets = [0, 16], sizes = [8, 256], strides = [1, 1]} : vector<8x324xbf16> to vector<8x256xbf16>
    %248 = vector.extract_strided_slice %232 {offsets = [0, 17], sizes = [8, 256], strides = [1, 1]} : vector<8x324xbf16> to vector<8x256xbf16>
    %249 = vector.extract_strided_slice %235 {offsets = [0, 18], sizes = [8, 256], strides = [1, 1]} : vector<8x324xbf16> to vector<8x256xbf16>
    %250 = vector.extract_strided_slice %238 {offsets = [0, 19], sizes = [8, 256], strides = [1, 1]} : vector<8x324xbf16> to vector<8x256xbf16>
    %251 = vector.extract_strided_slice %241 {offsets = [0, 20], sizes = [8, 256], strides = [1, 1]} : vector<8x324xbf16> to vector<8x256xbf16>
    %252 = vector.extract_strided_slice %229 {offsets = [0, 32], sizes = [8, 256], strides = [1, 1]} : vector<8x324xbf16> to vector<8x256xbf16>
    %253 = vector.extract_strided_slice %232 {offsets = [0, 33], sizes = [8, 256], strides = [1, 1]} : vector<8x324xbf16> to vector<8x256xbf16>
    %254 = vector.extract_strided_slice %235 {offsets = [0, 34], sizes = [8, 256], strides = [1, 1]} : vector<8x324xbf16> to vector<8x256xbf16>
    %255 = vector.extract_strided_slice %238 {offsets = [0, 35], sizes = [8, 256], strides = [1, 1]} : vector<8x324xbf16> to vector<8x256xbf16>
    %256 = vector.extract_strided_slice %241 {offsets = [0, 36], sizes = [8, 256], strides = [1, 1]} : vector<8x324xbf16> to vector<8x256xbf16>
    %257 = vector.extract_strided_slice %229 {offsets = [0, 48], sizes = [8, 256], strides = [1, 1]} : vector<8x324xbf16> to vector<8x256xbf16>
    %258 = vector.extract_strided_slice %232 {offsets = [0, 49], sizes = [8, 256], strides = [1, 1]} : vector<8x324xbf16> to vector<8x256xbf16>
    %259 = vector.extract_strided_slice %235 {offsets = [0, 50], sizes = [8, 256], strides = [1, 1]} : vector<8x324xbf16> to vector<8x256xbf16>
    %260 = vector.extract_strided_slice %238 {offsets = [0, 51], sizes = [8, 256], strides = [1, 1]} : vector<8x324xbf16> to vector<8x256xbf16>
    %261 = vector.extract_strided_slice %241 {offsets = [0, 52], sizes = [8, 256], strides = [1, 1]} : vector<8x324xbf16> to vector<8x256xbf16>
    %262 = vector.extract_strided_slice %229 {offsets = [0, 64], sizes = [8, 256], strides = [1, 1]} : vector<8x324xbf16> to vector<8x256xbf16>
    %263 = vector.extract_strided_slice %232 {offsets = [0, 65], sizes = [8, 256], strides = [1, 1]} : vector<8x324xbf16> to vector<8x256xbf16>
    %264 = vector.extract_strided_slice %235 {offsets = [0, 66], sizes = [8, 256], strides = [1, 1]} : vector<8x324xbf16> to vector<8x256xbf16>
    %265 = vector.extract_strided_slice %238 {offsets = [0, 67], sizes = [8, 256], strides = [1, 1]} : vector<8x324xbf16> to vector<8x256xbf16>
    %266 = vector.extract_strided_slice %241 {offsets = [0, 68], sizes = [8, 256], strides = [1, 1]} : vector<8x324xbf16> to vector<8x256xbf16>
    %267 = tpu.concatenate %242, %243, %244, %245, %246, %247, %248, %249, %250, %251, %252, %253, %254, %255, %256, %257 in 0 : vector<8x256xbf16>, vector<8x256xbf16>, vector<8x256xbf16>, vector<8x256xbf16>, vector<8x256xbf16>, vector<8x256xbf16>, vector<8x256xbf16>, vector<8x256xbf16>, vector<8x256xbf16>, vector<8x256xbf16>, vector<8x256xbf16>, vector<8x256xbf16>, vector<8x256xbf16>, vector<8x256xbf16>, vector<8x256xbf16>, vector<8x256xbf16> -> vector<128x256xbf16>
    %268 = tpu.concatenate %258, %259, %260, %261, %262, %263, %264, %265, %266 in 0 : vector<8x256xbf16>, vector<8x256xbf16>, vector<8x256xbf16>, vector<8x256xbf16>, vector<8x256xbf16>, vector<8x256xbf16>, vector<8x256xbf16>, vector<8x256xbf16>, vector<8x256xbf16> -> vector<72x256xbf16>
    %269 = tpu.concatenate %267, %268 in 0 : vector<128x256xbf16>, vector<72x256xbf16> -> vector<200x256xbf16>
    %270 = vector.extract_strided_slice %218 {offsets = [0, 256], sizes = [8, 256], strides = [1, 1]} : vector<8x512xf32> to vector<8x256xf32>
    %271 = tpu.concatenate %224, %270, %224 in 1 : vector<8x34xf32>, vector<8x256xf32>, vector<8x34xf32> -> vector<8x324xf32>
    %272 = vector.broadcast %219 : vector<1x324xf32> to vector<8x324xf32>
    %273 = arith.mulf %271, %272 : vector<8x324xf32>
    %274 = arith.truncf %273 : vector<8x324xf32> to vector<8x324xbf16>
    %275 = vector.broadcast %220 : vector<1x324xf32> to vector<8x324xf32>
    %276 = arith.mulf %271, %275 : vector<8x324xf32>
    %277 = arith.truncf %276 : vector<8x324xf32> to vector<8x324xbf16>
    %278 = vector.broadcast %221 : vector<1x324xf32> to vector<8x324xf32>
    %279 = arith.mulf %271, %278 : vector<8x324xf32>
    %280 = arith.truncf %279 : vector<8x324xf32> to vector<8x324xbf16>
    %281 = vector.broadcast %222 : vector<1x324xf32> to vector<8x324xf32>
    %282 = arith.mulf %271, %281 : vector<8x324xf32>
    %283 = arith.truncf %282 : vector<8x324xf32> to vector<8x324xbf16>
    %284 = vector.broadcast %223 : vector<1x324xf32> to vector<8x324xf32>
    %285 = arith.mulf %271, %284 : vector<8x324xf32>
    %286 = arith.truncf %285 : vector<8x324xf32> to vector<8x324xbf16>
    %287 = vector.extract_strided_slice %274 {offsets = [0, 0], sizes = [8, 256], strides = [1, 1]} : vector<8x324xbf16> to vector<8x256xbf16>
    %288 = vector.extract_strided_slice %277 {offsets = [0, 1], sizes = [8, 256], strides = [1, 1]} : vector<8x324xbf16> to vector<8x256xbf16>
    %289 = vector.extract_strided_slice %280 {offsets = [0, 2], sizes = [8, 256], strides = [1, 1]} : vector<8x324xbf16> to vector<8x256xbf16>
    %290 = vector.extract_strided_slice %283 {offsets = [0, 3], sizes = [8, 256], strides = [1, 1]} : vector<8x324xbf16> to vector<8x256xbf16>
    %291 = vector.extract_strided_slice %286 {offsets = [0, 4], sizes = [8, 256], strides = [1, 1]} : vector<8x324xbf16> to vector<8x256xbf16>
    %292 = vector.extract_strided_slice %274 {offsets = [0, 16], sizes = [8, 256], strides = [1, 1]} : vector<8x324xbf16> to vector<8x256xbf16>
    %293 = vector.extract_strided_slice %277 {offsets = [0, 17], sizes = [8, 256], strides = [1, 1]} : vector<8x324xbf16> to vector<8x256xbf16>
    %294 = vector.extract_strided_slice %280 {offsets = [0, 18], sizes = [8, 256], strides = [1, 1]} : vector<8x324xbf16> to vector<8x256xbf16>
    %295 = vector.extract_strided_slice %283 {offsets = [0, 19], sizes = [8, 256], strides = [1, 1]} : vector<8x324xbf16> to vector<8x256xbf16>
    %296 = vector.extract_strided_slice %286 {offsets = [0, 20], sizes = [8, 256], strides = [1, 1]} : vector<8x324xbf16> to vector<8x256xbf16>
    %297 = vector.extract_strided_slice %274 {offsets = [0, 32], sizes = [8, 256], strides = [1, 1]} : vector<8x324xbf16> to vector<8x256xbf16>
    %298 = vector.extract_strided_slice %277 {offsets = [0, 33], sizes = [8, 256], strides = [1, 1]} : vector<8x324xbf16> to vector<8x256xbf16>
    %299 = vector.extract_strided_slice %280 {offsets = [0, 34], sizes = [8, 256], strides = [1, 1]} : vector<8x324xbf16> to vector<8x256xbf16>
    %300 = vector.extract_strided_slice %283 {offsets = [0, 35], sizes = [8, 256], strides = [1, 1]} : vector<8x324xbf16> to vector<8x256xbf16>
    %301 = vector.extract_strided_slice %286 {offsets = [0, 36], sizes = [8, 256], strides = [1, 1]} : vector<8x324xbf16> to vector<8x256xbf16>
    %302 = vector.extract_strided_slice %274 {offsets = [0, 48], sizes = [8, 256], strides = [1, 1]} : vector<8x324xbf16> to vector<8x256xbf16>
    %303 = vector.extract_strided_slice %277 {offsets = [0, 49], sizes = [8, 256], strides = [1, 1]} : vector<8x324xbf16> to vector<8x256xbf16>
    %304 = vector.extract_strided_slice %280 {offsets = [0, 50], sizes = [8, 256], strides = [1, 1]} : vector<8x324xbf16> to vector<8x256xbf16>
    %305 = vector.extract_strided_slice %283 {offsets = [0, 51], sizes = [8, 256], strides = [1, 1]} : vector<8x324xbf16> to vector<8x256xbf16>
    %306 = vector.extract_strided_slice %286 {offsets = [0, 52], sizes = [8, 256], strides = [1, 1]} : vector<8x324xbf16> to vector<8x256xbf16>
    %307 = vector.extract_strided_slice %274 {offsets = [0, 64], sizes = [8, 256], strides = [1, 1]} : vector<8x324xbf16> to vector<8x256xbf16>
    %308 = vector.extract_strided_slice %277 {offsets = [0, 65], sizes = [8, 256], strides = [1, 1]} : vector<8x324xbf16> to vector<8x256xbf16>
    %309 = vector.extract_strided_slice %280 {offsets = [0, 66], sizes = [8, 256], strides = [1, 1]} : vector<8x324xbf16> to vector<8x256xbf16>
    %310 = vector.extract_strided_slice %283 {offsets = [0, 67], sizes = [8, 256], strides = [1, 1]} : vector<8x324xbf16> to vector<8x256xbf16>
    %311 = vector.extract_strided_slice %286 {offsets = [0, 68], sizes = [8, 256], strides = [1, 1]} : vector<8x324xbf16> to vector<8x256xbf16>
    %312 = tpu.concatenate %287, %288, %289, %290, %291, %292, %293, %294, %295, %296, %297, %298, %299, %300, %301, %302 in 0 : vector<8x256xbf16>, vector<8x256xbf16>, vector<8x256xbf16>, vector<8x256xbf16>, vector<8x256xbf16>, vector<8x256xbf16>, vector<8x256xbf16>, vector<8x256xbf16>, vector<8x256xbf16>, vector<8x256xbf16>, vector<8x256xbf16>, vector<8x256xbf16>, vector<8x256xbf16>, vector<8x256xbf16>, vector<8x256xbf16>, vector<8x256xbf16> -> vector<128x256xbf16>
    %313 = tpu.concatenate %303, %304, %305, %306, %307, %308, %309, %310, %311 in 0 : vector<8x256xbf16>, vector<8x256xbf16>, vector<8x256xbf16>, vector<8x256xbf16>, vector<8x256xbf16>, vector<8x256xbf16>, vector<8x256xbf16>, vector<8x256xbf16>, vector<8x256xbf16> -> vector<72x256xbf16>
    %314 = tpu.concatenate %312, %313 in 0 : vector<128x256xbf16>, vector<72x256xbf16> -> vector<200x256xbf16>
    %315 = tpu.concatenate %269, %314 in 1 : vector<200x256xbf16>, vector<200x256xbf16> -> vector<200x512xbf16>
    %c0_55 = arith.constant 0 : index
    %c0_56 = arith.constant 0 : index
    %316 = vector.load %arg10[%c0_55, %c0_56] : memref<4x200xbf16, #tpu.memory_space<vmem>>, vector<4x200xbf16>
    %cst_57 = arith.constant dense<0.000000e+00> : vector<4x512xf32>
    %317 = tpu.matmul %316, %315, %cst_57 {dimension_numbers = #tpu.dot_dimension_numbers<[1], [0], [0], [1], [0, 0, 1, 1], [], []>} : vector<4x200xbf16>, vector<200x512xbf16>, vector<4x512xf32> -> vector<4x512xf32>
    %c0_58 = arith.constant 0 : index
    %c0_59 = arith.constant 0 : index
    %318 = vector.load %arg11[%c0_58, %c0_59] : memref<4x1xf32, #tpu.memory_space<vmem>>, vector<4x1xf32>
    %319 = vector.broadcast %318 : vector<4x1xf32> to vector<4x512xf32>
    %320 = arith.addf %317, %319 : vector<4x512xf32>
    %321 = vector.extract_strided_slice %320 {offsets = [0, 0], sizes = [4, 256], strides = [1, 1]} : vector<4x512xf32> to vector<4x256xf32>
    %c0_60 = arith.constant 0 : index
    %c0_61 = arith.constant 0 : index
    %c0_62 = arith.constant 0 : index
    %322 = vector.load %arg12[%c0_60, %c0_61, %c0_62] : memref<2x4x256xf32, #tpu.memory_space<vmem>>, vector<1x4x256xf32>
    %323 = vector.shape_cast %322 : vector<1x4x256xf32> to vector<4x256xf32>
    %324 = vector.shape_cast %321 : vector<4x256xf32> to vector<1x4x256xf32>
    tpu.vector_store %arg12[%c0_60, %c0_61, %c0_62], %324 {strides = array<i32>} : memref<2x4x256xf32, #tpu.memory_space<vmem>>, vector<1x4x256xf32>,
    %325 = vector.extract_strided_slice %320 {offsets = [0, 256], sizes = [4, 256], strides = [1, 1]} : vector<4x512xf32> to vector<4x256xf32>
    %c1_63 = arith.constant 1 : index
    %c0_64 = arith.constant 0 : index
    %c0_65 = arith.constant 0 : index
    %326 = vector.load %arg12[%c1_63, %c0_64, %c0_65] : memref<2x4x256xf32, #tpu.memory_space<vmem>>, vector<1x4x256xf32>
    %327 = vector.shape_cast %326 : vector<1x4x256xf32> to vector<4x256xf32>
    %328 = vector.shape_cast %325 : vector<4x256xf32> to vector<1x4x256xf32>
    tpu.vector_store %arg12[%c1_63, %c0_64, %c0_65], %328 {strides = array<i32>} : memref<2x4x256xf32, #tpu.memory_space<vmem>>, vector<1x4x256xf32>,
    return
  }
  func.func @transform_0(%arg0: i32) -> (i32, i32, i32) {
    %c0_i32 = arith.constant 0 : i32
    %c0_i32_0 = arith.constant 0 : i32
    %c0_i32_1 = arith.constant 0 : i32
    return %arg0, %c0_i32, %c0_i32_0 : i32, i32, i32
  }
  func.func @transform_1(%arg0: i32) -> (i32, i32) {
    %c0_i32 = arith.constant 0 : i32
    %c0_i32_0 = arith.constant 0 : i32
    %c0_i32_1 = arith.constant 0 : i32
    return %c0_i32, %c0_i32_0 : i32, i32
  }
  func.func @transform_2(%arg0: i32) -> (i32, i32) {
    %c0_i32 = arith.constant 0 : i32
    %c0_i32_0 = arith.constant 0 : i32
    %c0_i32_1 = arith.constant 0 : i32
    return %c0_i32, %c0_i32_0 : i32, i32
  }
  func.func @transform_3(%arg0: i32) -> (i32, i32) {
    %c0_i32 = arith.constant 0 : i32
    %c0_i32_0 = arith.constant 0 : i32
    %c0_i32_1 = arith.constant 0 : i32
    return %c0_i32, %c0_i32_0 : i32, i32
  }
  func.func @transform_4(%arg0: i32) -> (i32, i32) {
    %c0_i32 = arith.constant 0 : i32
    %c0_i32_0 = arith.constant 0 : i32
    %c0_i32_1 = arith.constant 0 : i32
    return %c0_i32, %c0_i32_0 : i32, i32
  }
  func.func @transform_5(%arg0: i32) -> (i32, i32) {
    %c0_i32 = arith.constant 0 : i32
    %c0_i32_0 = arith.constant 0 : i32
    %c0_i32_1 = arith.constant 0 : i32
    return %c0_i32, %c0_i32_0 : i32, i32
  }
  func.func @transform_6(%arg0: i32) -> (i32, i32) {
    %c0_i32 = arith.constant 0 : i32
    %c0_i32_0 = arith.constant 0 : i32
    %c0_i32_1 = arith.constant 0 : i32
    return %c0_i32, %c0_i32_0 : i32, i32
  }
  func.func @transform_7(%arg0: i32) -> (i32, i32) {
    %c0_i32 = arith.constant 0 : i32
    %c0_i32_0 = arith.constant 0 : i32
    %c0_i32_1 = arith.constant 0 : i32
    return %c0_i32, %c0_i32_0 : i32, i32
  }
  func.func @transform_8(%arg0: i32) -> (i32, i32) {
    %c0_i32 = arith.constant 0 : i32
    %c0_i32_0 = arith.constant 0 : i32
    %c0_i32_1 = arith.constant 0 : i32
    return %c0_i32, %c0_i32_0 : i32, i32
  }
  func.func @transform_9(%arg0: i32) -> (i32, i32) {
    %c0_i32 = arith.constant 0 : i32
    %c0_i32_0 = arith.constant 0 : i32
    %c0_i32_1 = arith.constant 0 : i32
    return %c0_i32, %c0_i32_0 : i32, i32
  }
  func.func @transform_10(%arg0: i32) -> (i32, i32) {
    %c0_i32 = arith.constant 0 : i32
    %c0_i32_0 = arith.constant 0 : i32
    %c0_i32_1 = arith.constant 0 : i32
    return %c0_i32, %c0_i32_0 : i32, i32
  }
  func.func @transform_11(%arg0: i32) -> (i32, i32, i32) {
    %c0_i32 = arith.constant 0 : i32
    %c0_i32_0 = arith.constant 0 : i32
    %c0_i32_1 = arith.constant 0 : i32
    return %arg0, %c0_i32, %c0_i32_0 : i32, i32, i32
  }
}

</mosaic_0001>

<llo_original>
// kernel: tpu_custom_call.1
$region0: #{tpu_custom_call.1}
  #allocation0 [shape = 'u32[]', space=smem, size = 0x4, offset = 0x4, fixed_abs, tag = 'smem constant byte address 0x4 - core index']
  #allocation1 [shape = 'u32[144,128]{1,0:T(1,128)}', space=vmem, size = 0x12000, scoped, tag = 'internal scratch']
  %s0 = inlined_call_operand.vmem [shape: f32[2,4,256], index: 0, kind: input, shape index: {}]
  %s1 = inlined_call_operand.hbm [shape: f32[3,290], index: 1, kind: input, shape index: {}]
  %s2 = inlined_call_operand.vmem [shape: f32[5,324], index: 2, kind: input, shape index: {}]
  %s3 = inlined_call_operand.vmem [shape: bf16[8,200], index: 3, kind: input, shape index: {}]
  %s4 = inlined_call_operand.vmem [shape: f32[8,1], index: 4, kind: input, shape index: {}]
  %s5 = inlined_call_operand.vmem [shape: bf16[16,72], index: 5, kind: input, shape index: {}]
  %s6 = inlined_call_operand.vmem [shape: f32[16,1], index: 6, kind: input, shape index: {}]
  %s7 = inlined_call_operand.vmem [shape: bf16[8,144], index: 7, kind: input, shape index: {}]
  %s8 = inlined_call_operand.vmem [shape: f32[8,1], index: 8, kind: input, shape index: {}]
  %s9 = inlined_call_operand.vmem [shape: bf16[4,200], index: 9, kind: input, shape index: {}]
  %s10 = inlined_call_operand.vmem [shape: f32[4,1], index: 10, kind: input, shape index: {}]
  %s11 = inlined_call_operand.hbm [shape: f32[2,4,256], index: 11, kind: output, shape index: {}]
  %s12 = sld [smem:[#allocation0]]
  $region58: #{tpu_custom_call.1} parent=0
    _
  %s14 = ssub.s32 1, %s12
  %s15 = scalar_select 0, %s14, %s12
  $region1: #{tpu_custom_call.1} parent=0
    #allocation2 [shape = 'u8[6144]{0}', space=vmem, size = 0x1800, scoped, tag = 'input window, operand 1, single buffered']
    #allocation3 [shape = 's32[1]{0}', space=sflag, size = 0x4, scoped, tag = 'scoped memory for tpu_custom_call.1']
    #allocation4 [shape = 's32[1]{0}', space=sflag, size = 0x4, scoped, tag = 'scoped memory for tpu_custom_call.1']
    #allocation5 [shape = 'u8[8192]{0}', space=vmem, size = 0x2000, scoped, tag = 'output window, operand 0, single buffered']
    %16 = vsyncpa [#allocation3], 0
    %17 = vsyncpa [#allocation4], 0
    // Predicated region
    $region2: #{tpu_custom_call.1} parent=1 // pred_check
      _
    $region3: #{tpu_custom_call.1} parent=1 // pred_check_branch
      %19 = sbr.rel (0) target = $region5
    $region4: #{tpu_custom_call.1} parent=1 // pred_region
      _
    $region5: #{tpu_custom_call.1} parent=1 // pred_fallthru
      _
    // Predicated region
    $region6: #{tpu_custom_call.1} parent=1 // pred_check
      _
    $region7: #{tpu_custom_call.1} parent=1 // pred_check_branch
      %21 = sbr.rel (0) target = $region9
    $region8: #{tpu_custom_call.1} parent=1 // pred_region
      %s23 = ssub.s32 192, 192
      %24 = vsyncadd [#allocation3], %s23
      %s26 = sshll.u32 [#allocation2], 4
      %s27 = int_to_ptr.vmem [resolvable:$true] %s26
      %29 = dma.hbm_to_vmem [thread:$0]  %s1, 192, %s27, [#allocation3]
    $region9: #{tpu_custom_call.1} parent=1 // pred_fallthru
      _
    // Predicated region
    $region10: #{tpu_custom_call.1} parent=1 // pred_check
      _
    $region11: #{tpu_custom_call.1} parent=1 // pred_check_branch
      %31 = sbr.rel (0) target = $region13
    $region12: #{tpu_custom_call.1} parent=1 // pred_region
      _
    $region13: #{tpu_custom_call.1} parent=1 // pred_fallthru
      _
    // Predicated region
    $region14: #{tpu_custom_call.1} parent=1 // pred_check
      _
    $region15: #{tpu_custom_call.1} parent=1 // pred_check_branch
      %33 = sbr.rel (0) target = $region17
    $region16: #{tpu_custom_call.1} parent=1 // pred_region
      _
    $region17: #{tpu_custom_call.1} parent=1 // pred_fallthru
      _
    // Predicated region
    $region18: #{tpu_custom_call.1} parent=1 // pred_check
      _
    $region19: #{tpu_custom_call.1} parent=1 // pred_check_branch
      %35 = sbr.rel (0) target = $region21
    $region20: #{tpu_custom_call.1} parent=1 // pred_region
      _
    $region21: #{tpu_custom_call.1} parent=1 // pred_fallthru
      _
    // Predicated region
    $region22: #{tpu_custom_call.1} parent=1 // pred_check
      _
    $region23: #{tpu_custom_call.1} parent=1 // pred_check_branch
      %37 = sbr.rel (0) target = $region25
    $region24: #{tpu_custom_call.1} parent=1 // pred_region
      _
    $region25: #{tpu_custom_call.1} parent=1 // pred_fallthru
      _
    // Predicated region
    $region26: #{tpu_custom_call.1} parent=1 // pred_check
      _
    $region27: #{tpu_custom_call.1} parent=1 // pred_check_branch
      %39 = sbr.rel (0) target = $region29
    $region28: #{tpu_custom_call.1} parent=1 // pred_region
      _
    $region29: #{tpu_custom_call.1} parent=1 // pred_fallthru
      _
    // Predicated region
    $region30: #{tpu_custom_call.1} parent=1 // pred_check
      _
    $region31: #{tpu_custom_call.1} parent=1 // pred_check_branch
      %41 = sbr.rel (0) target = $region33
    $region32: #{tpu_custom_call.1} parent=1 // pred_region
      _
    $region33: #{tpu_custom_call.1} parent=1 // pred_fallthru
      _
    // Predicated region
    $region34: #{tpu_custom_call.1} parent=1 // pred_check
      _
    $region35: #{tpu_custom_call.1} parent=1 // pred_check_branch
      %43 = sbr.rel (0) target = $region37
    $region36: #{tpu_custom_call.1} parent=1 // pred_region
      _
    $region37: #{tpu_custom_call.1} parent=1 // pred_fallthru
      _
    // Predicated region
    $region38: #{tpu_custom_call.1} parent=1 // pred_check
      _
    $region39: #{tpu_custom_call.1} parent=1 // pred_check_branch
      %45 = sbr.rel (0) target = $region41
    $region40: #{tpu_custom_call.1} parent=1 // pred_region
      _
    $region41: #{tpu_custom_call.1} parent=1 // pred_fallthru
      _
    // Predicated region
    $region42: #{tpu_custom_call.1} parent=1 // pred_check
      _
    $region43: #{tpu_custom_call.1} parent=1 // pred_check_branch
      %47 = sbr.rel (0) target = $region45
    $region44: #{tpu_custom_call.1} parent=1 // pred_region
      _
    $region45: #{tpu_custom_call.1} parent=1 // pred_fallthru
      _
    // Predicated region
    $region46: #{tpu_custom_call.1} parent=1 // pred_check
      _
    $region47: #{tpu_custom_call.1} parent=1 // pred_check_branch
      %49 = sbr.rel (0) target = $region49
    $region48: #{tpu_custom_call.1} parent=1 // pred_region
      %50 = dma.done [#allocation3], 192
    $region49: #{tpu_custom_call.1} parent=1 // pred_fallthru
      _
    %v52 = vld [vmem:[%s0] sm:$0xff]
    %s53 = scalar_lea.vmem %s0, 8
    %v54 = vld [vmem:[%s53] sm:$0xff]
    %v56 = vcombine.high %v52, %v52
    %v59 = vcombine.high %v54, %v54
    %vm61 = vcmask 1043456
    %v62 = vsel %vm61, %v52, 0.0
    %v63 = vsel %vm61, %v56, 0.0
    %v64 = vsel %vm61, %v54, 0.0
    %v65 = vsel %vm61, %v59, 0.0
    %v66 = vld [vmem:[%s2] ss:$8 sm:$0x7]
    %s67 = scalar_lea.vmem %s2, 1
    %v68 = vld [vmem:[%s67] ss:$8 sm:$0x7]
    %s69 = scalar_lea.vmem %s2, 2
    %v70 = vld [vmem:[%s69] ss:$8 sm:$0x7]
    %s71 = scalar_lea.vmem %s2, 3
    %v72 = vld [vmem:[%s71] ss:$8 sm:$0x7]
    %s73 = scalar_lea.vmem %s2, 4
    %v74 = vld [vmem:[%s73] ss:$8 sm:$0x7]
    %77 = vrot.lane.b32.xlu0 %v62, 34
    %v78 = vpop.permute.xlu0 %77
    %79 = vrot.lane.b32.xlu0 %v63, 34
    %v80 = vpop.permute.xlu0 %79
    %vm81 = vcmask 277504
    %v82 = vsel %vm81, %v78, %v80
    %v86 = vsel %vm81, 0.0, %v78
    %v87 = vsel %vm81, %v80, 0.0
    %v89 = vlaneseq
    %v90 = vshrl.u32 %v89, 7
    %v91 = vsub.s32 0, %v90
    %v92 = vrot.slane %v66, %v91
    %v93 = vlaneseq
    %v94 = vshrl.u32 %v93, 7
    %v95 = vsub.s32 1, %v94
    %v96 = vrot.slane %v66, %v95
    %v97 = vlaneseq
    %v98 = vshrl.u32 %v97, 7
    %v99 = vsub.s32 2, %v98
    %v100 = vrot.slane %v66, %v99
    %v104 = vmul.f32 %v86, %v92
    %v105 = vmul.f32 %v82, %v96
    %v106 = vmul.f32 %v87, %v100
    %v107 = vpack.c.bf16 %v104, %v104
    %v108 = vpack.c.bf16 %v105, %v105
    %v109 = vpack.c.bf16 %v106, %v106
    %v111 = vlaneseq
    %v112 = vshrl.u32 %v111, 7
    %v113 = vsub.s32 0, %v112
    %v114 = vrot.slane %v68, %v113
    %v115 = vlaneseq
    %v116 = vshrl.u32 %v115, 7
    %v117 = vsub.s32 1, %v116
    %v118 = vrot.slane %v68, %v117
    %v119 = vlaneseq
    %v120 = vshrl.u32 %v119, 7
    %v121 = vsub.s32 2, %v120
    %v122 = vrot.slane %v68, %v121
    %v126 = vmul.f32 %v86, %v114
    %v127 = vmul.f32 %v82, %v118
    %v128 = vmul.f32 %v87, %v122
    %v129 = vpack.c.bf16 %v126, %v126
    %v130 = vpack.c.bf16 %v127, %v127
    %v131 = vpack.c.bf16 %v128, %v128
    %v133 = vlaneseq
    %v134 = vshrl.u32 %v133, 7
    %v135 = vsub.s32 0, %v134
    %v136 = vrot.slane %v70, %v135
    %v137 = vlaneseq
    %v138 = vshrl.u32 %v137, 7
    %v139 = vsub.s32 1, %v138
    %v140 = vrot.slane %v70, %v139
    %v141 = vlaneseq
    %v142 = vshrl.u32 %v141, 7
    %v143 = vsub.s32 2, %v142
    %v144 = vrot.slane %v70, %v143
    %v148 = vmul.f32 %v86, %v136
    %v149 = vmul.f32 %v82, %v140
    %v150 = vmul.f32 %v87, %v144
    %v151 = vpack.c.bf16 %v148, %v148
    %v152 = vpack.c.bf16 %v149, %v149
    %v153 = vpack.c.bf16 %v150, %v150
    %v155 = vlaneseq
    %v156 = vshrl.u32 %v155, 7
    %v157 = vsub.s32 0, %v156
    %v158 = vrot.slane %v72, %v157
    %v159 = vlaneseq
    %v160 = vshrl.u32 %v159, 7
    %v161 = vsub.s32 1, %v160
    %v162 = vrot.slane %v72, %v161
    %v163 = vlaneseq
    %v164 = vshrl.u32 %v163, 7
    %v165 = vsub.s32 2, %v164
    %v166 = vrot.slane %v72, %v165
    %v170 = vmul.f32 %v86, %v158
    %v171 = vmul.f32 %v82, %v162
    %v172 = vmul.f32 %v87, %v166
    %v173 = vpack.c.bf16 %v170, %v170
    %v174 = vpack.c.bf16 %v171, %v171
    %v175 = vpack.c.bf16 %v172, %v172
    %v177 = vlaneseq
    %v178 = vshrl.u32 %v177, 7
    %v179 = vsub.s32 0, %v178
    %v180 = vrot.slane %v74, %v179
    %v181 = vlaneseq
    %v182 = vshrl.u32 %v181, 7
    %v183 = vsub.s32 1, %v182
    %v184 = vrot.slane %v74, %v183
    %v185 = vlaneseq
    %v186 = vshrl.u32 %v185, 7
    %v187 = vsub.s32 2, %v186
    %v188 = vrot.slane %v74, %v187
    %v192 = vmul.f32 %v86, %v180
    %v193 = vmul.f32 %v82, %v184
    %v194 = vmul.f32 %v87, %v188
    %v195 = vpack.c.bf16 %v192, %v192
    %v196 = vpack.c.bf16 %v193, %v193
    %v197 = vpack.c.bf16 %v194, %v194
    %v201 = vrot.slane %v129, 4
    %v202 = vrot.slane %v130, 4
    %v203 = vrot.slane %v131, 4
    %204 = vrot.lane.b32.xlu0 %v201, 127
    %v205 = vpop.permute.xlu0 %204
    %206 = vrot.lane.b32.xlu0 %v202, 127
    %v207 = vpop.permute.xlu0 %206
    %208 = vrot.lane.b32.xlu0 %v203, 127
    %v209 = vpop.permute.xlu0 %208
    %vm210 = vcmask 1039360
    %v211 = vsel %vm210, %v205, %v207
    %v212 = vsel %vm210, %v207, %v209
    %216 = vrot.lane.b32.xlu0 %v151, 126
    %v217 = vpop.permute.xlu0 %216
    %218 = vrot.lane.b32.xlu0 %v152, 126
    %v219 = vpop.permute.xlu0 %218
    %220 = vrot.lane.b32.xlu0 %v153, 126
    %v221 = vpop.permute.xlu0 %220
    %vm222 = vcmask 1031168
    %v223 = vsel %vm222, %v217, %v219
    %v224 = vsel %vm222, %v219, %v221
    %v228 = vrot.slane %v173, 4
    %v229 = vrot.slane %v174, 4
    %v230 = vrot.slane %v175, 4
    %231 = vrot.lane.b32.xlu0 %v228, 125
    %v232 = vpop.permute.xlu0 %231
    %233 = vrot.lane.b32.xlu0 %v229, 125
    %v234 = vpop.permute.xlu0 %233
    %235 = vrot.lane.b32.xlu0 %v230, 125
    %v236 = vpop.permute.xlu0 %235
    %vm237 = vcmask 1022976
    %v238 = vsel %vm237, %v232, %v234
    %v239 = vsel %vm237, %v234, %v236
    %243 = vrot.lane.b32.xlu0 %v195, 124
    %v244 = vpop.permute.xlu0 %243
    %245 = vrot.lane.b32.xlu0 %v196, 124
    %v246 = vpop.permute.xlu0 %245
    %247 = vrot.lane.b32.xlu0 %v197, 124
    %v248 = vpop.permute.xlu0 %247
    %vm249 = vcmask 1014784
    %v250 = vsel %vm249, %v244, %v246
    %v251 = vsel %vm249, %v246, %v248
    %v255 = vrot.slane %v107, 4
    %v256 = vrot.slane %v108, 4
    %v257 = vrot.slane %v109, 4
    %258 = vrot.lane.b32.xlu0 %v255, 112
    %v259 = vpop.permute.xlu0 %258
    %260 = vrot.lane.b32.xlu0 %v256, 112
    %v261 = vpop.permute.xlu0 %260
    %262 = vrot.lane.b32.xlu0 %v257, 112
    %v263 = vpop.permute.xlu0 %262
    %vm264 = vcmask 916480
    %v265 = vsel %vm264, %v259, %v261
    %v266 = vsel %vm264, %v261, %v263
    %267 = vrot.lane.b32.xlu0 %v129, 111
    %v268 = vpop.permute.xlu0 %267
    %269 = vrot.lane.b32.xlu0 %v130, 111
    %v270 = vpop.permute.xlu0 %269
    %271 = vrot.lane.b32.xlu0 %v131, 111
    %v272 = vpop.permute.xlu0 %271
    %vm273 = vcmask 908288
    %v274 = vsel %vm273, %v268, %v270
    %v275 = vsel %vm273, %v270, %v272
    %v276 = vrot.slane %v151, 4
    %v277 = vrot.slane %v152, 4
    %v278 = vrot.slane %v153, 4
    %279 = vrot.lane.b32.xlu0 %v276, 110
    %v280 = vpop.permute.xlu0 %279
    %281 = vrot.lane.b32.xlu0 %v277, 110
    %v282 = vpop.permute.xlu0 %281
    %283 = vrot.lane.b32.xlu0 %v278, 110
    %v284 = vpop.permute.xlu0 %283
    %vm285 = vcmask 900096
    %v286 = vsel %vm285, %v280, %v282
    %v287 = vsel %vm285, %v282, %v284
    %288 = vrot.lane.b32.xlu0 %v173, 109
    %v289 = vpop.permute.xlu0 %288
    %290 = vrot.lane.b32.xlu0 %v174, 109
    %v291 = vpop.permute.xlu0 %290
    %292 = vrot.lane.b32.xlu0 %v175, 109
    %v293 = vpop.permute.xlu0 %292
    %vm294 = vcmask 891904
    %v295 = vsel %vm294, %v289, %v291
    %v296 = vsel %vm294, %v291, %v293
    %v297 = vrot.slane %v195, 4
    %v298 = vrot.slane %v196, 4
    %v299 = vrot.slane %v197, 4
    %300 = vrot.lane.b32.xlu0 %v297, 108
    %v301 = vpop.permute.xlu0 %300
    %302 = vrot.lane.b32.xlu0 %v298, 108
    %v303 = vpop.permute.xlu0 %302
    %304 = vrot.lane.b32.xlu0 %v299, 108
    %v305 = vpop.permute.xlu0 %304
    %vm306 = vcmask 883712
    %v307 = vsel %vm306, %v301, %v303
    %v308 = vsel %vm306, %v303, %v305
    %309 = vrot.lane.b32.xlu0 %v107, 96
    %v310 = vpop.permute.xlu0 %309
    %311 = vrot.lane.b32.xlu0 %v108, 96
    %v312 = vpop.permute.xlu0 %311
    %313 = vrot.lane.b32.xlu0 %v109, 96
    %v314 = vpop.permute.xlu0 %313
    %vm315 = vcmask 785408
    %v316 = vsel %vm315, %v310, %v312
    %v317 = vsel %vm315, %v312, %v314
    %318 = vrot.lane.b32.xlu0 %v201, 95
    %v319 = vpop.permute.xlu0 %318
    %320 = vrot.lane.b32.xlu0 %v202, 95
    %v321 = vpop.permute.xlu0 %320
    %322 = vrot.lane.b32.xlu0 %v203, 95
    %v323 = vpop.permute.xlu0 %322
    %vm324 = vcmask 777216
    %v325 = vsel %vm324, %v319, %v321
    %v326 = vsel %vm324, %v321, %v323
    %327 = vrot.lane.b32.xlu0 %v151, 94
    %v328 = vpop.permute.xlu0 %327
    %329 = vrot.lane.b32.xlu0 %v152, 94
    %v330 = vpop.permute.xlu0 %329
    %331 = vrot.lane.b32.xlu0 %v153, 94
    %v332 = vpop.permute.xlu0 %331
    %vm333 = vcmask 769024
    %v334 = vsel %vm333, %v328, %v330
    %v335 = vsel %vm333, %v330, %v332
    %336 = vrot.lane.b32.xlu0 %v228, 93
    %v337 = vpop.permute.xlu0 %336
    %338 = vrot.lane.b32.xlu0 %v229, 93
    %v339 = vpop.permute.xlu0 %338
    %340 = vrot.lane.b32.xlu0 %v230, 93
    %v341 = vpop.permute.xlu0 %340
    %vm342 = vcmask 760832
    %v343 = vsel %vm342, %v337, %v339
    %v344 = vsel %vm342, %v339, %v341
    %345 = vrot.lane.b32.xlu0 %v195, 92
    %v346 = vpop.permute.xlu0 %345
    %347 = vrot.lane.b32.xlu0 %v196, 92
    %v348 = vpop.permute.xlu0 %347
    %349 = vrot.lane.b32.xlu0 %v197, 92
    %v350 = vpop.permute.xlu0 %349
    %vm351 = vcmask 752640
    %v352 = vsel %vm351, %v346, %v348
    %v353 = vsel %vm351, %v348, %v350
    %354 = vrot.lane.b32.xlu0 %v255, 80
    %v355 = vpop.permute.xlu0 %354
    %356 = vrot.lane.b32.xlu0 %v256, 80
    %v357 = vpop.permute.xlu0 %356
    %358 = vrot.lane.b32.xlu0 %v257, 80
    %v359 = vpop.permute.xlu0 %358
    %vm360 = vcmask 654336
    %v361 = vsel %vm360, %v355, %v357
    %v362 = vsel %vm360, %v357, %v359
    %v365 = vsel %vm61, %v107, %v211
    %v369 = vsel %vm61, %v108, %v212
    %v373 = vsel %vm61, %v223, %v238
    %v377 = vsel %vm61, %v224, %v239
    %v381 = vsel %vm61, %v250, %v265
    %v385 = vsel %vm61, %v251, %v266
    %v389 = vsel %vm61, %v274, %v286
    %v393 = vsel %vm61, %v275, %v287
    %v397 = vsel %vm61, %v295, %v307
    %v401 = vsel %vm61, %v296, %v308
    %v405 = vsel %vm61, %v316, %v325
    %v409 = vsel %vm61, %v317, %v326
    %v413 = vsel %vm61, %v334, %v343
    %v417 = vsel %vm61, %v335, %v344
    %v421 = vsel %vm61, %v352, %v361
    %v425 = vsel %vm61, %v353, %v362
    %427 = vrot.lane.b32.xlu0 %v276, 127
    %v428 = vpop.permute.xlu0 %427
    %429 = vrot.lane.b32.xlu0 %v277, 127
    %v430 = vpop.permute.xlu0 %429
    %431 = vrot.lane.b32.xlu0 %v278, 127
    %v432 = vpop.permute.xlu0 %431
    %v433 = vsel %vm210, %v428, %v430
    %v434 = vsel %vm210, %v430, %v432
    %435 = vrot.lane.b32.xlu0 %v173, 126
    %v436 = vpop.permute.xlu0 %435
    %437 = vrot.lane.b32.xlu0 %v174, 126
    %v438 = vpop.permute.xlu0 %437
    %439 = vrot.lane.b32.xlu0 %v175, 126
    %v440 = vpop.permute.xlu0 %439
    %v441 = vsel %vm222, %v436, %v438
    %v442 = vsel %vm222, %v438, %v440
    %443 = vrot.lane.b32.xlu0 %v297, 125
    %v444 = vpop.permute.xlu0 %443
    %445 = vrot.lane.b32.xlu0 %v298, 125
    %v446 = vpop.permute.xlu0 %445
    %447 = vrot.lane.b32.xlu0 %v299, 125
    %v448 = vpop.permute.xlu0 %447
    %v449 = vsel %vm237, %v444, %v446
    %v450 = vsel %vm237, %v446, %v448
    %451 = vrot.lane.b32.xlu0 %v107, 113
    %v452 = vpop.permute.xlu0 %451
    %453 = vrot.lane.b32.xlu0 %v108, 113
    %v454 = vpop.permute.xlu0 %453
    %455 = vrot.lane.b32.xlu0 %v109, 113
    %v456 = vpop.permute.xlu0 %455
    %vm457 = vcmask 924672
    %v458 = vsel %vm457, %v452, %v454
    %v459 = vsel %vm457, %v454, %v456
    %460 = vrot.lane.b32.xlu0 %v201, 112
    %v461 = vpop.permute.xlu0 %460
    %462 = vrot.lane.b32.xlu0 %v202, 112
    %v463 = vpop.permute.xlu0 %462
    %464 = vrot.lane.b32.xlu0 %v203, 112
    %v465 = vpop.permute.xlu0 %464
    %v466 = vsel %vm264, %v461, %v463
    %v467 = vsel %vm264, %v463, %v465
    %468 = vrot.lane.b32.xlu0 %v151, 111
    %v469 = vpop.permute.xlu0 %468
    %470 = vrot.lane.b32.xlu0 %v152, 111
    %v471 = vpop.permute.xlu0 %470
    %472 = vrot.lane.b32.xlu0 %v153, 111
    %v473 = vpop.permute.xlu0 %472
    %v474 = vsel %vm273, %v469, %v471
    %v475 = vsel %vm273, %v471, %v473
    %476 = vrot.lane.b32.xlu0 %v228, 110
    %v477 = vpop.permute.xlu0 %476
    %478 = vrot.lane.b32.xlu0 %v229, 110
    %v479 = vpop.permute.xlu0 %478
    %480 = vrot.lane.b32.xlu0 %v230, 110
    %v481 = vpop.permute.xlu0 %480
    %v482 = vsel %vm285, %v477, %v479
    %v483 = vsel %vm285, %v479, %v481
    %484 = vrot.lane.b32.xlu0 %v195, 109
    %v485 = vpop.permute.xlu0 %484
    %486 = vrot.lane.b32.xlu0 %v196, 109
    %v487 = vpop.permute.xlu0 %486
    %488 = vrot.lane.b32.xlu0 %v197, 109
    %v489 = vpop.permute.xlu0 %488
    %v490 = vsel %vm294, %v485, %v487
    %v491 = vsel %vm294, %v487, %v489
    %v494 = vsel %vm61, %v129, %v433
    %v497 = vsel %vm61, %v130, %v434
    %v500 = vsel %vm61, %v131, %v432
    %v503 = vsel %vm61, %v441, %v449
    %v506 = vsel %vm61, %v442, %v450
    %v509 = vsel %vm61, %v440, %v448
    %v512 = vsel %vm61, %v458, %v466
    %v515 = vsel %vm61, %v459, %v467
    %v518 = vsel %vm61, %v456, %v465
    %v521 = vsel %vm61, %v474, %v482
    %v524 = vsel %vm61, %v475, %v483
    %v527 = vsel %vm61, %v473, %v481
    %540 = vrot.lane.b32.xlu0 %v494, 79
    %v541 = vpop.permute.xlu0 %540
    %542 = vrot.lane.b32.xlu0 %v497, 79
    %v543 = vpop.permute.xlu0 %542
    %544 = vrot.lane.b32.xlu0 %v500, 79
    %v545 = vpop.permute.xlu0 %544
    %546 = vrot.lane.b32.xlu0 %v503, 79
    %v547 = vpop.permute.xlu0 %546
    %548 = vrot.lane.b32.xlu0 %v506, 79
    %v549 = vpop.permute.xlu0 %548
    %550 = vrot.lane.b32.xlu0 %v509, 79
    %v551 = vpop.permute.xlu0 %550
    %552 = vrot.lane.b32.xlu0 %v512, 79
    %v553 = vpop.permute.xlu0 %552
    %554 = vrot.lane.b32.xlu0 %v515, 79
    %v555 = vpop.permute.xlu0 %554
    %556 = vrot.lane.b32.xlu0 %v518, 79
    %v557 = vpop.permute.xlu0 %556
    %558 = vrot.lane.b32.xlu0 %v521, 79
    %v559 = vpop.permute.xlu0 %558
    %560 = vrot.lane.b32.xlu0 %v524, 79
    %v561 = vpop.permute.xlu0 %560
    %562 = vrot.lane.b32.xlu0 %v527, 79
    %v563 = vpop.permute.xlu0 %562
    %564 = vrot.lane.b32.xlu0 %v490, 79
    %v565 = vpop.permute.xlu0 %564
    %566 = vrot.lane.b32.xlu0 %v491, 79
    %v567 = vpop.permute.xlu0 %566
    %568 = vrot.lane.b32.xlu0 %v489, 79
    %v569 = vpop.permute.xlu0 %568
    %vm570 = vcmask 646144
    %v571 = vsel %vm570, %v541, %v543
    %v572 = vsel %vm570, %v543, %v545
    %v573 = vsel %vm570, %v547, %v549
    %v574 = vsel %vm570, %v549, %v551
    %v575 = vsel %vm570, %v553, %v555
    %v576 = vsel %vm570, %v555, %v557
    %v577 = vsel %vm570, %v559, %v561
    %v578 = vsel %vm570, %v561, %v563
    %v579 = vsel %vm570, %v565, %v567
    %v580 = vsel %vm570, %v567, %v569
    %591 = vrot.lane.b32.xlu0 %v64, 34
    %v592 = vpop.permute.xlu0 %591
    %593 = vrot.lane.b32.xlu0 %v65, 34
    %v594 = vpop.permute.xlu0 %593
    %v595 = vsel %vm81, %v592, %v594
    %v599 = vsel %vm81, 0.0, %v592
    %v600 = vsel %vm81, %v594, 0.0
    %v601 = vmul.f32 %v599, %v92
    %v602 = vmul.f32 %v595, %v96
    %v603 = vmul.f32 %v600, %v100
    %v604 = vpack.c.bf16 %v601, %v601
    %v605 = vpack.c.bf16 %v602, %v602
    %v606 = vpack.c.bf16 %v603, %v603
    %v607 = vmul.f32 %v599, %v114
    %v608 = vmul.f32 %v595, %v118
    %v609 = vmul.f32 %v600, %v122
    %v610 = vpack.c.bf16 %v607, %v607
    %v611 = vpack.c.bf16 %v608, %v608
    %v612 = vpack.c.bf16 %v609, %v609
    %v613 = vmul.f32 %v599, %v136
    %v614 = vmul.f32 %v595, %v140
    %v615 = vmul.f32 %v600, %v144
    %v616 = vpack.c.bf16 %v613, %v613
    %v617 = vpack.c.bf16 %v614, %v614
    %v618 = vpack.c.bf16 %v615, %v615
    %v619 = vmul.f32 %v599, %v158
    %v620 = vmul.f32 %v595, %v162
    %v621 = vmul.f32 %v600, %v166
    %v622 = vpack.c.bf16 %v619, %v619
    %v623 = vpack.c.bf16 %v620, %v620
    %v624 = vpack.c.bf16 %v621, %v621
    %v625 = vmul.f32 %v599, %v180
    %v626 = vmul.f32 %v595, %v184
    %v627 = vmul.f32 %v600, %v188
    %v628 = vpack.c.bf16 %v625, %v625
    %v629 = vpack.c.bf16 %v626, %v626
    %v630 = vpack.c.bf16 %v627, %v627
    %v634 = vrot.slane %v610, 4
    %v635 = vrot.slane %v611, 4
    %v636 = vrot.slane %v612, 4
    %637 = vrot.lane.b32.xlu0 %v634, 127
    %v638 = vpop.permute.xlu0 %637
    %639 = vrot.lane.b32.xlu0 %v635, 127
    %v640 = vpop.permute.xlu0 %639
    %641 = vrot.lane.b32.xlu0 %v636, 127
    %v642 = vpop.permute.xlu0 %641
    %v643 = vsel %vm210, %v638, %v640
    %v644 = vsel %vm210, %v640, %v642
    %648 = vrot.lane.b32.xlu0 %v616, 126
    %v649 = vpop.permute.xlu0 %648
    %650 = vrot.lane.b32.xlu0 %v617, 126
    %v651 = vpop.permute.xlu0 %650
    %652 = vrot.lane.b32.xlu0 %v618, 126
    %v653 = vpop.permute.xlu0 %652
    %v654 = vsel %vm222, %v649, %v651
    %v655 = vsel %vm222, %v651, %v653
    %v659 = vrot.slane %v622, 4
    %v660 = vrot.slane %v623, 4
    %v661 = vrot.slane %v624, 4
    %662 = vrot.lane.b32.xlu0 %v659, 125
    %v663 = vpop.permute.xlu0 %662
    %664 = vrot.lane.b32.xlu0 %v660, 125
    %v665 = vpop.permute.xlu0 %664
    %666 = vrot.lane.b32.xlu0 %v661, 125
    %v667 = vpop.permute.xlu0 %666
    %v668 = vsel %vm237, %v663, %v665
    %v669 = vsel %vm237, %v665, %v667
    %673 = vrot.lane.b32.xlu0 %v628, 124
    %v674 = vpop.permute.xlu0 %673
    %675 = vrot.lane.b32.xlu0 %v629, 124
    %v676 = vpop.permute.xlu0 %675
    %677 = vrot.lane.b32.xlu0 %v630, 124
    %v678 = vpop.permute.xlu0 %677
    %v679 = vsel %vm249, %v674, %v676
    %v680 = vsel %vm249, %v676, %v678
    %v684 = vrot.slane %v604, 4
    %v685 = vrot.slane %v605, 4
    %v686 = vrot.slane %v606, 4
    %687 = vrot.lane.b32.xlu0 %v684, 112
    %v688 = vpop.permute.xlu0 %687
    %689 = vrot.lane.b32.xlu0 %v685, 112
    %v690 = vpop.permute.xlu0 %689
    %691 = vrot.lane.b32.xlu0 %v686, 112
    %v692 = vpop.permute.xlu0 %691
    %v693 = vsel %vm264, %v688, %v690
    %v694 = vsel %vm264, %v690, %v692
    %695 = vrot.lane.b32.xlu0 %v610, 111
    %v696 = vpop.permute.xlu0 %695
    %697 = vrot.lane.b32.xlu0 %v611, 111
    %v698 = vpop.permute.xlu0 %697
    %699 = vrot.lane.b32.xlu0 %v612, 111
    %v700 = vpop.permute.xlu0 %699
    %v701 = vsel %vm273, %v696, %v698
    %v702 = vsel %vm273, %v698, %v700
    %v703 = vrot.slane %v616, 4
    %v704 = vrot.slane %v617, 4
    %v705 = vrot.slane %v618, 4
    %706 = vrot.lane.b32.xlu0 %v703, 110
    %v707 = vpop.permute.xlu0 %706
    %708 = vrot.lane.b32.xlu0 %v704, 110
    %v709 = vpop.permute.xlu0 %708
    %710 = vrot.lane.b32.xlu0 %v705, 110
    %v711 = vpop.permute.xlu0 %710
    %v712 = vsel %vm285, %v707, %v709
    %v713 = vsel %vm285, %v709, %v711
    %714 = vrot.lane.b32.xlu0 %v622, 109
    %v715 = vpop.permute.xlu0 %714
    %716 = vrot.lane.b32.xlu0 %v623, 109
    %v717 = vpop.permute.xlu0 %716
    %718 = vrot.lane.b32.xlu0 %v624, 109
    %v719 = vpop.permute.xlu0 %718
    %v720 = vsel %vm294, %v715, %v717
    %v721 = vsel %vm294, %v717, %v719
    %v722 = vrot.slane %v628, 4
    %v723 = vrot.slane %v629, 4
    %v724 = vrot.slane %v630, 4
    %725 = vrot.lane.b32.xlu0 %v722, 108
    %v726 = vpop.permute.xlu0 %725
    %727 = vrot.lane.b32.xlu0 %v723, 108
    %v728 = vpop.permute.xlu0 %727
    %729 = vrot.lane.b32.xlu0 %v724, 108
    %v730 = vpop.permute.xlu0 %729
    %v731 = vsel %vm306, %v726, %v728
    %v732 = vsel %vm306, %v728, %v730
    %733 = vrot.lane.b32.xlu0 %v604, 96
    %v734 = vpop.permute.xlu0 %733
    %735 = vrot.lane.b32.xlu0 %v605, 96
    %v736 = vpop.permute.xlu0 %735
    %737 = vrot.lane.b32.xlu0 %v606, 96
    %v738 = vpop.permute.xlu0 %737
    %v739 = vsel %vm315, %v734, %v736
    %v740 = vsel %vm315, %v736, %v738
    %741 = vrot.lane.b32.xlu0 %v634, 95
    %v742 = vpop.permute.xlu0 %741
    %743 = vrot.lane.b32.xlu0 %v635, 95
    %v744 = vpop.permute.xlu0 %743
    %745 = vrot.lane.b32.xlu0 %v636, 95
    %v746 = vpop.permute.xlu0 %745
    %v747 = vsel %vm324, %v742, %v744
    %v748 = vsel %vm324, %v744, %v746
    %749 = vrot.lane.b32.xlu0 %v616, 94
    %v750 = vpop.permute.xlu0 %749
    %751 = vrot.lane.b32.xlu0 %v617, 94
    %v752 = vpop.permute.xlu0 %751
    %753 = vrot.lane.b32.xlu0 %v618, 94
    %v754 = vpop.permute.xlu0 %753
    %v755 = vsel %vm333, %v750, %v752
    %v756 = vsel %vm333, %v752, %v754
    %757 = vrot.lane.b32.xlu0 %v659, 93
    %v758 = vpop.permute.xlu0 %757
    %759 = vrot.lane.b32.xlu0 %v660, 93
    %v760 = vpop.permute.xlu0 %759
    %761 = vrot.lane.b32.xlu0 %v661, 93
    %v762 = vpop.permute.xlu0 %761
    %v763 = vsel %vm342, %v758, %v760
    %v764 = vsel %vm342, %v760, %v762
    %765 = vrot.lane.b32.xlu0 %v628, 92
    %v766 = vpop.permute.xlu0 %765
    %767 = vrot.lane.b32.xlu0 %v629, 92
    %v768 = vpop.permute.xlu0 %767
    %769 = vrot.lane.b32.xlu0 %v630, 92
    %v770 = vpop.permute.xlu0 %769
    %v771 = vsel %vm351, %v766, %v768
    %v772 = vsel %vm351, %v768, %v770
    %773 = vrot.lane.b32.xlu0 %v684, 80
    %v774 = vpop.permute.xlu0 %773
    %775 = vrot.lane.b32.xlu0 %v685, 80
    %v776 = vpop.permute.xlu0 %775
    %777 = vrot.lane.b32.xlu0 %v686, 80
    %v778 = vpop.permute.xlu0 %777
    %v779 = vsel %vm360, %v774, %v776
    %v780 = vsel %vm360, %v776, %v778
    %v783 = vsel %vm61, %v604, %v643
    %v787 = vsel %vm61, %v605, %v644
    %v791 = vsel %vm61, %v654, %v668
    %v795 = vsel %vm61, %v655, %v669
    %v799 = vsel %vm61, %v679, %v693
    %v803 = vsel %vm61, %v680, %v694
    %v807 = vsel %vm61, %v701, %v712
    %v811 = vsel %vm61, %v702, %v713
    %v815 = vsel %vm61, %v720, %v731
    %v819 = vsel %vm61, %v721, %v732
    %v823 = vsel %vm61, %v739, %v747
    %v827 = vsel %vm61, %v740, %v748
    %v831 = vsel %vm61, %v755, %v763
    %v835 = vsel %vm61, %v756, %v764
    %v839 = vsel %vm61, %v771, %v779
    %v843 = vsel %vm61, %v772, %v780
    %845 = vrot.lane.b32.xlu0 %v703, 127
    %v846 = vpop.permute.xlu0 %845
    %847 = vrot.lane.b32.xlu0 %v704, 127
    %v848 = vpop.permute.xlu0 %847
    %849 = vrot.lane.b32.xlu0 %v705, 127
    %v850 = vpop.permute.xlu0 %849
    %v851 = vsel %vm210, %v846, %v848
    %v852 = vsel %vm210, %v848, %v850
    %853 = vrot.lane.b32.xlu0 %v622, 126
    %v854 = vpop.permute.xlu0 %853
    %855 = vrot.lane.b32.xlu0 %v623, 126
    %v856 = vpop.permute.xlu0 %855
    %857 = vrot.lane.b32.xlu0 %v624, 126
    %v858 = vpop.permute.xlu0 %857
    %v859 = vsel %vm222, %v854, %v856
    %v860 = vsel %vm222, %v856, %v858
    %861 = vrot.lane.b32.xlu0 %v722, 125
    %v862 = vpop.permute.xlu0 %861
    %863 = vrot.lane.b32.xlu0 %v723, 125
    %v864 = vpop.permute.xlu0 %863
    %865 = vrot.lane.b32.xlu0 %v724, 125
    %v866 = vpop.permute.xlu0 %865
    %v867 = vsel %vm237, %v862, %v864
    %v868 = vsel %vm237, %v864, %v866
    %869 = vrot.lane.b32.xlu0 %v604, 113
    %v870 = vpop.permute.xlu0 %869
    %871 = vrot.lane.b32.xlu0 %v605, 113
    %v872 = vpop.permute.xlu0 %871
    %873 = vrot.lane.b32.xlu0 %v606, 113
    %v874 = vpop.permute.xlu0 %873
    %v875 = vsel %vm457, %v870, %v872
    %v876 = vsel %vm457, %v872, %v874
    %877 = vrot.lane.b32.xlu0 %v634, 112
    %v878 = vpop.permute.xlu0 %877
    %879 = vrot.lane.b32.xlu0 %v635, 112
    %v880 = vpop.permute.xlu0 %879
    %881 = vrot.lane.b32.xlu0 %v636, 112
    %v882 = vpop.permute.xlu0 %881
    %v883 = vsel %vm264, %v878, %v880
    %v884 = vsel %vm264, %v880, %v882
    %885 = vrot.lane.b32.xlu0 %v616, 111
    %v886 = vpop.permute.xlu0 %885
    %887 = vrot.lane.b32.xlu0 %v617, 111
    %v888 = vpop.permute.xlu0 %887
    %889 = vrot.lane.b32.xlu0 %v618, 111
    %v890 = vpop.permute.xlu0 %889
    %v891 = vsel %vm273, %v886, %v888
    %v892 = vsel %vm273, %v888, %v890
    %893 = vrot.lane.b32.xlu0 %v659, 110
    %v894 = vpop.permute.xlu0 %893
    %895 = vrot.lane.b32.xlu0 %v660, 110
    %v896 = vpop.permute.xlu0 %895
    %897 = vrot.lane.b32.xlu0 %v661, 110
    %v898 = vpop.permute.xlu0 %897
    %v899 = vsel %vm285, %v894, %v896
    %v900 = vsel %vm285, %v896, %v898
    %901 = vrot.lane.b32.xlu0 %v628, 109
    %v902 = vpop.permute.xlu0 %901
    %903 = vrot.lane.b32.xlu0 %v629, 109
    %v904 = vpop.permute.xlu0 %903
    %905 = vrot.lane.b32.xlu0 %v630, 109
    %v906 = vpop.permute.xlu0 %905
    %v907 = vsel %vm294, %v902, %v904
    %v908 = vsel %vm294, %v904, %v906
    %v911 = vsel %vm61, %v610, %v851
    %v914 = vsel %vm61, %v611, %v852
    %v917 = vsel %vm61, %v612, %v850
    %v920 = vsel %vm61, %v859, %v867
    %v923 = vsel %vm61, %v860, %v868
    %v926 = vsel %vm61, %v858, %v866
    %v929 = vsel %vm61, %v875, %v883
    %v932 = vsel %vm61, %v876, %v884
    %v935 = vsel %vm61, %v874, %v882
    %v938 = vsel %vm61, %v891, %v899
    %v941 = vsel %vm61, %v892, %v900
    %v944 = vsel %vm61, %v890, %v898
    %957 = vrot.lane.b32.xlu0 %v911, 79
    %v958 = vpop.permute.xlu0 %957
    %959 = vrot.lane.b32.xlu0 %v914, 79
    %v960 = vpop.permute.xlu0 %959
    %961 = vrot.lane.b32.xlu0 %v917, 79
    %v962 = vpop.permute.xlu0 %961
    %963 = vrot.lane.b32.xlu0 %v920, 79
    %v964 = vpop.permute.xlu0 %963
    %965 = vrot.lane.b32.xlu0 %v923, 79
    %v966 = vpop.permute.xlu0 %965
    %967 = vrot.lane.b32.xlu0 %v926, 79
    %v968 = vpop.permute.xlu0 %967
    %969 = vrot.lane.b32.xlu0 %v929, 79
    %v970 = vpop.permute.xlu0 %969
    %971 = vrot.lane.b32.xlu0 %v932, 79
    %v972 = vpop.permute.xlu0 %971
    %973 = vrot.lane.b32.xlu0 %v935, 79
    %v974 = vpop.permute.xlu0 %973
    %975 = vrot.lane.b32.xlu0 %v938, 79
    %v976 = vpop.permute.xlu0 %975
    %977 = vrot.lane.b32.xlu0 %v941, 79
    %v978 = vpop.permute.xlu0 %977
    %979 = vrot.lane.b32.xlu0 %v944, 79
    %v980 = vpop.permute.xlu0 %979
    %981 = vrot.lane.b32.xlu0 %v907, 79
    %v982 = vpop.permute.xlu0 %981
    %983 = vrot.lane.b32.xlu0 %v908, 79
    %v984 = vpop.permute.xlu0 %983
    %985 = vrot.lane.b32.xlu0 %v906, 79
    %v986 = vpop.permute.xlu0 %985
    %v987 = vsel %vm570, %v958, %v960
    %v988 = vsel %vm570, %v960, %v962
    %v989 = vsel %vm570, %v964, %v966
    %v990 = vsel %vm570, %v966, %v968
    %v991 = vsel %vm570, %v970, %v972
    %v992 = vsel %vm570, %v972, %v974
    %v993 = vsel %vm570, %v976, %v978
    %v994 = vsel %vm570, %v978, %v980
    %v995 = vsel %vm570, %v982, %v984
    %v996 = vsel %vm570, %v984, %v986
    %v1005 = vld [vmem:[%s3] sm:$0xff]
    %v1006 = vld [vmem:[%s4] sm:$0xff]
    %1008 = vset.pattern.permute.xlu0 0
    %1009 = vperm.xlu0 %1008, %v1006
    %v1010 = vpop.permute.xlu0 %1009
    %v1013 = vunpack.c.l.b16 %v1005
    %v1014 = vunpack.c.h.b16 %v1005
    %v1015 = vpack.c.b16 %v1013, %v1013
    %v1016 = vpack.c.b16 %v1014, %v1014
    %vm1018 = vcmask 588800
    %v1020 = vsel %vm1018, %v1016, 0
    %v1023 = vsel %vm61, %v579, 0
    %v1026 = vsel %vm61, %v580, 0
    %v1029 = vsel %vm61, %v995, 0
    %v1032 = vsel %vm61, %v996, 0
    %1034 = vmatprep.subr.bf16.mxu0 %v369
    %1035 = vmatpush1.bf16.msra.mxu0 %v365
    %1036 = vmatprep.subr.bf16.mxu0 %v377
    %1037 = vmatpush1.bf16.msra.mxu0 %v373
    %1038 = vmatprep.subr.bf16.mxu0 %v385
    %1039 = vmatpush1.bf16.msra.mxu0 %v381
    %1040 = vmatprep.subr.bf16.mxu0 %v393
    %1041 = vmatpush1.bf16.msra.mxu0 %v389
    %1042 = vmatprep.subr.bf16.mxu0 %v401
    %1043 = vmatpush1.bf16.msra.mxu0 %v397
    %1044 = vmatprep.subr.bf16.mxu0 %v409
    %1045 = vmatpush1.bf16.msra.mxu0 %v405
    %1046 = vmatprep.subr.bf16.mxu0 %v417
    %1047 = vmatpush1.bf16.msra.mxu0 %v413
    %1048 = vmatprep.subr.bf16.mxu0 %v425
    %1049 = vmatpush1.bf16.msra.mxu0 %v421
    %1050 = vmatprep.subr.bf16.mxu0 %v572
    %1051 = vmatpush1.bf16.msra.mxu0 %v571
    %1052 = vmatprep.subr.bf16.mxu0 %v574
    %1053 = vmatpush1.bf16.msra.mxu0 %v573
    %1054 = vmatprep.subr.bf16.mxu0 %v576
    %1055 = vmatpush1.bf16.msra.mxu0 %v575
    %1056 = vmatprep.subr.bf16.mxu0 %v578
    %1057 = vmatpush1.bf16.msra.mxu0 %v577
    %1058 = vmatprep.subr.bf16.mxu0 %v1026
    %1059 = vmatpush1.bf16.msra.mxu0 %v1023
    %1060 = vmatprep.subr.bf16.mxu0 0
    %1061 = vmatpush1.bf16.msra.mxu0 0
    %1062 = vmatprep.subr.bf16.mxu0 0
    %1063 = vmatpush1.bf16.msra.mxu0 0
    %1064 = vmatprep.subr.bf16.mxu0 0
    %1065 = vmatpush1.bf16.msra.mxu0 0
    %1066 = vmatprep.mubr.bf16.mxu0 %v1020
    %1067 = vmatmul.mubr.bf16.gmra.mrb[0].mxu0 %v1015
    %v1068 = vpop.f32.mrb[0].mxu0
    %v1069 = vadd.f32 %v1010, %v1068
    %v1070 = vpop.f32.mrb[0].mxu0
    %v1071 = vadd.f32 %v1010, %v1070
    %v1072 = vpop.f32.mrb[0].mxu0
    %v1073 = vpop.f32.mrb[0].mxu0
    %1074 = vdwg.mxu0
    %1075 = vmatprep.subr.bf16.mxu0 %v787
    %1076 = vmatpush1.bf16.msra.mxu0 %v783
    %1077 = vmatprep.subr.bf16.mxu0 %v795
    %1078 = vmatpush1.bf16.msra.mxu0 %v791
    %1079 = vmatprep.subr.bf16.mxu0 %v803
    %1080 = vmatpush1.bf16.msra.mxu0 %v799
    %1081 = vmatprep.subr.bf16.mxu0 %v811
    %1082 = vmatpush1.bf16.msra.mxu0 %v807
    %1083 = vmatprep.subr.bf16.mxu0 %v819
    %1084 = vmatpush1.bf16.msra.mxu0 %v815
    %1085 = vmatprep.subr.bf16.mxu0 %v827
    %1086 = vmatpush1.bf16.msra.mxu0 %v823
    %1087 = vmatprep.subr.bf16.mxu0 %v835
    %1088 = vmatpush1.bf16.msra.mxu0 %v831
    %1089 = vmatprep.subr.bf16.mxu0 %v843
    %1090 = vmatpush1.bf16.msra.mxu0 %v839
    %1091 = vmatprep.subr.bf16.mxu0 %v988
    %1092 = vmatpush1.bf16.msra.mxu0 %v987
    %1093 = vmatprep.subr.bf16.mxu0 %v990
    %1094 = vmatpush1.bf16.msra.mxu0 %v989
    %1095 = vmatprep.subr.bf16.mxu0 %v992
    %1096 = vmatpush1.bf16.msra.mxu0 %v991
    %1097 = vmatprep.subr.bf16.mxu0 %v994
    %1098 = vmatpush1.bf16.msra.mxu0 %v993
    %1099 = vmatprep.subr.bf16.mxu0 %v1032
    %1100 = vmatpush1.bf16.msra.mxu0 %v1029
    %1101 = vmatprep.subr.bf16.mxu0 0
    %1102 = vmatpush1.bf16.msra.mxu0 0
    %1103 = vmatprep.subr.bf16.mxu0 0
    %1104 = vmatpush1.bf16.msra.mxu0 0
    %1105 = vmatprep.subr.bf16.mxu0 0
    %1106 = vmatpush1.bf16.msra.mxu0 0
    %1107 = vmatprep.mubr.bf16.mxu0 %v1020
    %1108 = vmatmul.mubr.bf16.gmra.mrb[0].mxu0 %v1015
    %v1109 = vpop.f32.mrb[0].mxu0
    %v1110 = vadd.f32 %v1010, %v1109
    %v1111 = vpop.f32.mrb[0].mxu0
    %v1112 = vadd.f32 %v1010, %v1111
    %v1113 = vpop.f32.mrb[0].mxu0
    %v1114 = vpop.f32.mrb[0].mxu0
    %1115 = vdwg.mxu0
    %v1116 = vmax.f32 %v1069, 0.0
    %v1117 = vmax.f32 %v1071, 0.0
    %v1118 = vmax.f32 %v1110, 0.0
    %v1119 = vmax.f32 %v1112, 0.0
    %v1120 = vld [vmem:[#allocation2] ss:$4 sm:$0x7]
    %s1121 = scalar_lea.vmem [#allocation2], 1
    %v1122 = vld [vmem:[%s1121] ss:$4 sm:$0x7]
    %s1123 = scalar_lea.vmem [#allocation2], 2
    %v1124 = vld [vmem:[%s1123] ss:$4 sm:$0x7]
    %1127 = vrot.lane.b32.xlu0 %v1116, 17
    %v1128 = vpop.permute.xlu0 %1127
    %1129 = vrot.lane.b32.xlu0 %v1117, 17
    %v1130 = vpop.permute.xlu0 %1129
    %vm1131 = vcmask 138240
    %v1132 = vsel %vm1131, %v1128, %v1130
    %v1136 = vsel %vm1131, 0.0, %v1128
    %v1137 = vsel %vm1131, %v1130, 0.0
    %v1139 = vlaneseq
    %v1140 = vshrl.u32 %v1139, 7
    %v1141 = vsub.s32 0, %v1140
    %v1142 = vrot.slane %v1120, %v1141
    %v1143 = vlaneseq
    %v1144 = vshrl.u32 %v1143, 7
    %v1145 = vsub.s32 1, %v1144
    %v1146 = vrot.slane %v1120, %v1145
    %v1147 = vlaneseq
    %v1148 = vshrl.u32 %v1147, 7
    %v1149 = vsub.s32 2, %v1148
    %v1150 = vrot.slane %v1120, %v1149
    %v1154 = vmul.f32 %v1136, %v1142
    %v1155 = vmul.f32 %v1132, %v1146
    %v1156 = vmul.f32 %v1137, %v1150
    %v1157 = vpack.c.bf16 %v1154, %v1154
    %v1158 = vpack.c.bf16 %v1155, %v1155
    %v1159 = vpack.c.bf16 %v1156, %v1156
    %v1161 = vlaneseq
    %v1162 = vshrl.u32 %v1161, 7
    %v1163 = vsub.s32 0, %v1162
    %v1164 = vrot.slane %v1122, %v1163
    %v1165 = vlaneseq
    %v1166 = vshrl.u32 %v1165, 7
    %v1167 = vsub.s32 1, %v1166
    %v1168 = vrot.slane %v1122, %v1167
    %v1169 = vlaneseq
    %v1170 = vshrl.u32 %v1169, 7
    %v1171 = vsub.s32 2, %v1170
    %v1172 = vrot.slane %v1122, %v1171
    %v1176 = vmul.f32 %v1136, %v1164
    %v1177 = vmul.f32 %v1132, %v1168
    %v1178 = vmul.f32 %v1137, %v1172
    %v1179 = vpack.c.bf16 %v1176, %v1176
    %v1180 = vpack.c.bf16 %v1177, %v1177
    %v1181 = vpack.c.bf16 %v1178, %v1178
    %v1183 = vlaneseq
    %v1184 = vshrl.u32 %v1183, 7
    %v1185 = vsub.s32 0, %v1184
    %v1186 = vrot.slane %v1124, %v1185
    %v1187 = vlaneseq
    %v1188 = vshrl.u32 %v1187, 7
    %v1189 = vsub.s32 1, %v1188
    %v1190 = vrot.slane %v1124, %v1189
    %v1191 = vlaneseq
    %v1192 = vshrl.u32 %v1191, 7
    %v1193 = vsub.s32 2, %v1192
    %v1194 = vrot.slane %v1124, %v1193
    %v1198 = vmul.f32 %v1136, %v1186
    %v1199 = vmul.f32 %v1132, %v1190
    %v1200 = vmul.f32 %v1137, %v1194
    %v1201 = vpack.c.bf16 %v1198, %v1198
    %v1202 = vpack.c.bf16 %v1199, %v1199
    %v1203 = vpack.c.bf16 %v1200, %v1200
    %v1207 = vrot.slane %v1179, 4
    %v1208 = vrot.slane %v1180, 4
    %v1209 = vrot.slane %v1181, 4
    %1210 = vrot.lane.b32.xlu0 %v1207, 127
    %v1211 = vpop.permute.xlu0 %1210
    %1212 = vrot.lane.b32.xlu0 %v1208, 127
    %v1213 = vpop.permute.xlu0 %1212
    %1214 = vrot.lane.b32.xlu0 %v1209, 127
    %v1215 = vpop.permute.xlu0 %1214
    %v1216 = vsel %vm210, %v1211, %v1213
    %v1217 = vsel %vm210, %v1213, %v1215
    %1221 = vrot.lane.b32.xlu0 %v1201, 126
    %v1222 = vpop.permute.xlu0 %1221
    %1223 = vrot.lane.b32.xlu0 %v1202, 126
    %v1224 = vpop.permute.xlu0 %1223
    %1225 = vrot.lane.b32.xlu0 %v1203, 126
    %v1226 = vpop.permute.xlu0 %1225
    %v1227 = vsel %vm222, %v1222, %v1224
    %v1228 = vsel %vm222, %v1224, %v1226
    %v1232 = vrot.slane %v1157, 4
    %v1233 = vrot.slane %v1158, 4
    %v1234 = vrot.slane %v1159, 4
    %1235 = vrot.lane.b32.xlu0 %v1232, 112
    %v1236 = vpop.permute.xlu0 %1235
    %1237 = vrot.lane.b32.xlu0 %v1233, 112
    %v1238 = vpop.permute.xlu0 %1237
    %1239 = vrot.lane.b32.xlu0 %v1234, 112
    %v1240 = vpop.permute.xlu0 %1239
    %v1241 = vsel %vm264, %v1236, %v1238
    %v1242 = vsel %vm264, %v1238, %v1240
    %1243 = vrot.lane.b32.xlu0 %v1179, 111
    %v1244 = vpop.permute.xlu0 %1243
    %1245 = vrot.lane.b32.xlu0 %v1180, 111
    %v1246 = vpop.permute.xlu0 %1245
    %1247 = vrot.lane.b32.xlu0 %v1181, 111
    %v1248 = vpop.permute.xlu0 %1247
    %v1249 = vsel %vm273, %v1244, %v1246
    %v1250 = vsel %vm273, %v1246, %v1248
    %v1251 = vrot.slane %v1201, 4
    %v1252 = vrot.slane %v1202, 4
    %v1253 = vrot.slane %v1203, 4
    %1254 = vrot.lane.b32.xlu0 %v1251, 110
    %v1255 = vpop.permute.xlu0 %1254
    %1256 = vrot.lane.b32.xlu0 %v1252, 110
    %v1257 = vpop.permute.xlu0 %1256
    %1258 = vrot.lane.b32.xlu0 %v1253, 110
    %v1259 = vpop.permute.xlu0 %1258
    %v1260 = vsel %vm285, %v1255, %v1257
    %v1261 = vsel %vm285, %v1257, %v1259
    %1262 = vrot.lane.b32.xlu0 %v1157, 96
    %v1263 = vpop.permute.xlu0 %1262
    %1264 = vrot.lane.b32.xlu0 %v1158, 96
    %v1265 = vpop.permute.xlu0 %1264
    %1266 = vrot.lane.b32.xlu0 %v1159, 96
    %v1267 = vpop.permute.xlu0 %1266
    %v1268 = vsel %vm315, %v1263, %v1265
    %v1269 = vsel %vm315, %v1265, %v1267
    %1270 = vrot.lane.b32.xlu0 %v1207, 95
    %v1271 = vpop.permute.xlu0 %1270
    %1272 = vrot.lane.b32.xlu0 %v1208, 95
    %v1273 = vpop.permute.xlu0 %1272
    %1274 = vrot.lane.b32.xlu0 %v1209, 95
    %v1275 = vpop.permute.xlu0 %1274
    %v1276 = vsel %vm324, %v1271, %v1273
    %v1277 = vsel %vm324, %v1273, %v1275
    %1278 = vrot.lane.b32.xlu0 %v1201, 94
    %v1279 = vpop.permute.xlu0 %1278
    %1280 = vrot.lane.b32.xlu0 %v1202, 94
    %v1281 = vpop.permute.xlu0 %1280
    %1282 = vrot.lane.b32.xlu0 %v1203, 94
    %v1283 = vpop.permute.xlu0 %1282
    %v1284 = vsel %vm333, %v1279, %v1281
    %v1285 = vsel %vm333, %v1281, %v1283
    %v1288 = vsel %vm61, %v1157, %v1216
    %v1292 = vsel %vm61, %v1158, %v1217
    %v1296 = vsel %vm61, %v1227, %v1241
    %v1300 = vsel %vm61, %v1228, %v1242
    %v1304 = vsel %vm61, %v1249, %v1260
    %v1308 = vsel %vm61, %v1250, %v1261
    %v1312 = vsel %vm61, %v1268, %v1276
    %v1316 = vsel %vm61, %v1269, %v1277
    %1320 = vrot.lane.b32.xlu0 %v1118, 17
    %v1321 = vpop.permute.xlu0 %1320
    %1322 = vrot.lane.b32.xlu0 %v1119, 17
    %v1323 = vpop.permute.xlu0 %1322
    %v1324 = vsel %vm1131, %v1321, %v1323
    %v1328 = vsel %vm1131, 0.0, %v1321
    %v1329 = vsel %vm1131, %v1323, 0.0
    %v1330 = vmul.f32 %v1328, %v1142
    %v1331 = vmul.f32 %v1324, %v1146
    %v1332 = vmul.f32 %v1329, %v1150
    %v1333 = vpack.c.bf16 %v1330, %v1330
    %v1334 = vpack.c.bf16 %v1331, %v1331
    %v1335 = vpack.c.bf16 %v1332, %v1332
    %v1336 = vmul.f32 %v1328, %v1164
    %v1337 = vmul.f32 %v1324, %v1168
    %v1338 = vmul.f32 %v1329, %v1172
    %v1339 = vpack.c.bf16 %v1336, %v1336
    %v1340 = vpack.c.bf16 %v1337, %v1337
    %v1341 = vpack.c.bf16 %v1338, %v1338
    %v1342 = vmul.f32 %v1328, %v1186
    %v1343 = vmul.f32 %v1324, %v1190
    %v1344 = vmul.f32 %v1329, %v1194
    %v1345 = vpack.c.bf16 %v1342, %v1342
    %v1346 = vpack.c.bf16 %v1343, %v1343
    %v1347 = vpack.c.bf16 %v1344, %v1344
    %v1351 = vrot.slane %v1339, 4
    %v1352 = vrot.slane %v1340, 4
    %v1353 = vrot.slane %v1341, 4
    %1354 = vrot.lane.b32.xlu0 %v1351, 127
    %v1355 = vpop.permute.xlu0 %1354
    %1356 = vrot.lane.b32.xlu0 %v1352, 127
    %v1357 = vpop.permute.xlu0 %1356
    %1358 = vrot.lane.b32.xlu0 %v1353, 127
    %v1359 = vpop.permute.xlu0 %1358
    %v1360 = vsel %vm210, %v1355, %v1357
    %v1361 = vsel %vm210, %v1357, %v1359
    %1365 = vrot.lane.b32.xlu0 %v1345, 126
    %v1366 = vpop.permute.xlu0 %1365
    %1367 = vrot.lane.b32.xlu0 %v1346, 126
    %v1368 = vpop.permute.xlu0 %1367
    %1369 = vrot.lane.b32.xlu0 %v1347, 126
    %v1370 = vpop.permute.xlu0 %1369
    %v1371 = vsel %vm222, %v1366, %v1368
    %v1372 = vsel %vm222, %v1368, %v1370
    %v1376 = vrot.slane %v1333, 4
    %v1377 = vrot.slane %v1334, 4
    %v1378 = vrot.slane %v1335, 4
    %1379 = vrot.lane.b32.xlu0 %v1376, 112
    %v1380 = vpop.permute.xlu0 %1379
    %1381 = vrot.lane.b32.xlu0 %v1377, 112
    %v1382 = vpop.permute.xlu0 %1381
    %1383 = vrot.lane.b32.xlu0 %v1378, 112
    %v1384 = vpop.permute.xlu0 %1383
    %v1385 = vsel %vm264, %v1380, %v1382
    %v1386 = vsel %vm264, %v1382, %v1384
    %1387 = vrot.lane.b32.xlu0 %v1339, 111
    %v1388 = vpop.permute.xlu0 %1387
    %1389 = vrot.lane.b32.xlu0 %v1340, 111
    %v1390 = vpop.permute.xlu0 %1389
    %1391 = vrot.lane.b32.xlu0 %v1341, 111
    %v1392 = vpop.permute.xlu0 %1391
    %v1393 = vsel %vm273, %v1388, %v1390
    %v1394 = vsel %vm273, %v1390, %v1392
    %v1395 = vrot.slane %v1345, 4
    %v1396 = vrot.slane %v1346, 4
    %v1397 = vrot.slane %v1347, 4
    %1398 = vrot.lane.b32.xlu0 %v1395, 110
    %v1399 = vpop.permute.xlu0 %1398
    %1400 = vrot.lane.b32.xlu0 %v1396, 110
    %v1401 = vpop.permute.xlu0 %1400
    %1402 = vrot.lane.b32.xlu0 %v1397, 110
    %v1403 = vpop.permute.xlu0 %1402
    %v1404 = vsel %vm285, %v1399, %v1401
    %v1405 = vsel %vm285, %v1401, %v1403
    %1406 = vrot.lane.b32.xlu0 %v1333, 96
    %v1407 = vpop.permute.xlu0 %1406
    %1408 = vrot.lane.b32.xlu0 %v1334, 96
    %v1409 = vpop.permute.xlu0 %1408
    %1410 = vrot.lane.b32.xlu0 %v1335, 96
    %v1411 = vpop.permute.xlu0 %1410
    %v1412 = vsel %vm315, %v1407, %v1409
    %v1413 = vsel %vm315, %v1409, %v1411
    %1414 = vrot.lane.b32.xlu0 %v1351, 95
    %v1415 = vpop.permute.xlu0 %1414
    %1416 = vrot.lane.b32.xlu0 %v1352, 95
    %v1417 = vpop.permute.xlu0 %1416
    %1418 = vrot.lane.b32.xlu0 %v1353, 95
    %v1419 = vpop.permute.xlu0 %1418
    %v1420 = vsel %vm324, %v1415, %v1417
    %v1421 = vsel %vm324, %v1417, %v1419
    %1422 = vrot.lane.b32.xlu0 %v1345, 94
    %v1423 = vpop.permute.xlu0 %1422
    %1424 = vrot.lane.b32.xlu0 %v1346, 94
    %v1425 = vpop.permute.xlu0 %1424
    %1426 = vrot.lane.b32.xlu0 %v1347, 94
    %v1427 = vpop.permute.xlu0 %1426
    %v1428 = vsel %vm333, %v1423, %v1425
    %v1429 = vsel %vm333, %v1425, %v1427
    %v1432 = vsel %vm61, %v1333, %v1360
    %v1436 = vsel %vm61, %v1334, %v1361
    %v1440 = vsel %vm61, %v1371, %v1385
    %v1444 = vsel %vm61, %v1372, %v1386
    %v1448 = vsel %vm61, %v1393, %v1404
    %v1452 = vsel %vm61, %v1394, %v1405
    %v1456 = vsel %vm61, %v1412, %v1420
    %v1460 = vsel %vm61, %v1413, %v1421
    %v1462 = vld [vmem:[%s5] sm:$0xf]
    %v1463 = vld [vmem:[%s5 + $0x4] sm:$0xf]
    %v1464 = vld [vmem:[%s6] sm:$0xff]
    %v1465 = vld [vmem:[%s6 + $0x8] sm:$0xff]
    %1467 = vset.pattern.permute.xlu0 0
    %1468 = vperm.xlu0 %1467, %v1464
    %v1469 = vpop.permute.xlu0 %1468
    %1472 = vset.pattern.permute.xlu0 0
    %1473 = vperm.xlu0 %1472, %v1465
    %v1474 = vpop.permute.xlu0 %1473
    %v1478 = vunpack.c.l.b16 %v1462
    %v1479 = vunpack.c.l.b16 %v1463
    %v1480 = vpack.c.b16 %v1479, %v1478
    %v1482 = vsel %vm1018, %v1480, 0
    %v1485 = vsel %vm61, %v1284, 0
    %v1488 = vsel %vm61, %v1285, 0
    %v1491 = vsel %vm61, %v1428, 0
    %v1494 = vsel %vm61, %v1429, 0
    %1496 = vmatprep.subr.bf16.mxu0 %v1292
    %1497 = vmatpush1.bf16.msra.mxu0 %v1288
    %1498 = vmatprep.subr.bf16.mxu0 %v1300
    %1499 = vmatpush1.bf16.msra.mxu0 %v1296
    %1500 = vmatprep.subr.bf16.mxu0 %v1308
    %1501 = vmatpush1.bf16.msra.mxu0 %v1304
    %1502 = vmatprep.subr.bf16.mxu0 %v1316
    %1503 = vmatpush1.bf16.msra.mxu0 %v1312
    %1504 = vmatprep.subr.bf16.mxu0 %v1488
    %1505 = vmatpush1.bf16.msra.mxu0 %v1485
    %1506 = vmatprep.subr.bf16.mxu0 0
    %1507 = vmatpush1.bf16.msra.mxu0 0
    %1508 = vmatprep.subr.bf16.mxu0 0
    %1509 = vmatpush1.bf16.msra.mxu0 0
    %1510 = vmatprep.subr.bf16.mxu0 0
    %1511 = vmatpush1.bf16.msra.mxu0 0
    %1512 = vmatprep.subr.bf16.mxu0 0
    %1513 = vmatpush1.bf16.msra.mxu0 0
    %1514 = vmatprep.subr.bf16.mxu0 0
    %1515 = vmatpush1.bf16.msra.mxu0 0
    %1516 = vmatprep.subr.bf16.mxu0 0
    %1517 = vmatpush1.bf16.msra.mxu0 0
    %1518 = vmatprep.subr.bf16.mxu0 0
    %1519 = vmatpush1.bf16.msra.mxu0 0
    %1520 = vmatprep.subr.bf16.mxu0 0
    %1521 = vmatpush1.bf16.msra.mxu0 0
    %1522 = vmatprep.subr.bf16.mxu0 0
    %1523 = vmatpush1.bf16.msra.mxu0 0
    %1524 = vmatprep.subr.bf16.mxu0 0
    %1525 = vmatpush1.bf16.msra.mxu0 0
    %1526 = vmatprep.subr.bf16.mxu0 0
    %1527 = vmatpush1.bf16.msra.mxu0 0
    %1528 = vmatprep.mubr.bf16.mxu0 0
    %1529 = vmatmul.mubr.bf16.gmra.mrb[0].mxu0 %v1482
    %v1530 = vpop.f32.mrb[0].mxu0
    %v1531 = vadd.f32 %v1469, %v1530
    %v1532 = vpop.f32.mrb[0].mxu0
    %v1533 = vadd.f32 %v1469, %v1532
    %v1534 = vpop.f32.mrb[0].mxu0
    %v1535 = vadd.f32 %v1474, %v1534
    %v1536 = vpop.f32.mrb[0].mxu0
    %v1537 = vadd.f32 %v1474, %v1536
    %1538 = vdwg.mxu0
    %1539 = vmatprep.subr.bf16.mxu0 %v1436
    %1540 = vmatpush1.bf16.msra.mxu0 %v1432
    %1541 = vmatprep.subr.bf16.mxu0 %v1444
    %1542 = vmatpush1.bf16.msra.mxu0 %v1440
    %1543 = vmatprep.subr.bf16.mxu0 %v1452
    %1544 = vmatpush1.bf16.msra.mxu0 %v1448
    %1545 = vmatprep.subr.bf16.mxu0 %v1460
    %1546 = vmatpush1.bf16.msra.mxu0 %v1456
    %1547 = vmatprep.subr.bf16.mxu0 %v1494
    %1548 = vmatpush1.bf16.msra.mxu0 %v1491
    %1549 = vmatprep.subr.bf16.mxu0 0
    %1550 = vmatpush1.bf16.msra.mxu0 0
    %1551 = vmatprep.subr.bf16.mxu0 0
    %1552 = vmatpush1.bf16.msra.mxu0 0
    %1553 = vmatprep.subr.bf16.mxu0 0
    %1554 = vmatpush1.bf16.msra.mxu0 0
    %1555 = vmatprep.subr.bf16.mxu0 0
    %1556 = vmatpush1.bf16.msra.mxu0 0
    %1557 = vmatprep.subr.bf16.mxu0 0
    %1558 = vmatpush1.bf16.msra.mxu0 0
    %1559 = vmatprep.subr.bf16.mxu0 0
    %1560 = vmatpush1.bf16.msra.mxu0 0
    %1561 = vmatprep.subr.bf16.mxu0 0
    %1562 = vmatpush1.bf16.msra.mxu0 0
    %1563 = vmatprep.subr.bf16.mxu0 0
    %1564 = vmatpush1.bf16.msra.mxu0 0
    %1565 = vmatprep.subr.bf16.mxu0 0
    %1566 = vmatpush1.bf16.msra.mxu0 0
    %1567 = vmatprep.subr.bf16.mxu0 0
    %1568 = vmatpush1.bf16.msra.mxu0 0
    %1569 = vmatprep.subr.bf16.mxu0 0
    %1570 = vmatpush1.bf16.msra.mxu0 0
    %1571 = vmatprep.mubr.bf16.mxu0 0
    %1572 = vmatmul.mubr.bf16.gmra.mrb[0].mxu0 %v1482
    %v1573 = vpop.f32.mrb[0].mxu0
    %v1574 = vadd.f32 %v1469, %v1573
    %v1575 = vpop.f32.mrb[0].mxu0
    %v1576 = vadd.f32 %v1469, %v1575
    %v1577 = vpop.f32.mrb[0].mxu0
    %v1578 = vadd.f32 %v1474, %v1577
    %v1579 = vpop.f32.mrb[0].mxu0
    %v1580 = vadd.f32 %v1474, %v1579
    %1581 = vdwg.mxu0
    %v1582 = vmax.f32 %v1531, 0.0
    %v1583 = vmax.f32 %v1533, 0.0
    %v1584 = vmax.f32 %v1574, 0.0
    %v1585 = vmax.f32 %v1576, 0.0
    %v1586 = vmax.f32 %v1535, 0.0
    %v1587 = vmax.f32 %v1537, 0.0
    %v1588 = vmax.f32 %v1578, 0.0
    %v1589 = vmax.f32 %v1580, 0.0
    %1594 = vrot.lane.b32.xlu0 %v1582, 17
    %v1595 = vpop.permute.xlu0 %1594
    %1596 = vrot.lane.b32.xlu0 %v1583, 17
    %v1597 = vpop.permute.xlu0 %1596
    %1598 = vrot.lane.b32.xlu0 %v1586, 17
    %v1599 = vpop.permute.xlu0 %1598
    %1600 = vrot.lane.b32.xlu0 %v1587, 17
    %v1601 = vpop.permute.xlu0 %1600
    %v1602 = vsel %vm1131, %v1595, %v1597
    %v1603 = vsel %vm1131, %v1599, %v1601
    %v1610 = vsel %vm1131, 0.0, %v1595
    %v1611 = vsel %vm1131, 0.0, %v1599
    %v1612 = vsel %vm1131, %v1597, 0.0
    %v1613 = vsel %vm1131, %v1601, 0.0
    %v1614 = vmul.f32 %v1610, %v1142
    %v1615 = vmul.f32 %v1602, %v1146
    %v1616 = vmul.f32 %v1612, %v1150
    %v1617 = vmul.f32 %v1611, %v1142
    %v1618 = vmul.f32 %v1603, %v1146
    %v1619 = vmul.f32 %v1613, %v1150
    %v1620 = vpack.c.bf16 %v1617, %v1614
    %v1621 = vpack.c.bf16 %v1618, %v1615
    %v1622 = vpack.c.bf16 %v1619, %v1616
    %v1623 = vmul.f32 %v1610, %v1164
    %v1624 = vmul.f32 %v1602, %v1168
    %v1625 = vmul.f32 %v1612, %v1172
    %v1626 = vmul.f32 %v1611, %v1164
    %v1627 = vmul.f32 %v1603, %v1168
    %v1628 = vmul.f32 %v1613, %v1172
    %v1629 = vpack.c.bf16 %v1626, %v1623
    %v1630 = vpack.c.bf16 %v1627, %v1624
    %v1631 = vpack.c.bf16 %v1628, %v1625
    %v1632 = vmul.f32 %v1610, %v1186
    %v1633 = vmul.f32 %v1602, %v1190
    %v1634 = vmul.f32 %v1612, %v1194
    %v1635 = vmul.f32 %v1611, %v1186
    %v1636 = vmul.f32 %v1603, %v1190
    %v1637 = vmul.f32 %v1613, %v1194
    %v1638 = vpack.c.bf16 %v1635, %v1632
    %v1639 = vpack.c.bf16 %v1636, %v1633
    %v1640 = vpack.c.bf16 %v1637, %v1634
    %1644 = vrot.lane.b32.xlu0 %v1629, 127
    %v1645 = vpop.permute.xlu0 %1644
    %1646 = vrot.lane.b32.xlu0 %v1630, 127
    %v1647 = vpop.permute.xlu0 %1646
    %1648 = vrot.lane.b32.xlu0 %v1631, 127
    %v1649 = vpop.permute.xlu0 %1648
    %v1650 = vsel %vm210, %v1645, %v1647
    %v1651 = vsel %vm210, %v1647, %v1649
    %1657 = vrot.lane.b32.xlu0 %v1638, 126
    %v1658 = vpop.permute.xlu0 %1657
    %1659 = vrot.lane.b32.xlu0 %v1639, 126
    %v1660 = vpop.permute.xlu0 %1659
    %1661 = vrot.lane.b32.xlu0 %v1640, 126
    %v1662 = vpop.permute.xlu0 %1661
    %v1663 = vsel %vm222, %v1658, %v1660
    %v1664 = vsel %vm222, %v1660, %v1662
    %1670 = vrot.lane.b32.xlu0 %v1620, 112
    %v1671 = vpop.permute.xlu0 %1670
    %1672 = vrot.lane.b32.xlu0 %v1621, 112
    %v1673 = vpop.permute.xlu0 %1672
    %1674 = vrot.lane.b32.xlu0 %v1622, 112
    %v1675 = vpop.permute.xlu0 %1674
    %v1676 = vsel %vm264, %v1671, %v1673
    %v1677 = vsel %vm264, %v1673, %v1675
    %1680 = vrot.lane.b32.xlu0 %v1629, 111
    %v1681 = vpop.permute.xlu0 %1680
    %1682 = vrot.lane.b32.xlu0 %v1630, 111
    %v1683 = vpop.permute.xlu0 %1682
    %1684 = vrot.lane.b32.xlu0 %v1631, 111
    %v1685 = vpop.permute.xlu0 %1684
    %v1686 = vsel %vm273, %v1681, %v1683
    %v1687 = vsel %vm273, %v1683, %v1685
    %1690 = vrot.lane.b32.xlu0 %v1638, 110
    %v1691 = vpop.permute.xlu0 %1690
    %1692 = vrot.lane.b32.xlu0 %v1639, 110
    %v1693 = vpop.permute.xlu0 %1692
    %1694 = vrot.lane.b32.xlu0 %v1640, 110
    %v1695 = vpop.permute.xlu0 %1694
    %v1696 = vsel %vm285, %v1691, %v1693
    %v1697 = vsel %vm285, %v1693, %v1695
    %1700 = vrot.lane.b32.xlu0 %v1620, 96
    %v1701 = vpop.permute.xlu0 %1700
    %1702 = vrot.lane.b32.xlu0 %v1621, 96
    %v1703 = vpop.permute.xlu0 %1702
    %1704 = vrot.lane.b32.xlu0 %v1622, 96
    %v1705 = vpop.permute.xlu0 %1704
    %v1706 = vsel %vm315, %v1701, %v1703
    %v1707 = vsel %vm315, %v1703, %v1705
    %1710 = vrot.lane.b32.xlu0 %v1629, 95
    %v1711 = vpop.permute.xlu0 %1710
    %1712 = vrot.lane.b32.xlu0 %v1630, 95
    %v1713 = vpop.permute.xlu0 %1712
    %1714 = vrot.lane.b32.xlu0 %v1631, 95
    %v1715 = vpop.permute.xlu0 %1714
    %v1716 = vsel %vm324, %v1711, %v1713
    %v1717 = vsel %vm324, %v1713, %v1715
    %1720 = vrot.lane.b32.xlu0 %v1638, 94
    %v1721 = vpop.permute.xlu0 %1720
    %1722 = vrot.lane.b32.xlu0 %v1639, 94
    %v1723 = vpop.permute.xlu0 %1722
    %1724 = vrot.lane.b32.xlu0 %v1640, 94
    %v1725 = vpop.permute.xlu0 %1724
    %v1726 = vsel %vm333, %v1721, %v1723
    %v1727 = vsel %vm333, %v1723, %v1725
    %1734 = vrot.lane.b32.xlu0 %v1584, 17
    %v1735 = vpop.permute.xlu0 %1734
    %1736 = vrot.lane.b32.xlu0 %v1585, 17
    %v1737 = vpop.permute.xlu0 %1736
    %1738 = vrot.lane.b32.xlu0 %v1588, 17
    %v1739 = vpop.permute.xlu0 %1738
    %1740 = vrot.lane.b32.xlu0 %v1589, 17
    %v1741 = vpop.permute.xlu0 %1740
    %v1742 = vsel %vm1131, %v1735, %v1737
    %v1743 = vsel %vm1131, %v1739, %v1741
    %v1750 = vsel %vm1131, 0.0, %v1735
    %v1751 = vsel %vm1131, 0.0, %v1739
    %v1752 = vsel %vm1131, %v1737, 0.0
    %v1753 = vsel %vm1131, %v1741, 0.0
    %v1754 = vmul.f32 %v1750, %v1142
    %v1755 = vmul.f32 %v1742, %v1146
    %v1756 = vmul.f32 %v1752, %v1150
    %v1757 = vmul.f32 %v1751, %v1142
    %v1758 = vmul.f32 %v1743, %v1146
    %v1759 = vmul.f32 %v1753, %v1150
    %v1760 = vpack.c.bf16 %v1757, %v1754
    %v1761 = vpack.c.bf16 %v1758, %v1755
    %v1762 = vpack.c.bf16 %v1759, %v1756
    %v1763 = vmul.f32 %v1750, %v1164
    %v1764 = vmul.f32 %v1742, %v1168
    %v1765 = vmul.f32 %v1752, %v1172
    %v1766 = vmul.f32 %v1751, %v1164
    %v1767 = vmul.f32 %v1743, %v1168
    %v1768 = vmul.f32 %v1753, %v1172
    %v1769 = vpack.c.bf16 %v1766, %v1763
    %v1770 = vpack.c.bf16 %v1767, %v1764
    %v1771 = vpack.c.bf16 %v1768, %v1765
    %v1772 = vmul.f32 %v1750, %v1186
    %v1773 = vmul.f32 %v1742, %v1190
    %v1774 = vmul.f32 %v1752, %v1194
    %v1775 = vmul.f32 %v1751, %v1186
    %v1776 = vmul.f32 %v1743, %v1190
    %v1777 = vmul.f32 %v1753, %v1194
    %v1778 = vpack.c.bf16 %v1775, %v1772
    %v1779 = vpack.c.bf16 %v1776, %v1773
    %v1780 = vpack.c.bf16 %v1777, %v1774
    %1784 = vrot.lane.b32.xlu0 %v1769, 127
    %v1785 = vpop.permute.xlu0 %1784
    %1786 = vrot.lane.b32.xlu0 %v1770, 127
    %v1787 = vpop.permute.xlu0 %1786
    %1788 = vrot.lane.b32.xlu0 %v1771, 127
    %v1789 = vpop.permute.xlu0 %1788
    %v1790 = vsel %vm210, %v1785, %v1787
    %v1791 = vsel %vm210, %v1787, %v1789
    %1797 = vrot.lane.b32.xlu0 %v1778, 126
    %v1798 = vpop.permute.xlu0 %1797
    %1799 = vrot.lane.b32.xlu0 %v1779, 126
    %v1800 = vpop.permute.xlu0 %1799
    %1801 = vrot.lane.b32.xlu0 %v1780, 126
    %v1802 = vpop.permute.xlu0 %1801
    %v1803 = vsel %vm222, %v1798, %v1800
    %v1804 = vsel %vm222, %v1800, %v1802
    %1810 = vrot.lane.b32.xlu0 %v1760, 112
    %v1811 = vpop.permute.xlu0 %1810
    %1812 = vrot.lane.b32.xlu0 %v1761, 112
    %v1813 = vpop.permute.xlu0 %1812
    %1814 = vrot.lane.b32.xlu0 %v1762, 112
    %v1815 = vpop.permute.xlu0 %1814
    %v1816 = vsel %vm264, %v1811, %v1813
    %v1817 = vsel %vm264, %v1813, %v1815
    %1820 = vrot.lane.b32.xlu0 %v1769, 111
    %v1821 = vpop.permute.xlu0 %1820
    %1822 = vrot.lane.b32.xlu0 %v1770, 111
    %v1823 = vpop.permute.xlu0 %1822
    %1824 = vrot.lane.b32.xlu0 %v1771, 111
    %v1825 = vpop.permute.xlu0 %1824
    %v1826 = vsel %vm273, %v1821, %v1823
    %v1827 = vsel %vm273, %v1823, %v1825
    %1830 = vrot.lane.b32.xlu0 %v1778, 110
    %v1831 = vpop.permute.xlu0 %1830
    %1832 = vrot.lane.b32.xlu0 %v1779, 110
    %v1833 = vpop.permute.xlu0 %1832
    %1834 = vrot.lane.b32.xlu0 %v1780, 110
    %v1835 = vpop.permute.xlu0 %1834
    %v1836 = vsel %vm285, %v1831, %v1833
    %v1837 = vsel %vm285, %v1833, %v1835
    %1840 = vrot.lane.b32.xlu0 %v1760, 96
    %v1841 = vpop.permute.xlu0 %1840
    %1842 = vrot.lane.b32.xlu0 %v1761, 96
    %v1843 = vpop.permute.xlu0 %1842
    %1844 = vrot.lane.b32.xlu0 %v1762, 96
    %v1845 = vpop.permute.xlu0 %1844
    %v1846 = vsel %vm315, %v1841, %v1843
    %v1847 = vsel %vm315, %v1843, %v1845
    %1850 = vrot.lane.b32.xlu0 %v1769, 95
    %v1851 = vpop.permute.xlu0 %1850
    %1852 = vrot.lane.b32.xlu0 %v1770, 95
    %v1853 = vpop.permute.xlu0 %1852
    %1854 = vrot.lane.b32.xlu0 %v1771, 95
    %v1855 = vpop.permute.xlu0 %1854
    %v1856 = vsel %vm324, %v1851, %v1853
    %v1857 = vsel %vm324, %v1853, %v1855
    %1860 = vrot.lane.b32.xlu0 %v1778, 94
    %v1861 = vpop.permute.xlu0 %1860
    %1862 = vrot.lane.b32.xlu0 %v1779, 94
    %v1863 = vpop.permute.xlu0 %1862
    %1864 = vrot.lane.b32.xlu0 %v1780, 94
    %v1865 = vpop.permute.xlu0 %1864
    %v1866 = vsel %vm333, %v1861, %v1863
    %v1867 = vsel %vm333, %v1863, %v1865
    %v1870 = vld [vmem:[%s7] sm:$0xff]
    %v1871 = vld [vmem:[%s8] sm:$0xff]
    %1873 = vset.pattern.permute.xlu0 0
    %1874 = vperm.xlu0 %1873, %v1871
    %v1875 = vpop.permute.xlu0 %1874
    %v1878 = vunpack.c.l.b16 %v1870
    %v1879 = vunpack.c.h.b16 %v1870
    %v1880 = vpack.c.b16 %v1878, %v1878
    %v1881 = vpack.c.b16 %v1879, %v1879
    %vm1883 = vcmask 130048
    %v1885 = vsel %vm1883, %v1881, 0
    %1887 = vmatprep.subr.bf16.mxu0 %v1621
    %1888 = vmatpush1.bf16.msra.mxu0 %v1620
    %1889 = vmatprep.subr.bf16.mxu0 %v1651
    %1890 = vmatpush1.bf16.msra.mxu0 %v1650
    %1891 = vmatprep.subr.bf16.mxu0 %v1664
    %1892 = vmatpush1.bf16.msra.mxu0 %v1663
    %1893 = vmatprep.subr.bf16.mxu0 %v1677
    %1894 = vmatpush1.bf16.msra.mxu0 %v1676
    %1895 = vmatprep.subr.bf16.mxu0 %v1687
    %1896 = vmatpush1.bf16.msra.mxu0 %v1686
    %1897 = vmatprep.subr.bf16.mxu0 %v1697
    %1898 = vmatpush1.bf16.msra.mxu0 %v1696
    %1899 = vmatprep.subr.bf16.mxu0 %v1707
    %1900 = vmatpush1.bf16.msra.mxu0 %v1706
    %1901 = vmatprep.subr.bf16.mxu0 %v1717
    %1902 = vmatpush1.bf16.msra.mxu0 %v1716
    %1903 = vmatprep.subr.bf16.mxu0 %v1727
    %1904 = vmatpush1.bf16.msra.mxu0 %v1726
    %1905 = vmatprep.subr.bf16.mxu0 0
    %1906 = vmatpush1.bf16.msra.mxu0 0
    %1907 = vmatprep.subr.bf16.mxu0 0
    %1908 = vmatpush1.bf16.msra.mxu0 0
    %1909 = vmatprep.subr.bf16.mxu0 0
    %1910 = vmatpush1.bf16.msra.mxu0 0
    %1911 = vmatprep.subr.bf16.mxu0 0
    %1912 = vmatpush1.bf16.msra.mxu0 0
    %1913 = vmatprep.subr.bf16.mxu0 0
    %1914 = vmatpush1.bf16.msra.mxu0 0
    %1915 = vmatprep.subr.bf16.mxu0 0
    %1916 = vmatpush1.bf16.msra.mxu0 0
    %1917 = vmatprep.subr.bf16.mxu0 0
    %1918 = vmatpush1.bf16.msra.mxu0 0
    %1919 = vmatprep.mubr.bf16.mxu0 %v1885
    %1920 = vmatmul.mubr.bf16.gmra.mrb[0].mxu0 %v1880
    %v1921 = vpop.f32.mrb[0].mxu0
    %v1922 = vadd.f32 %v1875, %v1921
    %v1923 = vpop.f32.mrb[0].mxu0
    %v1924 = vadd.f32 %v1875, %v1923
    %v1925 = vpop.f32.mrb[0].mxu0
    %v1926 = vpop.f32.mrb[0].mxu0
    %1927 = vdwg.mxu0
    %1928 = vmatprep.subr.bf16.mxu0 %v1761
    %1929 = vmatpush1.bf16.msra.mxu0 %v1760
    %1930 = vmatprep.subr.bf16.mxu0 %v1791
    %1931 = vmatpush1.bf16.msra.mxu0 %v1790
    %1932 = vmatprep.subr.bf16.mxu0 %v1804
    %1933 = vmatpush1.bf16.msra.mxu0 %v1803
    %1934 = vmatprep.subr.bf16.mxu0 %v1817
    %1935 = vmatpush1.bf16.msra.mxu0 %v1816
    %1936 = vmatprep.subr.bf16.mxu0 %v1827
    %1937 = vmatpush1.bf16.msra.mxu0 %v1826
    %1938 = vmatprep.subr.bf16.mxu0 %v1837
    %1939 = vmatpush1.bf16.msra.mxu0 %v1836
    %1940 = vmatprep.subr.bf16.mxu0 %v1847
    %1941 = vmatpush1.bf16.msra.mxu0 %v1846
    %1942 = vmatprep.subr.bf16.mxu0 %v1857
    %1943 = vmatpush1.bf16.msra.mxu0 %v1856
    %1944 = vmatprep.subr.bf16.mxu0 %v1867
    %1945 = vmatpush1.bf16.msra.mxu0 %v1866
    %1946 = vmatprep.subr.bf16.mxu0 0
    %1947 = vmatpush1.bf16.msra.mxu0 0
    %1948 = vmatprep.subr.bf16.mxu0 0
    %1949 = vmatpush1.bf16.msra.mxu0 0
    %1950 = vmatprep.subr.bf16.mxu0 0
    %1951 = vmatpush1.bf16.msra.mxu0 0
    %1952 = vmatprep.subr.bf16.mxu0 0
    %1953 = vmatpush1.bf16.msra.mxu0 0
    %1954 = vmatprep.subr.bf16.mxu0 0
    %1955 = vmatpush1.bf16.msra.mxu0 0
    %1956 = vmatprep.subr.bf16.mxu0 0
    %1957 = vmatpush1.bf16.msra.mxu0 0
    %1958 = vmatprep.subr.bf16.mxu0 0
    %1959 = vmatpush1.bf16.msra.mxu0 0
    %1960 = vmatprep.mubr.bf16.mxu0 %v1885
    %1961 = vmatmul.mubr.bf16.gmra.mrb[0].mxu0 %v1880
    %v1962 = vpop.f32.mrb[0].mxu0
    %v1963 = vadd.f32 %v1875, %v1962
    %v1964 = vpop.f32.mrb[0].mxu0
    %v1965 = vadd.f32 %v1875, %v1964
    %v1966 = vpop.f32.mrb[0].mxu0
    %v1967 = vpop.f32.mrb[0].mxu0
    %1968 = vdwg.mxu0
    %v1969 = vmax.f32 %v1922, 0.0
    %v1970 = vmax.f32 %v1924, 0.0
    %v1971 = vmax.f32 %v1963, 0.0
    %v1972 = vmax.f32 %v1965, 0.0
    %1975 = vrot.lane.b32.xlu0 %v1969, 34
    %v1976 = vpop.permute.xlu0 %1975
    %1977 = vrot.lane.b32.xlu0 %v1970, 34
    %v1978 = vpop.permute.xlu0 %1977
    %v1979 = vsel %vm81, %v1976, %v1978
    %v1983 = vsel %vm81, 0.0, %v1976
    %v1984 = vsel %vm81, %v1978, 0.0
    %v1985 = vmul.f32 %v1983, %v92
    %v1986 = vmul.f32 %v1979, %v96
    %v1987 = vmul.f32 %v1984, %v100
    %v1988 = vpack.c.bf16 %v1985, %v1985
    %v1989 = vpack.c.bf16 %v1986, %v1986
    %v1990 = vpack.c.bf16 %v1987, %v1987
    %v1991 = vmul.f32 %v1983, %v114
    %v1992 = vmul.f32 %v1979, %v118
    %v1993 = vmul.f32 %v1984, %v122
    %v1994 = vpack.c.bf16 %v1991, %v1991
    %v1995 = vpack.c.bf16 %v1992, %v1992
    %v1996 = vpack.c.bf16 %v1993, %v1993
    %v1997 = vmul.f32 %v1983, %v136
    %v1998 = vmul.f32 %v1979, %v140
    %v1999 = vmul.f32 %v1984, %v144
    %v2000 = vpack.c.bf16 %v1997, %v1997
    %v2001 = vpack.c.bf16 %v1998, %v1998
    %v2002 = vpack.c.bf16 %v1999, %v1999
    %v2003 = vmul.f32 %v1983, %v158
    %v2004 = vmul.f32 %v1979, %v162
    %v2005 = vmul.f32 %v1984, %v166
    %v2006 = vpack.c.bf16 %v2003, %v2003
    %v2007 = vpack.c.bf16 %v2004, %v2004
    %v2008 = vpack.c.bf16 %v2005, %v2005
    %v2009 = vmul.f32 %v1983, %v180
    %v2010 = vmul.f32 %v1979, %v184
    %v2011 = vmul.f32 %v1984, %v188
    %v2012 = vpack.c.bf16 %v2009, %v2009
    %v2013 = vpack.c.bf16 %v2010, %v2010
    %v2014 = vpack.c.bf16 %v2011, %v2011
    %v2018 = vrot.slane %v1994, 4
    %v2019 = vrot.slane %v1995, 4
    %v2020 = vrot.slane %v1996, 4
    %2021 = vrot.lane.b32.xlu0 %v2018, 127
    %v2022 = vpop.permute.xlu0 %2021
    %2023 = vrot.lane.b32.xlu0 %v2019, 127
    %v2024 = vpop.permute.xlu0 %2023
    %2025 = vrot.lane.b32.xlu0 %v2020, 127
    %v2026 = vpop.permute.xlu0 %2025
    %v2027 = vsel %vm210, %v2022, %v2024
    %v2028 = vsel %vm210, %v2024, %v2026
    %2032 = vrot.lane.b32.xlu0 %v2000, 126
    %v2033 = vpop.permute.xlu0 %2032
    %2034 = vrot.lane.b32.xlu0 %v2001, 126
    %v2035 = vpop.permute.xlu0 %2034
    %2036 = vrot.lane.b32.xlu0 %v2002, 126
    %v2037 = vpop.permute.xlu0 %2036
    %v2038 = vsel %vm222, %v2033, %v2035
    %v2039 = vsel %vm222, %v2035, %v2037
    %v2043 = vrot.slane %v2006, 4
    %v2044 = vrot.slane %v2007, 4
    %v2045 = vrot.slane %v2008, 4
    %2046 = vrot.lane.b32.xlu0 %v2043, 125
    %v2047 = vpop.permute.xlu0 %2046
    %2048 = vrot.lane.b32.xlu0 %v2044, 125
    %v2049 = vpop.permute.xlu0 %2048
    %2050 = vrot.lane.b32.xlu0 %v2045, 125
    %v2051 = vpop.permute.xlu0 %2050
    %v2052 = vsel %vm237, %v2047, %v2049
    %v2053 = vsel %vm237, %v2049, %v2051
    %2057 = vrot.lane.b32.xlu0 %v2012, 124
    %v2058 = vpop.permute.xlu0 %2057
    %2059 = vrot.lane.b32.xlu0 %v2013, 124
    %v2060 = vpop.permute.xlu0 %2059
    %2061 = vrot.lane.b32.xlu0 %v2014, 124
    %v2062 = vpop.permute.xlu0 %2061
    %v2063 = vsel %vm249, %v2058, %v2060
    %v2064 = vsel %vm249, %v2060, %v2062
    %v2068 = vrot.slane %v1988, 4
    %v2069 = vrot.slane %v1989, 4
    %v2070 = vrot.slane %v1990, 4
    %2071 = vrot.lane.b32.xlu0 %v2068, 112
    %v2072 = vpop.permute.xlu0 %2071
    %2073 = vrot.lane.b32.xlu0 %v2069, 112
    %v2074 = vpop.permute.xlu0 %2073
    %2075 = vrot.lane.b32.xlu0 %v2070, 112
    %v2076 = vpop.permute.xlu0 %2075
    %v2077 = vsel %vm264, %v2072, %v2074
    %v2078 = vsel %vm264, %v2074, %v2076
    %2079 = vrot.lane.b32.xlu0 %v1994, 111
    %v2080 = vpop.permute.xlu0 %2079
    %2081 = vrot.lane.b32.xlu0 %v1995, 111
    %v2082 = vpop.permute.xlu0 %2081
    %2083 = vrot.lane.b32.xlu0 %v1996, 111
    %v2084 = vpop.permute.xlu0 %2083
    %v2085 = vsel %vm273, %v2080, %v2082
    %v2086 = vsel %vm273, %v2082, %v2084
    %v2087 = vrot.slane %v2000, 4
    %v2088 = vrot.slane %v2001, 4
    %v2089 = vrot.slane %v2002, 4
    %2090 = vrot.lane.b32.xlu0 %v2087, 110
    %v2091 = vpop.permute.xlu0 %2090
    %2092 = vrot.lane.b32.xlu0 %v2088, 110
    %v2093 = vpop.permute.xlu0 %2092
    %2094 = vrot.lane.b32.xlu0 %v2089, 110
    %v2095 = vpop.permute.xlu0 %2094
    %v2096 = vsel %vm285, %v2091, %v2093
    %v2097 = vsel %vm285, %v2093, %v2095
    %2098 = vrot.lane.b32.xlu0 %v2006, 109
    %v2099 = vpop.permute.xlu0 %2098
    %2100 = vrot.lane.b32.xlu0 %v2007, 109
    %v2101 = vpop.permute.xlu0 %2100
    %2102 = vrot.lane.b32.xlu0 %v2008, 109
    %v2103 = vpop.permute.xlu0 %2102
    %v2104 = vsel %vm294, %v2099, %v2101
    %v2105 = vsel %vm294, %v2101, %v2103
    %v2106 = vrot.slane %v2012, 4
    %v2107 = vrot.slane %v2013, 4
    %v2108 = vrot.slane %v2014, 4
    %2109 = vrot.lane.b32.xlu0 %v2106, 108
    %v2110 = vpop.permute.xlu0 %2109
    %2111 = vrot.lane.b32.xlu0 %v2107, 108
    %v2112 = vpop.permute.xlu0 %2111
    %2113 = vrot.lane.b32.xlu0 %v2108, 108
    %v2114 = vpop.permute.xlu0 %2113
    %v2115 = vsel %vm306, %v2110, %v2112
    %v2116 = vsel %vm306, %v2112, %v2114
    %2117 = vrot.lane.b32.xlu0 %v1988, 96
    %v2118 = vpop.permute.xlu0 %2117
    %2119 = vrot.lane.b32.xlu0 %v1989, 96
    %v2120 = vpop.permute.xlu0 %2119
    %2121 = vrot.lane.b32.xlu0 %v1990, 96
    %v2122 = vpop.permute.xlu0 %2121
    %v2123 = vsel %vm315, %v2118, %v2120
    %v2124 = vsel %vm315, %v2120, %v2122
    %2125 = vrot.lane.b32.xlu0 %v2018, 95
    %v2126 = vpop.permute.xlu0 %2125
    %2127 = vrot.lane.b32.xlu0 %v2019, 95
    %v2128 = vpop.permute.xlu0 %2127
    %2129 = vrot.lane.b32.xlu0 %v2020, 95
    %v2130 = vpop.permute.xlu0 %2129
    %v2131 = vsel %vm324, %v2126, %v2128
    %v2132 = vsel %vm324, %v2128, %v2130
    %2133 = vrot.lane.b32.xlu0 %v2000, 94
    %v2134 = vpop.permute.xlu0 %2133
    %2135 = vrot.lane.b32.xlu0 %v2001, 94
    %v2136 = vpop.permute.xlu0 %2135
    %2137 = vrot.lane.b32.xlu0 %v2002, 94
    %v2138 = vpop.permute.xlu0 %2137
    %v2139 = vsel %vm333, %v2134, %v2136
    %v2140 = vsel %vm333, %v2136, %v2138
    %2141 = vrot.lane.b32.xlu0 %v2043, 93
    %v2142 = vpop.permute.xlu0 %2141
    %2143 = vrot.lane.b32.xlu0 %v2044, 93
    %v2144 = vpop.permute.xlu0 %2143
    %2145 = vrot.lane.b32.xlu0 %v2045, 93
    %v2146 = vpop.permute.xlu0 %2145
    %v2147 = vsel %vm342, %v2142, %v2144
    %v2148 = vsel %vm342, %v2144, %v2146
    %2149 = vrot.lane.b32.xlu0 %v2012, 92
    %v2150 = vpop.permute.xlu0 %2149
    %2151 = vrot.lane.b32.xlu0 %v2013, 92
    %v2152 = vpop.permute.xlu0 %2151
    %2153 = vrot.lane.b32.xlu0 %v2014, 92
    %v2154 = vpop.permute.xlu0 %2153
    %v2155 = vsel %vm351, %v2150, %v2152
    %v2156 = vsel %vm351, %v2152, %v2154
    %2157 = vrot.lane.b32.xlu0 %v2068, 80
    %v2158 = vpop.permute.xlu0 %2157
    %2159 = vrot.lane.b32.xlu0 %v2069, 80
    %v2160 = vpop.permute.xlu0 %2159
    %2161 = vrot.lane.b32.xlu0 %v2070, 80
    %v2162 = vpop.permute.xlu0 %2161
    %v2163 = vsel %vm360, %v2158, %v2160
    %v2164 = vsel %vm360, %v2160, %v2162
    %v2167 = vsel %vm61, %v1988, %v2027
    %v2171 = vsel %vm61, %v1989, %v2028
    %v2175 = vsel %vm61, %v2038, %v2052
    %v2179 = vsel %vm61, %v2039, %v2053
    %v2183 = vsel %vm61, %v2063, %v2077
    %v2187 = vsel %vm61, %v2064, %v2078
    %v2191 = vsel %vm61, %v2085, %v2096
    %v2195 = vsel %vm61, %v2086, %v2097
    %v2199 = vsel %vm61, %v2104, %v2115
    %v2203 = vsel %vm61, %v2105, %v2116
    %v2207 = vsel %vm61, %v2123, %v2131
    %v2211 = vsel %vm61, %v2124, %v2132
    %v2215 = vsel %vm61, %v2139, %v2147
    %v2219 = vsel %vm61, %v2140, %v2148
    %v2223 = vsel %vm61, %v2155, %v2163
    %v2227 = vsel %vm61, %v2156, %v2164
    %2229 = vrot.lane.b32.xlu0 %v2087, 127
    %v2230 = vpop.permute.xlu0 %2229
    %2231 = vrot.lane.b32.xlu0 %v2088, 127
    %v2232 = vpop.permute.xlu0 %2231
    %2233 = vrot.lane.b32.xlu0 %v2089, 127
    %v2234 = vpop.permute.xlu0 %2233
    %v2235 = vsel %vm210, %v2230, %v2232
    %v2236 = vsel %vm210, %v2232, %v2234
    %2237 = vrot.lane.b32.xlu0 %v2006, 126
    %v2238 = vpop.permute.xlu0 %2237
    %2239 = vrot.lane.b32.xlu0 %v2007, 126
    %v2240 = vpop.permute.xlu0 %2239
    %2241 = vrot.lane.b32.xlu0 %v2008, 126
    %v2242 = vpop.permute.xlu0 %2241
    %v2243 = vsel %vm222, %v2238, %v2240
    %v2244 = vsel %vm222, %v2240, %v2242
    %2245 = vrot.lane.b32.xlu0 %v2106, 125
    %v2246 = vpop.permute.xlu0 %2245
    %2247 = vrot.lane.b32.xlu0 %v2107, 125
    %v2248 = vpop.permute.xlu0 %2247
    %2249 = vrot.lane.b32.xlu0 %v2108, 125
    %v2250 = vpop.permute.xlu0 %2249
    %v2251 = vsel %vm237, %v2246, %v2248
    %v2252 = vsel %vm237, %v2248, %v2250
    %2253 = vrot.lane.b32.xlu0 %v1988, 113
    %v2254 = vpop.permute.xlu0 %2253
    %2255 = vrot.lane.b32.xlu0 %v1989, 113
    %v2256 = vpop.permute.xlu0 %2255
    %2257 = vrot.lane.b32.xlu0 %v1990, 113
    %v2258 = vpop.permute.xlu0 %2257
    %v2259 = vsel %vm457, %v2254, %v2256
    %v2260 = vsel %vm457, %v2256, %v2258
    %2261 = vrot.lane.b32.xlu0 %v2018, 112
    %v2262 = vpop.permute.xlu0 %2261
    %2263 = vrot.lane.b32.xlu0 %v2019, 112
    %v2264 = vpop.permute.xlu0 %2263
    %2265 = vrot.lane.b32.xlu0 %v2020, 112
    %v2266 = vpop.permute.xlu0 %2265
    %v2267 = vsel %vm264, %v2262, %v2264
    %v2268 = vsel %vm264, %v2264, %v2266
    %2269 = vrot.lane.b32.xlu0 %v2000, 111
    %v2270 = vpop.permute.xlu0 %2269
    %2271 = vrot.lane.b32.xlu0 %v2001, 111
    %v2272 = vpop.permute.xlu0 %2271
    %2273 = vrot.lane.b32.xlu0 %v2002, 111
    %v2274 = vpop.permute.xlu0 %2273
    %v2275 = vsel %vm273, %v2270, %v2272
    %v2276 = vsel %vm273, %v2272, %v2274
    %2277 = vrot.lane.b32.xlu0 %v2043, 110
    %v2278 = vpop.permute.xlu0 %2277
    %2279 = vrot.lane.b32.xlu0 %v2044, 110
    %v2280 = vpop.permute.xlu0 %2279
    %2281 = vrot.lane.b32.xlu0 %v2045, 110
    %v2282 = vpop.permute.xlu0 %2281
    %v2283 = vsel %vm285, %v2278, %v2280
    %v2284 = vsel %vm285, %v2280, %v2282
    %2285 = vrot.lane.b32.xlu0 %v2012, 109
    %v2286 = vpop.permute.xlu0 %2285
    %2287 = vrot.lane.b32.xlu0 %v2013, 109
    %v2288 = vpop.permute.xlu0 %2287
    %2289 = vrot.lane.b32.xlu0 %v2014, 109
    %v2290 = vpop.permute.xlu0 %2289
    %v2291 = vsel %vm294, %v2286, %v2288
    %v2292 = vsel %vm294, %v2288, %v2290
    %v2295 = vsel %vm61, %v1994, %v2235
    %v2298 = vsel %vm61, %v1995, %v2236
    %v2301 = vsel %vm61, %v1996, %v2234
    %v2304 = vsel %vm61, %v2243, %v2251
    %v2307 = vsel %vm61, %v2244, %v2252
    %v2310 = vsel %vm61, %v2242, %v2250
    %v2313 = vsel %vm61, %v2259, %v2267
    %v2316 = vsel %vm61, %v2260, %v2268
    %v2319 = vsel %vm61, %v2258, %v2266
    %v2322 = vsel %vm61, %v2275, %v2283
    %v2325 = vsel %vm61, %v2276, %v2284
    %v2328 = vsel %vm61, %v2274, %v2282
    %2341 = vrot.lane.b32.xlu0 %v2295, 79
    %v2342 = vpop.permute.xlu0 %2341
    %2343 = vrot.lane.b32.xlu0 %v2298, 79
    %v2344 = vpop.permute.xlu0 %2343
    %2345 = vrot.lane.b32.xlu0 %v2301, 79
    %v2346 = vpop.permute.xlu0 %2345
    %2347 = vrot.lane.b32.xlu0 %v2304, 79
    %v2348 = vpop.permute.xlu0 %2347
    %2349 = vrot.lane.b32.xlu0 %v2307, 79
    %v2350 = vpop.permute.xlu0 %2349
    %2351 = vrot.lane.b32.xlu0 %v2310, 79
    %v2352 = vpop.permute.xlu0 %2351
    %2353 = vrot.lane.b32.xlu0 %v2313, 79
    %v2354 = vpop.permute.xlu0 %2353
    %2355 = vrot.lane.b32.xlu0 %v2316, 79
    %v2356 = vpop.permute.xlu0 %2355
    %2357 = vrot.lane.b32.xlu0 %v2319, 79
    %v2358 = vpop.permute.xlu0 %2357
    %2359 = vrot.lane.b32.xlu0 %v2322, 79
    %v2360 = vpop.permute.xlu0 %2359
    %2361 = vrot.lane.b32.xlu0 %v2325, 79
    %v2362 = vpop.permute.xlu0 %2361
    %2363 = vrot.lane.b32.xlu0 %v2328, 79
    %v2364 = vpop.permute.xlu0 %2363
    %2365 = vrot.lane.b32.xlu0 %v2291, 79
    %v2366 = vpop.permute.xlu0 %2365
    %2367 = vrot.lane.b32.xlu0 %v2292, 79
    %v2368 = vpop.permute.xlu0 %2367
    %2369 = vrot.lane.b32.xlu0 %v2290, 79
    %v2370 = vpop.permute.xlu0 %2369
    %v2371 = vsel %vm570, %v2342, %v2344
    %v2372 = vsel %vm570, %v2344, %v2346
    %v2373 = vsel %vm570, %v2348, %v2350
    %v2374 = vsel %vm570, %v2350, %v2352
    %v2375 = vsel %vm570, %v2354, %v2356
    %v2376 = vsel %vm570, %v2356, %v2358
    %v2377 = vsel %vm570, %v2360, %v2362
    %v2378 = vsel %vm570, %v2362, %v2364
    %v2379 = vsel %vm570, %v2366, %v2368
    %v2380 = vsel %vm570, %v2368, %v2370
    %2391 = vrot.lane.b32.xlu0 %v1971, 34
    %v2392 = vpop.permute.xlu0 %2391
    %2393 = vrot.lane.b32.xlu0 %v1972, 34
    %v2394 = vpop.permute.xlu0 %2393
    %v2395 = vsel %vm81, %v2392, %v2394
    %v2399 = vsel %vm81, 0.0, %v2392
    %v2400 = vsel %vm81, %v2394, 0.0
    %v2401 = vmul.f32 %v2399, %v92
    %v2402 = vmul.f32 %v2395, %v96
    %v2403 = vmul.f32 %v2400, %v100
    %v2404 = vpack.c.bf16 %v2401, %v2401
    %v2405 = vpack.c.bf16 %v2402, %v2402
    %v2406 = vpack.c.bf16 %v2403, %v2403
    %v2407 = vmul.f32 %v2399, %v114
    %v2408 = vmul.f32 %v2395, %v118
    %v2409 = vmul.f32 %v2400, %v122
    %v2410 = vpack.c.bf16 %v2407, %v2407
    %v2411 = vpack.c.bf16 %v2408, %v2408
    %v2412 = vpack.c.bf16 %v2409, %v2409
    %v2413 = vmul.f32 %v2399, %v136
    %v2414 = vmul.f32 %v2395, %v140
    %v2415 = vmul.f32 %v2400, %v144
    %v2416 = vpack.c.bf16 %v2413, %v2413
    %v2417 = vpack.c.bf16 %v2414, %v2414
    %v2418 = vpack.c.bf16 %v2415, %v2415
    %v2419 = vmul.f32 %v2399, %v158
    %v2420 = vmul.f32 %v2395, %v162
    %v2421 = vmul.f32 %v2400, %v166
    %v2422 = vpack.c.bf16 %v2419, %v2419
    %v2423 = vpack.c.bf16 %v2420, %v2420
    %v2424 = vpack.c.bf16 %v2421, %v2421
    %v2425 = vmul.f32 %v2399, %v180
    %v2426 = vmul.f32 %v2395, %v184
    %v2427 = vmul.f32 %v2400, %v188
    %v2428 = vpack.c.bf16 %v2425, %v2425
    %v2429 = vpack.c.bf16 %v2426, %v2426
    %v2430 = vpack.c.bf16 %v2427, %v2427
    %v2434 = vrot.slane %v2410, 4
    %v2435 = vrot.slane %v2411, 4
    %v2436 = vrot.slane %v2412, 4
    %2437 = vrot.lane.b32.xlu0 %v2434, 127
    %v2438 = vpop.permute.xlu0 %2437
    %2439 = vrot.lane.b32.xlu0 %v2435, 127
    %v2440 = vpop.permute.xlu0 %2439
    %2441 = vrot.lane.b32.xlu0 %v2436, 127
    %v2442 = vpop.permute.xlu0 %2441
    %v2443 = vsel %vm210, %v2438, %v2440
    %v2444 = vsel %vm210, %v2440, %v2442
    %2448 = vrot.lane.b32.xlu0 %v2416, 126
    %v2449 = vpop.permute.xlu0 %2448
    %2450 = vrot.lane.b32.xlu0 %v2417, 126
    %v2451 = vpop.permute.xlu0 %2450
    %2452 = vrot.lane.b32.xlu0 %v2418, 126
    %v2453 = vpop.permute.xlu0 %2452
    %v2454 = vsel %vm222, %v2449, %v2451
    %v2455 = vsel %vm222, %v2451, %v2453
    %v2459 = vrot.slane %v2422, 4
    %v2460 = vrot.slane %v2423, 4
    %v2461 = vrot.slane %v2424, 4
    %2462 = vrot.lane.b32.xlu0 %v2459, 125
    %v2463 = vpop.permute.xlu0 %2462
    %2464 = vrot.lane.b32.xlu0 %v2460, 125
    %v2465 = vpop.permute.xlu0 %2464
    %2466 = vrot.lane.b32.xlu0 %v2461, 125
    %v2467 = vpop.permute.xlu0 %2466
    %v2468 = vsel %vm237, %v2463, %v2465
    %v2469 = vsel %vm237, %v2465, %v2467
    %2473 = vrot.lane.b32.xlu0 %v2428, 124
    %v2474 = vpop.permute.xlu0 %2473
    %2475 = vrot.lane.b32.xlu0 %v2429, 124
    %v2476 = vpop.permute.xlu0 %2475
    %2477 = vrot.lane.b32.xlu0 %v2430, 124
    %v2478 = vpop.permute.xlu0 %2477
    %v2479 = vsel %vm249, %v2474, %v2476
    %v2480 = vsel %vm249, %v2476, %v2478
    %v2484 = vrot.slane %v2404, 4
    %v2485 = vrot.slane %v2405, 4
    %v2486 = vrot.slane %v2406, 4
    %2487 = vrot.lane.b32.xlu0 %v2484, 112
    %v2488 = vpop.permute.xlu0 %2487
    %2489 = vrot.lane.b32.xlu0 %v2485, 112
    %v2490 = vpop.permute.xlu0 %2489
    %2491 = vrot.lane.b32.xlu0 %v2486, 112
    %v2492 = vpop.permute.xlu0 %2491
    %v2493 = vsel %vm264, %v2488, %v2490
    %v2494 = vsel %vm264, %v2490, %v2492
    %2495 = vrot.lane.b32.xlu0 %v2410, 111
    %v2496 = vpop.permute.xlu0 %2495
    %2497 = vrot.lane.b32.xlu0 %v2411, 111
    %v2498 = vpop.permute.xlu0 %2497
    %2499 = vrot.lane.b32.xlu0 %v2412, 111
    %v2500 = vpop.permute.xlu0 %2499
    %v2501 = vsel %vm273, %v2496, %v2498
    %v2502 = vsel %vm273, %v2498, %v2500
    %v2503 = vrot.slane %v2416, 4
    %v2504 = vrot.slane %v2417, 4
    %v2505 = vrot.slane %v2418, 4
    %2506 = vrot.lane.b32.xlu0 %v2503, 110
    %v2507 = vpop.permute.xlu0 %2506
    %2508 = vrot.lane.b32.xlu0 %v2504, 110
    %v2509 = vpop.permute.xlu0 %2508
    %2510 = vrot.lane.b32.xlu0 %v2505, 110
    %v2511 = vpop.permute.xlu0 %2510
    %v2512 = vsel %vm285, %v2507, %v2509
    %v2513 = vsel %vm285, %v2509, %v2511
    %2514 = vrot.lane.b32.xlu0 %v2422, 109
    %v2515 = vpop.permute.xlu0 %2514
    %2516 = vrot.lane.b32.xlu0 %v2423, 109
    %v2517 = vpop.permute.xlu0 %2516
    %2518 = vrot.lane.b32.xlu0 %v2424, 109
    %v2519 = vpop.permute.xlu0 %2518
    %v2520 = vsel %vm294, %v2515, %v2517
    %v2521 = vsel %vm294, %v2517, %v2519
    %v2522 = vrot.slane %v2428, 4
    %v2523 = vrot.slane %v2429, 4
    %v2524 = vrot.slane %v2430, 4
    %2525 = vrot.lane.b32.xlu0 %v2522, 108
    %v2526 = vpop.permute.xlu0 %2525
    %2527 = vrot.lane.b32.xlu0 %v2523, 108
    %v2528 = vpop.permute.xlu0 %2527
    %2529 = vrot.lane.b32.xlu0 %v2524, 108
    %v2530 = vpop.permute.xlu0 %2529
    %v2531 = vsel %vm306, %v2526, %v2528
    %v2532 = vsel %vm306, %v2528, %v2530
    %2533 = vrot.lane.b32.xlu0 %v2404, 96
    %v2534 = vpop.permute.xlu0 %2533
    %2535 = vrot.lane.b32.xlu0 %v2405, 96
    %v2536 = vpop.permute.xlu0 %2535
    %2537 = vrot.lane.b32.xlu0 %v2406, 96
    %v2538 = vpop.permute.xlu0 %2537
    %v2539 = vsel %vm315, %v2534, %v2536
    %v2540 = vsel %vm315, %v2536, %v2538
    %2541 = vrot.lane.b32.xlu0 %v2434, 95
    %v2542 = vpop.permute.xlu0 %2541
    %2543 = vrot.lane.b32.xlu0 %v2435, 95
    %v2544 = vpop.permute.xlu0 %2543
    %2545 = vrot.lane.b32.xlu0 %v2436, 95
    %v2546 = vpop.permute.xlu0 %2545
    %v2547 = vsel %vm324, %v2542, %v2544
    %v2548 = vsel %vm324, %v2544, %v2546
    %2549 = vrot.lane.b32.xlu0 %v2416, 94
    %v2550 = vpop.permute.xlu0 %2549
    %2551 = vrot.lane.b32.xlu0 %v2417, 94
    %v2552 = vpop.permute.xlu0 %2551
    %2553 = vrot.lane.b32.xlu0 %v2418, 94
    %v2554 = vpop.permute.xlu0 %2553
    %v2555 = vsel %vm333, %v2550, %v2552
    %v2556 = vsel %vm333, %v2552, %v2554
    %2557 = vrot.lane.b32.xlu0 %v2459, 93
    %v2558 = vpop.permute.xlu0 %2557
    %2559 = vrot.lane.b32.xlu0 %v2460, 93
    %v2560 = vpop.permute.xlu0 %2559
    %2561 = vrot.lane.b32.xlu0 %v2461, 93
    %v2562 = vpop.permute.xlu0 %2561
    %v2563 = vsel %vm342, %v2558, %v2560
    %v2564 = vsel %vm342, %v2560, %v2562
    %2565 = vrot.lane.b32.xlu0 %v2428, 92
    %v2566 = vpop.permute.xlu0 %2565
    %2567 = vrot.lane.b32.xlu0 %v2429, 92
    %v2568 = vpop.permute.xlu0 %2567
    %2569 = vrot.lane.b32.xlu0 %v2430, 92
    %v2570 = vpop.permute.xlu0 %2569
    %v2571 = vsel %vm351, %v2566, %v2568
    %v2572 = vsel %vm351, %v2568, %v2570
    %2573 = vrot.lane.b32.xlu0 %v2484, 80
    %v2574 = vpop.permute.xlu0 %2573
    %2575 = vrot.lane.b32.xlu0 %v2485, 80
    %v2576 = vpop.permute.xlu0 %2575
    %2577 = vrot.lane.b32.xlu0 %v2486, 80
    %v2578 = vpop.permute.xlu0 %2577
    %v2579 = vsel %vm360, %v2574, %v2576
    %v2580 = vsel %vm360, %v2576, %v2578
    %v2583 = vsel %vm61, %v2404, %v2443
    %v2587 = vsel %vm61, %v2405, %v2444
    %v2591 = vsel %vm61, %v2454, %v2468
    %v2595 = vsel %vm61, %v2455, %v2469
    %v2599 = vsel %vm61, %v2479, %v2493
    %v2603 = vsel %vm61, %v2480, %v2494
    %v2607 = vsel %vm61, %v2501, %v2512
    %v2611 = vsel %vm61, %v2502, %v2513
    %v2615 = vsel %vm61, %v2520, %v2531
    %v2619 = vsel %vm61, %v2521, %v2532
    %v2623 = vsel %vm61, %v2539, %v2547
    %v2627 = vsel %vm61, %v2540, %v2548
    %v2631 = vsel %vm61, %v2555, %v2563
    %v2635 = vsel %vm61, %v2556, %v2564
    %v2639 = vsel %vm61, %v2571, %v2579
    %v2643 = vsel %vm61, %v2572, %v2580
    %2645 = vrot.lane.b32.xlu0 %v2503, 127
    %v2646 = vpop.permute.xlu0 %2645
    %2647 = vrot.lane.b32.xlu0 %v2504, 127
    %v2648 = vpop.permute.xlu0 %2647
    %2649 = vrot.lane.b32.xlu0 %v2505, 127
    %v2650 = vpop.permute.xlu0 %2649
    %v2651 = vsel %vm210, %v2646, %v2648
    %v2652 = vsel %vm210, %v2648, %v2650
    %2653 = vrot.lane.b32.xlu0 %v2422, 126
    %v2654 = vpop.permute.xlu0 %2653
    %2655 = vrot.lane.b32.xlu0 %v2423, 126
    %v2656 = vpop.permute.xlu0 %2655
    %2657 = vrot.lane.b32.xlu0 %v2424, 126
    %v2658 = vpop.permute.xlu0 %2657
    %v2659 = vsel %vm222, %v2654, %v2656
    %v2660 = vsel %vm222, %v2656, %v2658
    %2661 = vrot.lane.b32.xlu0 %v2522, 125
    %v2662 = vpop.permute.xlu0 %2661
    %2663 = vrot.lane.b32.xlu0 %v2523, 125
    %v2664 = vpop.permute.xlu0 %2663
    %2665 = vrot.lane.b32.xlu0 %v2524, 125
    %v2666 = vpop.permute.xlu0 %2665
    %v2667 = vsel %vm237, %v2662, %v2664
    %v2668 = vsel %vm237, %v2664, %v2666
    %2669 = vrot.lane.b32.xlu0 %v2404, 113
    %v2670 = vpop.permute.xlu0 %2669
    %2671 = vrot.lane.b32.xlu0 %v2405, 113
    %v2672 = vpop.permute.xlu0 %2671
    %2673 = vrot.lane.b32.xlu0 %v2406, 113
    %v2674 = vpop.permute.xlu0 %2673
    %v2675 = vsel %vm457, %v2670, %v2672
    %v2676 = vsel %vm457, %v2672, %v2674
    %2677 = vrot.lane.b32.xlu0 %v2434, 112
    %v2678 = vpop.permute.xlu0 %2677
    %2679 = vrot.lane.b32.xlu0 %v2435, 112
    %v2680 = vpop.permute.xlu0 %2679
    %2681 = vrot.lane.b32.xlu0 %v2436, 112
    %v2682 = vpop.permute.xlu0 %2681
    %v2683 = vsel %vm264, %v2678, %v2680
    %v2684 = vsel %vm264, %v2680, %v2682
    %2685 = vrot.lane.b32.xlu0 %v2416, 111
    %v2686 = vpop.permute.xlu0 %2685
    %2687 = vrot.lane.b32.xlu0 %v2417, 111
    %v2688 = vpop.permute.xlu0 %2687
    %2689 = vrot.lane.b32.xlu0 %v2418, 111
    %v2690 = vpop.permute.xlu0 %2689
    %v2691 = vsel %vm273, %v2686, %v2688
    %v2692 = vsel %vm273, %v2688, %v2690
    %2693 = vrot.lane.b32.xlu0 %v2459, 110
    %v2694 = vpop.permute.xlu0 %2693
    %2695 = vrot.lane.b32.xlu0 %v2460, 110
    %v2696 = vpop.permute.xlu0 %2695
    %2697 = vrot.lane.b32.xlu0 %v2461, 110
    %v2698 = vpop.permute.xlu0 %2697
    %v2699 = vsel %vm285, %v2694, %v2696
    %v2700 = vsel %vm285, %v2696, %v2698
    %2701 = vrot.lane.b32.xlu0 %v2428, 109
    %v2702 = vpop.permute.xlu0 %2701
    %2703 = vrot.lane.b32.xlu0 %v2429, 109
    %v2704 = vpop.permute.xlu0 %2703
    %2705 = vrot.lane.b32.xlu0 %v2430, 109
    %v2706 = vpop.permute.xlu0 %2705
    %v2707 = vsel %vm294, %v2702, %v2704
    %v2708 = vsel %vm294, %v2704, %v2706
    %v2711 = vsel %vm61, %v2410, %v2651
    %v2714 = vsel %vm61, %v2411, %v2652
    %v2717 = vsel %vm61, %v2412, %v2650
    %v2720 = vsel %vm61, %v2659, %v2667
    %v2723 = vsel %vm61, %v2660, %v2668
    %v2726 = vsel %vm61, %v2658, %v2666
    %v2729 = vsel %vm61, %v2675, %v2683
    %v2732 = vsel %vm61, %v2676, %v2684
    %v2735 = vsel %vm61, %v2674, %v2682
    %v2738 = vsel %vm61, %v2691, %v2699
    %v2741 = vsel %vm61, %v2692, %v2700
    %v2744 = vsel %vm61, %v2690, %v2698
    %2757 = vrot.lane.b32.xlu0 %v2711, 79
    %v2758 = vpop.permute.xlu0 %2757
    %2759 = vrot.lane.b32.xlu0 %v2714, 79
    %v2760 = vpop.permute.xlu0 %2759
    %2761 = vrot.lane.b32.xlu0 %v2717, 79
    %v2762 = vpop.permute.xlu0 %2761
    %2763 = vrot.lane.b32.xlu0 %v2720, 79
    %v2764 = vpop.permute.xlu0 %2763
    %2765 = vrot.lane.b32.xlu0 %v2723, 79
    %v2766 = vpop.permute.xlu0 %2765
    %2767 = vrot.lane.b32.xlu0 %v2726, 79
    %v2768 = vpop.permute.xlu0 %2767
    %2769 = vrot.lane.b32.xlu0 %v2729, 79
    %v2770 = vpop.permute.xlu0 %2769
    %2771 = vrot.lane.b32.xlu0 %v2732, 79
    %v2772 = vpop.permute.xlu0 %2771
    %2773 = vrot.lane.b32.xlu0 %v2735, 79
    %v2774 = vpop.permute.xlu0 %2773
    %2775 = vrot.lane.b32.xlu0 %v2738, 79
    %v2776 = vpop.permute.xlu0 %2775
    %2777 = vrot.lane.b32.xlu0 %v2741, 79
    %v2778 = vpop.permute.xlu0 %2777
    %2779 = vrot.lane.b32.xlu0 %v2744, 79
    %v2780 = vpop.permute.xlu0 %2779
    %2781 = vrot.lane.b32.xlu0 %v2707, 79
    %v2782 = vpop.permute.xlu0 %2781
    %2783 = vrot.lane.b32.xlu0 %v2708, 79
    %v2784 = vpop.permute.xlu0 %2783
    %2785 = vrot.lane.b32.xlu0 %v2706, 79
    %v2786 = vpop.permute.xlu0 %2785
    %v2787 = vsel %vm570, %v2758, %v2760
    %v2788 = vsel %vm570, %v2760, %v2762
    %v2789 = vsel %vm570, %v2764, %v2766
    %v2790 = vsel %vm570, %v2766, %v2768
    %v2791 = vsel %vm570, %v2770, %v2772
    %v2792 = vsel %vm570, %v2772, %v2774
    %v2793 = vsel %vm570, %v2776, %v2778
    %v2794 = vsel %vm570, %v2778, %v2780
    %v2795 = vsel %vm570, %v2782, %v2784
    %v2796 = vsel %vm570, %v2784, %v2786
    %v2805 = vld [vmem:[%s9] sm:$0xf]
    %v2806 = vld [vmem:[%s10] sm:$0xf]
    %2808 = vset.pattern.permute.xlu0 0
    %2809 = vperm.xlu0 %2808, %v2806
    %v2810 = vpop.permute.xlu0 %2809
    %v2814 = vunpack.c.l.s4 1983009808
    %v2815 = vunpack.c.0.s8 %v2814
    %v2816 = vlaneseq
    %v2817 = vshrl.u32 %v2816, 7
    %v2818 = vsub.s32 %v2815, %v2817
    %v2819 = vrot.slane %v2805, %v2818
    %v2820 = vcombine.high %v2819, %v2819
    %v2823 = vsel %vm1018, %v2820, 0
    %v2826 = vsel %vm61, %v2379, 0
    %v2829 = vsel %vm61, %v2380, 0
    %v2832 = vsel %vm61, %v2795, 0
    %v2835 = vsel %vm61, %v2796, 0
    %2837 = vmatprep.subr.bf16.mxu0 %v2171
    %2838 = vmatpush1.bf16.msra.mxu0 %v2167
    %2839 = vmatprep.subr.bf16.mxu0 %v2179
    %2840 = vmatpush1.bf16.msra.mxu0 %v2175
    %2841 = vmatprep.subr.bf16.mxu0 %v2187
    %2842 = vmatpush1.bf16.msra.mxu0 %v2183
    %2843 = vmatprep.subr.bf16.mxu0 %v2195
    %2844 = vmatpush1.bf16.msra.mxu0 %v2191
    %2845 = vmatprep.subr.bf16.mxu0 %v2203
    %2846 = vmatpush1.bf16.msra.mxu0 %v2199
    %2847 = vmatprep.subr.bf16.mxu0 %v2211
    %2848 = vmatpush1.bf16.msra.mxu0 %v2207
    %2849 = vmatprep.subr.bf16.mxu0 %v2219
    %2850 = vmatpush1.bf16.msra.mxu0 %v2215
    %2851 = vmatprep.subr.bf16.mxu0 %v2227
    %2852 = vmatpush1.bf16.msra.mxu0 %v2223
    %2853 = vmatprep.subr.bf16.mxu0 %v2372
    %2854 = vmatpush1.bf16.msra.mxu0 %v2371
    %2855 = vmatprep.subr.bf16.mxu0 %v2374
    %2856 = vmatpush1.bf16.msra.mxu0 %v2373
    %2857 = vmatprep.subr.bf16.mxu0 %v2376
    %2858 = vmatpush1.bf16.msra.mxu0 %v2375
    %2859 = vmatprep.subr.bf16.mxu0 %v2378
    %2860 = vmatpush1.bf16.msra.mxu0 %v2377
    %2861 = vmatprep.subr.bf16.mxu0 %v2829
    %2862 = vmatpush1.bf16.msra.mxu0 %v2826
    %2863 = vmatprep.subr.bf16.mxu0 0
    %2864 = vmatpush1.bf16.msra.mxu0 0
    %2865 = vmatprep.subr.bf16.mxu0 0
    %2866 = vmatpush1.bf16.msra.mxu0 0
    %2867 = vmatprep.subr.bf16.mxu0 0
    %2868 = vmatpush1.bf16.msra.mxu0 0
    %2869 = vmatprep.mubr.bf16.mxu0 %v2823
    %2870 = vmatmul.mubr.bf16.gmra.mrb[0].mxu0 %v2819
    %v2871 = vpop.f32.mrb[0].mxu0
    %v2872 = vadd.f32 %v2810, %v2871
    %v2873 = vpop.f32.mrb[0].mxu0
    %v2874 = vadd.f32 %v2810, %v2873
    %v2875 = vpop.f32.mrb[0].mxu0
    %v2876 = vpop.f32.mrb[0].mxu0
    %2877 = vdwg.mxu0
    %2878 = vmatprep.subr.bf16.mxu0 %v2587
    %2879 = vmatpush1.bf16.msra.mxu0 %v2583
    %2880 = vmatprep.subr.bf16.mxu0 %v2595
    %2881 = vmatpush1.bf16.msra.mxu0 %v2591
    %2882 = vmatprep.subr.bf16.mxu0 %v2603
    %2883 = vmatpush1.bf16.msra.mxu0 %v2599
    %2884 = vmatprep.subr.bf16.mxu0 %v2611
    %2885 = vmatpush1.bf16.msra.mxu0 %v2607
    %2886 = vmatprep.subr.bf16.mxu0 %v2619
    %2887 = vmatpush1.bf16.msra.mxu0 %v2615
    %2888 = vmatprep.subr.bf16.mxu0 %v2627
    %2889 = vmatpush1.bf16.msra.mxu0 %v2623
    %2890 = vmatprep.subr.bf16.mxu0 %v2635
    %2891 = vmatpush1.bf16.msra.mxu0 %v2631
    %2892 = vmatprep.subr.bf16.mxu0 %v2643
    %2893 = vmatpush1.bf16.msra.mxu0 %v2639
    %2894 = vmatprep.subr.bf16.mxu0 %v2788
    %2895 = vmatpush1.bf16.msra.mxu0 %v2787
    %2896 = vmatprep.subr.bf16.mxu0 %v2790
    %2897 = vmatpush1.bf16.msra.mxu0 %v2789
    %2898 = vmatprep.subr.bf16.mxu0 %v2792
    %2899 = vmatpush1.bf16.msra.mxu0 %v2791
    %2900 = vmatprep.subr.bf16.mxu0 %v2794
    %2901 = vmatpush1.bf16.msra.mxu0 %v2793
    %2902 = vmatprep.subr.bf16.mxu0 %v2835
    %2903 = vmatpush1.bf16.msra.mxu0 %v2832
    %2904 = vmatprep.subr.bf16.mxu0 0
    %2905 = vmatpush1.bf16.msra.mxu0 0
    %2906 = vmatprep.subr.bf16.mxu0 0
    %2907 = vmatpush1.bf16.msra.mxu0 0
    %2908 = vmatprep.subr.bf16.mxu0 0
    %2909 = vmatpush1.bf16.msra.mxu0 0
    %2910 = vmatprep.mubr.bf16.mxu0 %v2823
    %2911 = vmatmul.mubr.bf16.gmra.mrb[0].mxu0 %v2819
    %v2912 = vpop.f32.mrb[0].mxu0
    %v2913 = vadd.f32 %v2810, %v2912
    %v2914 = vpop.f32.mrb[0].mxu0
    %v2915 = vadd.f32 %v2810, %v2914
    %v2916 = vpop.f32.mrb[0].mxu0
    %v2917 = vpop.f32.mrb[0].mxu0
    %2918 = vdwg.mxu0
    %v2921 = vcombine.low %v2872, %v2874
    %2923 = vst [vmem:[#allocation5] sm:$0xff] %v2921
    %v2926 = vcombine.low %v2913, %v2915
    %s2928 = scalar_lea.vmem [#allocation5], 8
    %2929 = vst [vmem:[%s2928] sm:$0xff] %v2926
    // Predicated region
    $region50: #{tpu_custom_call.1} parent=1 // pred_check
      _
    $region51: #{tpu_custom_call.1} parent=1 // pred_check_branch
      %2931 = sbr.rel (0) target = $region53
    $region52: #{tpu_custom_call.1} parent=1 // pred_region
      %s2933 = ssub.s32 256, 256
      %2934 = vsyncadd [#allocation4], %s2933
      %s2935 = sshll.u32 [#allocation5], 4
      %s2936 = int_to_ptr.vmem [resolvable:$true] %s2935
      %2941 = dma.vmem_to_hbm [thread:$0]  %s2936, 256, %s11, [#allocation4], 128, 128, 8
    $region53: #{tpu_custom_call.1} parent=1 // pred_fallthru
      _
    // Predicated region
    $region54: #{tpu_custom_call.1} parent=1 // pred_check
      _
    $region55: #{tpu_custom_call.1} parent=1 // pred_check_branch
      %2943 = sbr.rel (0) target = $region57
    $region56: #{tpu_custom_call.1} parent=1 // pred_region
      %2944 = dma.done [#allocation4], 256
    $region57: #{tpu_custom_call.1} parent=1 // pred_fallthru
      _
    %2945 = vsyncpa [#allocation3], 1
    %2946 = vsyncpa [#allocation4], 1

</llo_original>
